<compile_context>
chip_gen: v5e
topology: v5e:2x2
jax: 0.10.0
libtpu: 0.0.40
codegen_flags: <defaults>
</compile_context>

<pallas_src>
import jax
import jax.numpy as jnp
import numpy as np
from jax.experimental import pallas as pl
from jax.experimental.pallas import tpu as pltpu


# ---------------------------------------------------------------------------
# Pallas kernels
# ---------------------------------------------------------------------------
def make_block_kernel(K, D, R, S, T, compute_dtype):
    """GatedResidualBlock on batch-folded (C, B*T) layout."""

    def kernel(x_ref, sacc_ref, w_in_ref, b_in_ref, w_fg_ref, b_fg_ref,
               w_so_ref, b_so_ref, res_ref, sout_ref):
        x = x_ref[...]                                            # (C_in, BT) f32

        # 1x1 conv_in == channel matmul (bf16 operands, f32 accumulate).
        residual = (jnp.dot(w_in_ref[...], x.astype(compute_dtype),
                            preferred_element_type=jnp.float32)
                    + b_in_ref[...])                              # (R, BT) f32

        # Hoisted, batch-aware time index: computed ONCE, reused for all taps.
        t_local = jax.lax.broadcasted_iota(jnp.int32, residual.shape, 1) % T

        # Build the K causally shifted copies once, stacked along sublanes.
        rm = residual.astype(compute_dtype)
        taps = []
        for k in range(K):
            s = (K - 1 - k) * D
            if s == 0:
                taps.append(rm)
            else:
                shifted = pltpu.roll(rm, shift=s, axis=1)
                taps.append(jnp.where(t_local >= s, shifted,
                                      jnp.zeros_like(shifted)))
        stacked = jnp.concatenate(taps, axis=0)                   # (K*R, BT)

        # Fused filter+gate dilated conv: ONE MXU push, then split rows.
        fg = (jnp.dot(w_fg_ref[...], stacked,
                      preferred_element_type=jnp.float32)
              + b_fg_ref[...])                                    # (2R, BT) f32
        gated = jnp.tanh(fg[:R]) * jax.nn.sigmoid(fg[R:])         # (R, BT) f32

        # Fused skip + out 1x1 projections: ONE matmul over `gated`.
        so = (jnp.dot(w_so_ref[...], gated.astype(compute_dtype),
                      preferred_element_type=jnp.float32)
              + b_so_ref[...])                                    # (S+C_in, BT)

        # skip accumulation fused into the kernel; residual add back to x.
        sout_ref[...] = (sacc_ref[...] + so[:S]).astype(sout_ref.dtype)
        res_ref[...] = (so[S:] + x).astype(res_ref.dtype)

    return kernel


def make_head_kernel(compute_dtype):
    """skip_conv1 -> relu -> skip_conv2 -> (means, stds=exp(0.5*log_var))."""

    def kernel(sacc_ref, w1_ref, b1_ref, w2_ref, b2_ref, out_ref):
        sacc = sacc_ref[...]                                      # (S, BT) f32
        h = jnp.maximum(
            jnp.dot(w1_ref[...], sacc.astype(compute_dtype),
                    preferred_element_type=jnp.float32) + b1_ref[...], 0.0)
        o = (jnp.dot(w2_ref[...], h.astype(compute_dtype),
                     preferred_element_type=jnp.float32)
             + b2_ref[...])                                       # (2, BT) f32
        # row 0: means (identity); row 1: stds = exp(0.5 * log_var)
        row = jax.lax.broadcasted_iota(jnp.int32, o.shape, 0)
        out_ref[...] = jnp.where(row == 0, o, jnp.exp(0.5 * o)).astype(out_ref.dtype)

    return kernel


# ---------------------------------------------------------------------------
# Wrappers
# ---------------------------------------------------------------------------
_VMEM = pl.BlockSpec(memory_space=pltpu.MemorySpace.VMEM)


def _fuse_block_params(p, compute_dtype):
    """Stack filter/gate taps and skip/out projections into fused weights."""
    K, R, _ = p["w_f"].shape
    # w_fg[o, k*R + i] = w_f[k, o, i]  (and same for the gate rows below).
    w_f = jnp.transpose(p["w_f"], (1, 0, 2)).reshape(R, K * R)
    w_g = jnp.transpose(p["w_g"], (1, 0, 2)).reshape(R, K * R)
    w_fg = jnp.concatenate([w_f, w_g], axis=0)                    # (2R, K*R)
    b_fg = jnp.concatenate([p["b_f"], p["b_g"]], axis=0)          # (2R, 1)
    w_so = jnp.concatenate([p["w_skip"], p["w_out"]], axis=0)     # (S+C_in, R)
    b_so = jnp.concatenate([p["b_skip"], p["b_out"]], axis=0)     # (S+C_in, 1)
    return {
        "w_in": p["w_in"].astype(compute_dtype), "b_in": p["b_in"],
        "w_fg": w_fg.astype(compute_dtype), "b_fg": b_fg,
        "w_so": w_so.astype(compute_dtype), "b_so": b_so,
    }


def _block_call(xf, skip_acc, fp, K, D, T, compute_dtype):
    C_in, BT = xf.shape
    R = fp["w_in"].shape[0]
    S = skip_acc.shape[0]
    kernel = make_block_kernel(K, D, R, S, T, compute_dtype)
    res, skip = pl.pallas_call(
        kernel,
        in_specs=[_VMEM] * 8,
        out_specs=(_VMEM, _VMEM),
        out_shape=(jax.ShapeDtypeStruct((C_in, BT), jnp.float32),
                   jax.ShapeDtypeStruct((S, BT), jnp.float32)),
    )(xf, skip_acc, fp["w_in"], fp["b_in"], fp["w_fg"], fp["b_fg"],
      fp["w_so"], fp["b_so"])
    return res, skip


def _head_call(skip_acc, params, compute_dtype):
    S, BT = skip_acc.shape
    return pl.pallas_call(
        make_head_kernel(compute_dtype),
        in_specs=[_VMEM] * 5,
        out_specs=_VMEM,
        out_shape=jax.ShapeDtypeStruct((2, BT), jnp.float32),
    )(skip_acc,
      params["w_s1"].astype(compute_dtype), params["b_s1"],
      params["w_s2"].astype(compute_dtype), params["b_s2"])


def wavenet_forward(x, params, kernel_size, dilations, compute_dtype=jnp.float32):
    """x: (B, C_in, T) -> (means (B, T), stds (B, T))."""
    B, C_in, T = x.shape
    S = params["w_s1"].shape[0]
    BT = B * T

    # Fold batch into the lane dimension: (B, C, T) -> (C, B*T).
    xf = jnp.transpose(x, (1, 0, 2)).reshape(C_in, BT).astype(jnp.float32)
    skip_acc = jnp.zeros((S, BT), jnp.float32)

    out = xf
    for p, d in zip(params["blocks"], dilations):
        fp = _fuse_block_params(p, compute_dtype)
        out, skip_acc = _block_call(out, skip_acc, fp, kernel_size, d, T,
                                    compute_dtype)

    head = _head_call(skip_acc, params, compute_dtype)            # (2, BT)
    head = head.reshape(2, B, T)
    return head[0], head[1]                                        # means, stds


# ---------------------------------------------------------------------------
# Pure-JAX reference (mirrors the PyTorch module semantics)
# ---------------------------------------------------------------------------
_HI = jax.lax.Precision.HIGHEST


def _conv1x1_ref(w, b, h):
    return jnp.einsum("oi,bit->bot", w, h, precision=_HI) + b[None]


def _causal_conv_ref(w, b, h, K, D):
    T = h.shape[-1]
    P = (K - 1) * D
    hp = jnp.pad(h, ((0, 0), (0, 0), (P, 0)))
    out = jnp.broadcast_to(b[None], (h.shape[0], w.shape[1], T))
    for k in range(K):
        out = out + jnp.einsum("oi,bit->bot", w[k], hp[:, :, k * D:k * D + T],
                               precision=_HI)
    return out


def _block_ref(x, p, K, D):
    residual = _conv1x1_ref(p["w_in"], p["b_in"], x)
    filt = jnp.tanh(_causal_conv_ref(p["w_f"], p["b_f"], residual, K, D))
    gate = jax.nn.sigmoid(_causal_conv_ref(p["w_g"], p["b_g"], residual, K, D))
    gated = filt * gate
    skip = _conv1x1_ref(p["w_skip"], p["b_skip"], gated)
    res = _conv1x1_ref(p["w_out"], p["b_out"], gated) + x
    return res, skip


def reference_forward(x, params, kernel_size, dilations):
    skip_acc = 0.0
    out = x
    for p, d in zip(params["blocks"], dilations):
        out, skip = _block_ref(out, p, kernel_size, d)
        skip_acc = skip_acc + skip
    h = jax.nn.relu(_conv1x1_ref(params["w_s1"], params["b_s1"], skip_acc))
    o = _conv1x1_ref(params["w_s2"], params["b_s2"], h)
    means = o[:, 0, :]
    stds = jnp.exp(0.5 * o[:, 1, :])
    return means, stds


# ---------------------------------------------------------------------------
# Parameter init
# ---------------------------------------------------------------------------
def init_params(key, c_in, r, s, c_out, k_size, dilations, scale=0.1):
    n_blocks = len(dilations)
    keys = jax.random.split(key, 10 * n_blocks + 4)

    def w(kk, shape):
        return (scale * jax.random.normal(kk, shape)).astype(jnp.float32)

    blocks = []
    idx = 0
    for _ in range(n_blocks):
        blocks.append({
            "w_in": w(keys[idx + 0], (r, c_in)),      "b_in": w(keys[idx + 1], (r, 1)),
            "w_f":  w(keys[idx + 2], (k_size, r, r)), "b_f":  w(keys[idx + 3], (r, 1)),
            "w_g":  w(keys[idx + 4], (k_size, r, r)), "b_g":  w(keys[idx + 5], (r, 1)),
            "w_skip": w(keys[idx + 6], (s, r)),       "b_skip": w(keys[idx + 7], (s, 1)),
            "w_out":  w(keys[idx + 8], (c_in, r)),    "b_out":  w(keys[idx + 9], (c_in, 1)),
        })
        idx += 10
    return {
        "blocks": blocks,
        "w_s1": w(keys[idx + 0], (s, s)),    "b_s1": w(keys[idx + 1], (s, 1)),
        "w_s2": w(keys[idx + 2], (c_out, s)), "b_s2": w(keys[idx + 3], (c_out, 1)),
    }


# ---------------------------------------------------------------------------
if __name__ == "__main__":
    B, C_IN, T = 2, 1, 64          # B*T = 128 -> lane-dense folded layout
    R, S, OUT = 32, 64, 2
    KERNEL_SIZE = 3
    DILATIONS = (1, 2, 4, 8)       # small dilation stack for the demo

    key = jax.random.PRNGKey(0)
    k_x, k_p = jax.random.split(key)
    x = jax.random.normal(k_x, (B, C_IN, T), dtype=jnp.float32)
    params = init_params(k_p, C_IN, R, S, OUT, KERNEL_SIZE, DILATIONS)

    ref_means, ref_stds = reference_forward(x, params, KERNEL_SIZE, DILATIONS)

    # f32 path (tight check).
    fwd_f32 = jax.jit(lambda xx: wavenet_forward(xx, params, KERNEL_SIZE,
                                                 DILATIONS, jnp.float32))
    means, stds = fwd_f32(x)
    means = jax.block_until_ready(means)
    stds = jax.block_until_ready(stds)
    np.testing.assert_allclose(np.asarray(means), np.asarray(ref_means),
                               rtol=1e-3, atol=1e-3)
    np.testing.assert_allclose(np.asarray(stds), np.asarray(ref_stds),
                               rtol=1e-3, atol=1e-3)

    # bf16-MXU-operand path (v6e/v7x oriented; f32 accumulate + f32 elementwise).
    fwd_bf16 = jax.jit(lambda xx: wavenet_forward(xx, params, KERNEL_SIZE,
                                                  DILATIONS, jnp.bfloat16))
    means_b, stds_b = fwd_bf16(x)
    means_b = jax.block_until_ready(means_b)
    stds_b = jax.block_until_ready(stds_b)
    np.testing.assert_allclose(np.asarray(means_b), np.asarray(ref_means),
                               rtol=1e-1, atol=1e-1)
    np.testing.assert_allclose(np.asarray(stds_b), np.asarray(ref_stds),
                               rtol=1e-1, atol=1e-1)

    print("KERNEL_OK")
</pallas_src>

<mosaic_0001>
module attributes {stable_mosaic.version = 11 : i64} {
  func.func @kernel(%arg0: memref<1x128xf32, #tpu.memory_space<vmem>>, %arg1: memref<64x128xf32, #tpu.memory_space<vmem>>, %arg2: memref<32x1xf32, #tpu.memory_space<vmem>>, %arg3: memref<32x1xf32, #tpu.memory_space<vmem>>, %arg4: memref<64x96xf32, #tpu.memory_space<vmem>>, %arg5: memref<64x1xf32, #tpu.memory_space<vmem>>, %arg6: memref<65x32xf32, #tpu.memory_space<vmem>>, %arg7: memref<65x1xf32, #tpu.memory_space<vmem>>, %arg8: memref<1x128xf32, #tpu.memory_space<vmem>>, %arg9: memref<64x128xf32, #tpu.memory_space<vmem>>) attributes {dimension_semantics = [], scalar_prefetch = 0 : i64, scratch_operands = 0 : i64, tpu.core_type = #tpu.core_type<tc>} {
    %c0 = arith.constant 0 : index
    %c0_0 = arith.constant 0 : index
    %0 = vector.load %arg0[%c0, %c0_0] : memref<1x128xf32, #tpu.memory_space<vmem>>, vector<1x128xf32>
    %c0_1 = arith.constant 0 : index
    %c0_2 = arith.constant 0 : index
    %1 = vector.load %arg2[%c0_1, %c0_2] : memref<32x1xf32, #tpu.memory_space<vmem>>, vector<32x1xf32>
    %cst = arith.constant dense<0.000000e+00> : vector<32x128xf32>
    %2 = tpu.matmul %1, %0, %cst {dimension_numbers = #tpu.dot_dimension_numbers<[1], [0], [0], [1], [0, 0, 1, 1], [], []>} : vector<32x1xf32>, vector<1x128xf32>, vector<32x128xf32> -> vector<32x128xf32>
    %c0_3 = arith.constant 0 : index
    %c0_4 = arith.constant 0 : index
    %3 = vector.load %arg3[%c0_3, %c0_4] : memref<32x1xf32, #tpu.memory_space<vmem>>, vector<32x1xf32>
    %4 = vector.broadcast %3 : vector<32x1xf32> to vector<32x128xf32>
    %5 = arith.addf %2, %4 : vector<32x128xf32>
    %6 = tpu.iota {dimensions = array<i32: 1>} : vector<32x128xi32>
    %c64_i32 = arith.constant 64 : i32
    %c0_i32 = arith.constant 0 : i32
    %7 = arith.cmpi eq, %c64_i32, %c0_i32 : i32
    %c1_i32 = arith.constant 1 : i32
    %8 = arith.select %7, %c1_i32, %c64_i32 : i32
    %9 = vector.broadcast %8 : i32 to vector<32x128xi32>
    %10 = arith.remsi %6, %9 : vector<32x128xi32>
    %c0_i32_5 = arith.constant 0 : i32
    %11 = vector.broadcast %c0_i32_5 : i32 to vector<32x128xi32>
    %12 = arith.cmpi ne, %10, %11 : vector<32x128xi32>
    %c0_i32_6 = arith.constant 0 : i32
    %13 = vector.broadcast %c0_i32_6 : i32 to vector<32x128xi32>
    %14 = arith.cmpi slt, %10, %13 : vector<32x128xi32>
    %c0_i32_7 = arith.constant 0 : i32
    %15 = arith.cmpi slt, %8, %c0_i32_7 : i32
    %16 = vector.broadcast %15 : i1 to vector<32x128xi1>
    %17 = vector.broadcast %16 : vector<32x128xi1> to vector<32x128xi1>
    %18 = arith.xori %14, %17 : vector<32x128xi1>
    %19 = arith.andi %18, %12 : vector<32x128xi1>
    %20 = vector.broadcast %8 : i32 to vector<32x128xi32>
    %21 = arith.addi %10, %20 : vector<32x128xi32>
    %22 = arith.select %19, %21, %10 : vector<32x128xi1>, vector<32x128xi32>
    %c8_i32 = arith.constant 8 : i32
    %23 = tpu.dynamic_rotate %5 by %c8_i32 dim 1 : vector<32x128xf32>, i32 -> vector<32x128xf32>
    %c8_i32_8 = arith.constant 8 : i32
    %24 = vector.broadcast %c8_i32_8 : i32 to vector<32x128xi32>
    %25 = arith.cmpi sge, %22, %24 : vector<32x128xi32>
    %cst_9 = arith.constant 0.000000e+00 : f32
    %26 = vector.broadcast %cst_9 : f32 to vector<32x128xf32>
    %27 = arith.select %25, %23, %26 : vector<32x128xi1>, vector<32x128xf32>
    %c4_i32 = arith.constant 4 : i32
    %28 = tpu.dynamic_rotate %5 by %c4_i32 dim 1 : vector<32x128xf32>, i32 -> vector<32x128xf32>
    %c4_i32_10 = arith.constant 4 : i32
    %29 = vector.broadcast %c4_i32_10 : i32 to vector<32x128xi32>
    %30 = arith.cmpi sge, %22, %29 : vector<32x128xi32>
    %cst_11 = arith.constant 0.000000e+00 : f32
    %31 = vector.broadcast %cst_11 : f32 to vector<32x128xf32>
    %32 = arith.select %30, %28, %31 : vector<32x128xi1>, vector<32x128xf32>
    %33 = tpu.concatenate %27, %32, %5 in 0 : vector<32x128xf32>, vector<32x128xf32>, vector<32x128xf32> -> vector<96x128xf32>
    %c0_12 = arith.constant 0 : index
    %c0_13 = arith.constant 0 : index
    %34 = vector.load %arg4[%c0_12, %c0_13] : memref<64x96xf32, #tpu.memory_space<vmem>>, vector<64x96xf32>
    %cst_14 = arith.constant dense<0.000000e+00> : vector<64x128xf32>
    %35 = tpu.matmul %34, %33, %cst_14 {dimension_numbers = #tpu.dot_dimension_numbers<[1], [0], [0], [1], [0, 0, 1, 1], [], []>} : vector<64x96xf32>, vector<96x128xf32>, vector<64x128xf32> -> vector<64x128xf32>
    %c0_15 = arith.constant 0 : index
    %c0_16 = arith.constant 0 : index
    %36 = vector.load %arg5[%c0_15, %c0_16] : memref<64x1xf32, #tpu.memory_space<vmem>>, vector<64x1xf32>
    %37 = vector.broadcast %36 : vector<64x1xf32> to vector<64x128xf32>
    %38 = arith.addf %35, %37 : vector<64x128xf32>
    %39 = vector.extract_strided_slice %38 {offsets = [0, 0], sizes = [32, 128], strides = [1, 1]} : vector<64x128xf32> to vector<32x128xf32>
    %40 = math.tanh %39 : vector<32x128xf32>
    %41 = vector.extract_strided_slice %38 {offsets = [32, 0], sizes = [32, 128], strides = [1, 1]} : vector<64x128xf32> to vector<32x128xf32>
    %42 = arith.negf %41 : vector<32x128xf32>
    %43 = math.exp %42 : vector<32x128xf32>
    %cst_17 = arith.constant 1.000000e+00 : f32
    %44 = vector.broadcast %cst_17 : f32 to vector<32x128xf32>
    %45 = arith.addf %44, %43 : vector<32x128xf32>
    %46 = arith.divf %44, %45 : vector<32x128xf32>
    %47 = arith.mulf %40, %46 : vector<32x128xf32>
    %c0_18 = arith.constant 0 : index
    %c0_19 = arith.constant 0 : index
    %48 = vector.load %arg6[%c0_18, %c0_19] : memref<65x32xf32, #tpu.memory_space<vmem>>, vector<65x32xf32>
    %cst_20 = arith.constant dense<0.000000e+00> : vector<65x128xf32>
    %49 = tpu.matmul %48, %47, %cst_20 {dimension_numbers = #tpu.dot_dimension_numbers<[1], [0], [0], [1], [0, 0, 1, 1], [], []>} : vector<65x32xf32>, vector<32x128xf32>, vector<65x128xf32> -> vector<65x128xf32>
    %c0_21 = arith.constant 0 : index
    %c0_22 = arith.constant 0 : index
    %50 = vector.load %arg7[%c0_21, %c0_22] : memref<65x1xf32, #tpu.memory_space<vmem>>, vector<65x1xf32>
    %51 = vector.broadcast %50 : vector<65x1xf32> to vector<65x128xf32>
    %52 = arith.addf %49, %51 : vector<65x128xf32>
    %c0_23 = arith.constant 0 : index
    %c0_24 = arith.constant 0 : index
    %53 = vector.load %arg1[%c0_23, %c0_24] : memref<64x128xf32, #tpu.memory_space<vmem>>, vector<64x128xf32>
    %54 = vector.extract_strided_slice %52 {offsets = [0, 0], sizes = [64, 128], strides = [1, 1]} : vector<65x128xf32> to vector<64x128xf32>
    %55 = arith.addf %53, %54 : vector<64x128xf32>
    %c0_25 = arith.constant 0 : index
    %c0_26 = arith.constant 0 : index
    %56 = vector.load %arg9[%c0_25, %c0_26] : memref<64x128xf32, #tpu.memory_space<vmem>>, vector<64x128xf32>
    tpu.vector_store %arg9[%c0_25, %c0_26], %55 {strides = array<i32>} : memref<64x128xf32, #tpu.memory_space<vmem>>, vector<64x128xf32>,
    %57 = vector.extract_strided_slice %52 {offsets = [64, 0], sizes = [1, 128], strides = [1, 1]} : vector<65x128xf32> to vector<1x128xf32>
    %58 = arith.addf %57, %0 : vector<1x128xf32>
    %c0_27 = arith.constant 0 : index
    %c0_28 = arith.constant 0 : index
    %59 = vector.load %arg8[%c0_27, %c0_28] : memref<1x128xf32, #tpu.memory_space<vmem>>, vector<1x128xf32>
    tpu.vector_store %arg8[%c0_27, %c0_28], %58 {strides = array<i32>} : memref<1x128xf32, #tpu.memory_space<vmem>>, vector<1x128xf32>,
    return
  }
}

module attributes {stable_mosaic.version = 11 : i64} {
  func.func @kernel(%arg0: memref<1x128xf32, #tpu.memory_space<vmem>>, %arg1: memref<64x128xf32, #tpu.memory_space<vmem>>, %arg2: memref<32x1xf32, #tpu.memory_space<vmem>>, %arg3: memref<32x1xf32, #tpu.memory_space<vmem>>, %arg4: memref<64x96xf32, #tpu.memory_space<vmem>>, %arg5: memref<64x1xf32, #tpu.memory_space<vmem>>, %arg6: memref<65x32xf32, #tpu.memory_space<vmem>>, %arg7: memref<65x1xf32, #tpu.memory_space<vmem>>, %arg8: memref<1x128xf32, #tpu.memory_space<vmem>>, %arg9: memref<64x128xf32, #tpu.memory_space<vmem>>) attributes {dimension_semantics = [], scalar_prefetch = 0 : i64, scratch_operands = 0 : i64, tpu.core_type = #tpu.core_type<tc>} {
    %c0 = arith.constant 0 : index
    %c0_0 = arith.constant 0 : index
    %0 = vector.load %arg0[%c0, %c0_0] : memref<1x128xf32, #tpu.memory_space<vmem>>, vector<1x128xf32>
    %c0_1 = arith.constant 0 : index
    %c0_2 = arith.constant 0 : index
    %1 = vector.load %arg2[%c0_1, %c0_2] : memref<32x1xf32, #tpu.memory_space<vmem>>, vector<32x1xf32>
    %cst = arith.constant dense<0.000000e+00> : vector<32x128xf32>
    %2 = tpu.matmul %1, %0, %cst {dimension_numbers = #tpu.dot_dimension_numbers<[1], [0], [0], [1], [0, 0, 1, 1], [], []>} : vector<32x1xf32>, vector<1x128xf32>, vector<32x128xf32> -> vector<32x128xf32>
    %c0_3 = arith.constant 0 : index
    %c0_4 = arith.constant 0 : index
    %3 = vector.load %arg3[%c0_3, %c0_4] : memref<32x1xf32, #tpu.memory_space<vmem>>, vector<32x1xf32>
    %4 = vector.broadcast %3 : vector<32x1xf32> to vector<32x128xf32>
    %5 = arith.addf %2, %4 : vector<32x128xf32>
    %6 = tpu.iota {dimensions = array<i32: 1>} : vector<32x128xi32>
    %c64_i32 = arith.constant 64 : i32
    %c0_i32 = arith.constant 0 : i32
    %7 = arith.cmpi eq, %c64_i32, %c0_i32 : i32
    %c1_i32 = arith.constant 1 : i32
    %8 = arith.select %7, %c1_i32, %c64_i32 : i32
    %9 = vector.broadcast %8 : i32 to vector<32x128xi32>
    %10 = arith.remsi %6, %9 : vector<32x128xi32>
    %c0_i32_5 = arith.constant 0 : i32
    %11 = vector.broadcast %c0_i32_5 : i32 to vector<32x128xi32>
    %12 = arith.cmpi ne, %10, %11 : vector<32x128xi32>
    %c0_i32_6 = arith.constant 0 : i32
    %13 = vector.broadcast %c0_i32_6 : i32 to vector<32x128xi32>
    %14 = arith.cmpi slt, %10, %13 : vector<32x128xi32>
    %c0_i32_7 = arith.constant 0 : i32
    %15 = arith.cmpi slt, %8, %c0_i32_7 : i32
    %16 = vector.broadcast %15 : i1 to vector<32x128xi1>
    %17 = vector.broadcast %16 : vector<32x128xi1> to vector<32x128xi1>
    %18 = arith.xori %14, %17 : vector<32x128xi1>
    %19 = arith.andi %18, %12 : vector<32x128xi1>
    %20 = vector.broadcast %8 : i32 to vector<32x128xi32>
    %21 = arith.addi %10, %20 : vector<32x128xi32>
    %22 = arith.select %19, %21, %10 : vector<32x128xi1>, vector<32x128xi32>
    %c16_i32 = arith.constant 16 : i32
    %23 = tpu.dynamic_rotate %5 by %c16_i32 dim 1 : vector<32x128xf32>, i32 -> vector<32x128xf32>
    %c16_i32_8 = arith.constant 16 : i32
    %24 = vector.broadcast %c16_i32_8 : i32 to vector<32x128xi32>
    %25 = arith.cmpi sge, %22, %24 : vector<32x128xi32>
    %cst_9 = arith.constant 0.000000e+00 : f32
    %26 = vector.broadcast %cst_9 : f32 to vector<32x128xf32>
    %27 = arith.select %25, %23, %26 : vector<32x128xi1>, vector<32x128xf32>
    %c8_i32 = arith.constant 8 : i32
    %28 = tpu.dynamic_rotate %5 by %c8_i32 dim 1 : vector<32x128xf32>, i32 -> vector<32x128xf32>
    %c8_i32_10 = arith.constant 8 : i32
    %29 = vector.broadcast %c8_i32_10 : i32 to vector<32x128xi32>
    %30 = arith.cmpi sge, %22, %29 : vector<32x128xi32>
    %cst_11 = arith.constant 0.000000e+00 : f32
    %31 = vector.broadcast %cst_11 : f32 to vector<32x128xf32>
    %32 = arith.select %30, %28, %31 : vector<32x128xi1>, vector<32x128xf32>
    %33 = tpu.concatenate %27, %32, %5 in 0 : vector<32x128xf32>, vector<32x128xf32>, vector<32x128xf32> -> vector<96x128xf32>
    %c0_12 = arith.constant 0 : index
    %c0_13 = arith.constant 0 : index
    %34 = vector.load %arg4[%c0_12, %c0_13] : memref<64x96xf32, #tpu.memory_space<vmem>>, vector<64x96xf32>
    %cst_14 = arith.constant dense<0.000000e+00> : vector<64x128xf32>
    %35 = tpu.matmul %34, %33, %cst_14 {dimension_numbers = #tpu.dot_dimension_numbers<[1], [0], [0], [1], [0, 0, 1, 1], [], []>} : vector<64x96xf32>, vector<96x128xf32>, vector<64x128xf32> -> vector<64x128xf32>
    %c0_15 = arith.constant 0 : index
    %c0_16 = arith.constant 0 : index
    %36 = vector.load %arg5[%c0_15, %c0_16] : memref<64x1xf32, #tpu.memory_space<vmem>>, vector<64x1xf32>
    %37 = vector.broadcast %36 : vector<64x1xf32> to vector<64x128xf32>
    %38 = arith.addf %35, %37 : vector<64x128xf32>
    %39 = vector.extract_strided_slice %38 {offsets = [0, 0], sizes = [32, 128], strides = [1, 1]} : vector<64x128xf32> to vector<32x128xf32>
    %40 = math.tanh %39 : vector<32x128xf32>
    %41 = vector.extract_strided_slice %38 {offsets = [32, 0], sizes = [32, 128], strides = [1, 1]} : vector<64x128xf32> to vector<32x128xf32>
    %42 = arith.negf %41 : vector<32x128xf32>
    %43 = math.exp %42 : vector<32x128xf32>
    %cst_17 = arith.constant 1.000000e+00 : f32
    %44 = vector.broadcast %cst_17 : f32 to vector<32x128xf32>
    %45 = arith.addf %44, %43 : vector<32x128xf32>
    %46 = arith.divf %44, %45 : vector<32x128xf32>
    %47 = arith.mulf %40, %46 : vector<32x128xf32>
    %c0_18 = arith.constant 0 : index
    %c0_19 = arith.constant 0 : index
    %48 = vector.load %arg6[%c0_18, %c0_19] : memref<65x32xf32, #tpu.memory_space<vmem>>, vector<65x32xf32>
    %cst_20 = arith.constant dense<0.000000e+00> : vector<65x128xf32>
    %49 = tpu.matmul %48, %47, %cst_20 {dimension_numbers = #tpu.dot_dimension_numbers<[1], [0], [0], [1], [0, 0, 1, 1], [], []>} : vector<65x32xf32>, vector<32x128xf32>, vector<65x128xf32> -> vector<65x128xf32>
    %c0_21 = arith.constant 0 : index
    %c0_22 = arith.constant 0 : index
    %50 = vector.load %arg7[%c0_21, %c0_22] : memref<65x1xf32, #tpu.memory_space<vmem>>, vector<65x1xf32>
    %51 = vector.broadcast %50 : vector<65x1xf32> to vector<65x128xf32>
    %52 = arith.addf %49, %51 : vector<65x128xf32>
    %c0_23 = arith.constant 0 : index
    %c0_24 = arith.constant 0 : index
    %53 = vector.load %arg1[%c0_23, %c0_24] : memref<64x128xf32, #tpu.memory_space<vmem>>, vector<64x128xf32>
    %54 = vector.extract_strided_slice %52 {offsets = [0, 0], sizes = [64, 128], strides = [1, 1]} : vector<65x128xf32> to vector<64x128xf32>
    %55 = arith.addf %53, %54 : vector<64x128xf32>
    %c0_25 = arith.constant 0 : index
    %c0_26 = arith.constant 0 : index
    %56 = vector.load %arg9[%c0_25, %c0_26] : memref<64x128xf32, #tpu.memory_space<vmem>>, vector<64x128xf32>
    tpu.vector_store %arg9[%c0_25, %c0_26], %55 {strides = array<i32>} : memref<64x128xf32, #tpu.memory_space<vmem>>, vector<64x128xf32>,
    %57 = vector.extract_strided_slice %52 {offsets = [64, 0], sizes = [1, 128], strides = [1, 1]} : vector<65x128xf32> to vector<1x128xf32>
    %58 = arith.addf %57, %0 : vector<1x128xf32>
    %c0_27 = arith.constant 0 : index
    %c0_28 = arith.constant 0 : index
    %59 = vector.load %arg8[%c0_27, %c0_28] : memref<1x128xf32, #tpu.memory_space<vmem>>, vector<1x128xf32>
    tpu.vector_store %arg8[%c0_27, %c0_28], %58 {strides = array<i32>} : memref<1x128xf32, #tpu.memory_space<vmem>>, vector<1x128xf32>,
    return
  }
}

module attributes {stable_mosaic.version = 11 : i64} {
  func.func @kernel(%arg0: memref<1x128xf32, #tpu.memory_space<vmem>>, %arg1: memref<64x128xf32, #tpu.memory_space<vmem>>, %arg2: memref<32x1xf32, #tpu.memory_space<vmem>>, %arg3: memref<32x1xf32, #tpu.memory_space<vmem>>, %arg4: memref<64x96xf32, #tpu.memory_space<vmem>>, %arg5: memref<64x1xf32, #tpu.memory_space<vmem>>, %arg6: memref<65x32xf32, #tpu.memory_space<vmem>>, %arg7: memref<65x1xf32, #tpu.memory_space<vmem>>, %arg8: memref<1x128xf32, #tpu.memory_space<vmem>>, %arg9: memref<64x128xf32, #tpu.memory_space<vmem>>) attributes {dimension_semantics = [], scalar_prefetch = 0 : i64, scratch_operands = 0 : i64, tpu.core_type = #tpu.core_type<tc>} {
    %c0 = arith.constant 0 : index
    %c0_0 = arith.constant 0 : index
    %0 = vector.load %arg0[%c0, %c0_0] : memref<1x128xf32, #tpu.memory_space<vmem>>, vector<1x128xf32>
    %c0_1 = arith.constant 0 : index
    %c0_2 = arith.constant 0 : index
    %1 = vector.load %arg2[%c0_1, %c0_2] : memref<32x1xf32, #tpu.memory_space<vmem>>, vector<32x1xf32>
    %cst = arith.constant dense<0.000000e+00> : vector<32x128xf32>
    %2 = tpu.matmul %1, %0, %cst {dimension_numbers = #tpu.dot_dimension_numbers<[1], [0], [0], [1], [0, 0, 1, 1], [], []>} : vector<32x1xf32>, vector<1x128xf32>, vector<32x128xf32> -> vector<32x128xf32>
    %c0_3 = arith.constant 0 : index
    %c0_4 = arith.constant 0 : index
    %3 = vector.load %arg3[%c0_3, %c0_4] : memref<32x1xf32, #tpu.memory_space<vmem>>, vector<32x1xf32>
    %4 = vector.broadcast %3 : vector<32x1xf32> to vector<32x128xf32>
    %5 = arith.addf %2, %4 : vector<32x128xf32>
    %6 = tpu.iota {dimensions = array<i32: 1>} : vector<32x128xi32>
    %c64_i32 = arith.constant 64 : i32
    %c0_i32 = arith.constant 0 : i32
    %7 = arith.cmpi eq, %c64_i32, %c0_i32 : i32
    %c1_i32 = arith.constant 1 : i32
    %8 = arith.select %7, %c1_i32, %c64_i32 : i32
    %9 = vector.broadcast %8 : i32 to vector<32x128xi32>
    %10 = arith.remsi %6, %9 : vector<32x128xi32>
    %c0_i32_5 = arith.constant 0 : i32
    %11 = vector.broadcast %c0_i32_5 : i32 to vector<32x128xi32>
    %12 = arith.cmpi ne, %10, %11 : vector<32x128xi32>
    %c0_i32_6 = arith.constant 0 : i32
    %13 = vector.broadcast %c0_i32_6 : i32 to vector<32x128xi32>
    %14 = arith.cmpi slt, %10, %13 : vector<32x128xi32>
    %c0_i32_7 = arith.constant 0 : i32
    %15 = arith.cmpi slt, %8, %c0_i32_7 : i32
    %16 = vector.broadcast %15 : i1 to vector<32x128xi1>
    %17 = vector.broadcast %16 : vector<32x128xi1> to vector<32x128xi1>
    %18 = arith.xori %14, %17 : vector<32x128xi1>
    %19 = arith.andi %18, %12 : vector<32x128xi1>
    %20 = vector.broadcast %8 : i32 to vector<32x128xi32>
    %21 = arith.addi %10, %20 : vector<32x128xi32>
    %22 = arith.select %19, %21, %10 : vector<32x128xi1>, vector<32x128xi32>
    %c2_i32 = arith.constant 2 : i32
    %23 = tpu.dynamic_rotate %5 by %c2_i32 dim 1 : vector<32x128xf32>, i32 -> vector<32x128xf32>
    %c2_i32_8 = arith.constant 2 : i32
    %24 = vector.broadcast %c2_i32_8 : i32 to vector<32x128xi32>
    %25 = arith.cmpi sge, %22, %24 : vector<32x128xi32>
    %cst_9 = arith.constant 0.000000e+00 : f32
    %26 = vector.broadcast %cst_9 : f32 to vector<32x128xf32>
    %27 = arith.select %25, %23, %26 : vector<32x128xi1>, vector<32x128xf32>
    %c1_i32_10 = arith.constant 1 : i32
    %28 = tpu.dynamic_rotate %5 by %c1_i32_10 dim 1 : vector<32x128xf32>, i32 -> vector<32x128xf32>
    %c1_i32_11 = arith.constant 1 : i32
    %29 = vector.broadcast %c1_i32_11 : i32 to vector<32x128xi32>
    %30 = arith.cmpi sge, %22, %29 : vector<32x128xi32>
    %cst_12 = arith.constant 0.000000e+00 : f32
    %31 = vector.broadcast %cst_12 : f32 to vector<32x128xf32>
    %32 = arith.select %30, %28, %31 : vector<32x128xi1>, vector<32x128xf32>
    %33 = tpu.concatenate %27, %32, %5 in 0 : vector<32x128xf32>, vector<32x128xf32>, vector<32x128xf32> -> vector<96x128xf32>
    %c0_13 = arith.constant 0 : index
    %c0_14 = arith.constant 0 : index
    %34 = vector.load %arg4[%c0_13, %c0_14] : memref<64x96xf32, #tpu.memory_space<vmem>>, vector<64x96xf32>
    %cst_15 = arith.constant dense<0.000000e+00> : vector<64x128xf32>
    %35 = tpu.matmul %34, %33, %cst_15 {dimension_numbers = #tpu.dot_dimension_numbers<[1], [0], [0], [1], [0, 0, 1, 1], [], []>} : vector<64x96xf32>, vector<96x128xf32>, vector<64x128xf32> -> vector<64x128xf32>
    %c0_16 = arith.constant 0 : index
    %c0_17 = arith.constant 0 : index
    %36 = vector.load %arg5[%c0_16, %c0_17] : memref<64x1xf32, #tpu.memory_space<vmem>>, vector<64x1xf32>
    %37 = vector.broadcast %36 : vector<64x1xf32> to vector<64x128xf32>
    %38 = arith.addf %35, %37 : vector<64x128xf32>
    %39 = vector.extract_strided_slice %38 {offsets = [0, 0], sizes = [32, 128], strides = [1, 1]} : vector<64x128xf32> to vector<32x128xf32>
    %40 = math.tanh %39 : vector<32x128xf32>
    %41 = vector.extract_strided_slice %38 {offsets = [32, 0], sizes = [32, 128], strides = [1, 1]} : vector<64x128xf32> to vector<32x128xf32>
    %42 = arith.negf %41 : vector<32x128xf32>
    %43 = math.exp %42 : vector<32x128xf32>
    %cst_18 = arith.constant 1.000000e+00 : f32
    %44 = vector.broadcast %cst_18 : f32 to vector<32x128xf32>
    %45 = arith.addf %44, %43 : vector<32x128xf32>
    %46 = arith.divf %44, %45 : vector<32x128xf32>
    %47 = arith.mulf %40, %46 : vector<32x128xf32>
    %c0_19 = arith.constant 0 : index
    %c0_20 = arith.constant 0 : index
    %48 = vector.load %arg6[%c0_19, %c0_20] : memref<65x32xf32, #tpu.memory_space<vmem>>, vector<65x32xf32>
    %cst_21 = arith.constant dense<0.000000e+00> : vector<65x128xf32>
    %49 = tpu.matmul %48, %47, %cst_21 {dimension_numbers = #tpu.dot_dimension_numbers<[1], [0], [0], [1], [0, 0, 1, 1], [], []>} : vector<65x32xf32>, vector<32x128xf32>, vector<65x128xf32> -> vector<65x128xf32>
    %c0_22 = arith.constant 0 : index
    %c0_23 = arith.constant 0 : index
    %50 = vector.load %arg7[%c0_22, %c0_23] : memref<65x1xf32, #tpu.memory_space<vmem>>, vector<65x1xf32>
    %51 = vector.broadcast %50 : vector<65x1xf32> to vector<65x128xf32>
    %52 = arith.addf %49, %51 : vector<65x128xf32>
    %c0_24 = arith.constant 0 : index
    %c0_25 = arith.constant 0 : index
    %53 = vector.load %arg1[%c0_24, %c0_25] : memref<64x128xf32, #tpu.memory_space<vmem>>, vector<64x128xf32>
    %54 = vector.extract_strided_slice %52 {offsets = [0, 0], sizes = [64, 128], strides = [1, 1]} : vector<65x128xf32> to vector<64x128xf32>
    %55 = arith.addf %53, %54 : vector<64x128xf32>
    %c0_26 = arith.constant 0 : index
    %c0_27 = arith.constant 0 : index
    %56 = vector.load %arg9[%c0_26, %c0_27] : memref<64x128xf32, #tpu.memory_space<vmem>>, vector<64x128xf32>
    tpu.vector_store %arg9[%c0_26, %c0_27], %55 {strides = array<i32>} : memref<64x128xf32, #tpu.memory_space<vmem>>, vector<64x128xf32>,
    %57 = vector.extract_strided_slice %52 {offsets = [64, 0], sizes = [1, 128], strides = [1, 1]} : vector<65x128xf32> to vector<1x128xf32>
    %58 = arith.addf %57, %0 : vector<1x128xf32>
    %c0_28 = arith.constant 0 : index
    %c0_29 = arith.constant 0 : index
    %59 = vector.load %arg8[%c0_28, %c0_29] : memref<1x128xf32, #tpu.memory_space<vmem>>, vector<1x128xf32>
    tpu.vector_store %arg8[%c0_28, %c0_29], %58 {strides = array<i32>} : memref<1x128xf32, #tpu.memory_space<vmem>>, vector<1x128xf32>,
    return
  }
}

module attributes {stable_mosaic.version = 11 : i64} {
  func.func @kernel(%arg0: memref<1x128xf32, #tpu.memory_space<vmem>>, %arg1: memref<64x128xf32, #tpu.memory_space<vmem>>, %arg2: memref<32x1xf32, #tpu.memory_space<vmem>>, %arg3: memref<32x1xf32, #tpu.memory_space<vmem>>, %arg4: memref<64x96xf32, #tpu.memory_space<vmem>>, %arg5: memref<64x1xf32, #tpu.memory_space<vmem>>, %arg6: memref<65x32xf32, #tpu.memory_space<vmem>>, %arg7: memref<65x1xf32, #tpu.memory_space<vmem>>, %arg8: memref<1x128xf32, #tpu.memory_space<vmem>>, %arg9: memref<64x128xf32, #tpu.memory_space<vmem>>) attributes {dimension_semantics = [], scalar_prefetch = 0 : i64, scratch_operands = 0 : i64, tpu.core_type = #tpu.core_type<tc>} {
    %c0 = arith.constant 0 : index
    %c0_0 = arith.constant 0 : index
    %0 = vector.load %arg0[%c0, %c0_0] : memref<1x128xf32, #tpu.memory_space<vmem>>, vector<1x128xf32>
    %c0_1 = arith.constant 0 : index
    %c0_2 = arith.constant 0 : index
    %1 = vector.load %arg2[%c0_1, %c0_2] : memref<32x1xf32, #tpu.memory_space<vmem>>, vector<32x1xf32>
    %cst = arith.constant dense<0.000000e+00> : vector<32x128xf32>
    %2 = tpu.matmul %1, %0, %cst {dimension_numbers = #tpu.dot_dimension_numbers<[1], [0], [0], [1], [0, 0, 1, 1], [], []>} : vector<32x1xf32>, vector<1x128xf32>, vector<32x128xf32> -> vector<32x128xf32>
    %c0_3 = arith.constant 0 : index
    %c0_4 = arith.constant 0 : index
    %3 = vector.load %arg3[%c0_3, %c0_4] : memref<32x1xf32, #tpu.memory_space<vmem>>, vector<32x1xf32>
    %4 = vector.broadcast %3 : vector<32x1xf32> to vector<32x128xf32>
    %5 = arith.addf %2, %4 : vector<32x128xf32>
    %6 = tpu.iota {dimensions = array<i32: 1>} : vector<32x128xi32>
    %c64_i32 = arith.constant 64 : i32
    %c0_i32 = arith.constant 0 : i32
    %7 = arith.cmpi eq, %c64_i32, %c0_i32 : i32
    %c1_i32 = arith.constant 1 : i32
    %8 = arith.select %7, %c1_i32, %c64_i32 : i32
    %9 = vector.broadcast %8 : i32 to vector<32x128xi32>
    %10 = arith.remsi %6, %9 : vector<32x128xi32>
    %c0_i32_5 = arith.constant 0 : i32
    %11 = vector.broadcast %c0_i32_5 : i32 to vector<32x128xi32>
    %12 = arith.cmpi ne, %10, %11 : vector<32x128xi32>
    %c0_i32_6 = arith.constant 0 : i32
    %13 = vector.broadcast %c0_i32_6 : i32 to vector<32x128xi32>
    %14 = arith.cmpi slt, %10, %13 : vector<32x128xi32>
    %c0_i32_7 = arith.constant 0 : i32
    %15 = arith.cmpi slt, %8, %c0_i32_7 : i32
    %16 = vector.broadcast %15 : i1 to vector<32x128xi1>
    %17 = vector.broadcast %16 : vector<32x128xi1> to vector<32x128xi1>
    %18 = arith.xori %14, %17 : vector<32x128xi1>
    %19 = arith.andi %18, %12 : vector<32x128xi1>
    %20 = vector.broadcast %8 : i32 to vector<32x128xi32>
    %21 = arith.addi %10, %20 : vector<32x128xi32>
    %22 = arith.select %19, %21, %10 : vector<32x128xi1>, vector<32x128xi32>
    %c4_i32 = arith.constant 4 : i32
    %23 = tpu.dynamic_rotate %5 by %c4_i32 dim 1 : vector<32x128xf32>, i32 -> vector<32x128xf32>
    %c4_i32_8 = arith.constant 4 : i32
    %24 = vector.broadcast %c4_i32_8 : i32 to vector<32x128xi32>
    %25 = arith.cmpi sge, %22, %24 : vector<32x128xi32>
    %cst_9 = arith.constant 0.000000e+00 : f32
    %26 = vector.broadcast %cst_9 : f32 to vector<32x128xf32>
    %27 = arith.select %25, %23, %26 : vector<32x128xi1>, vector<32x128xf32>
    %c2_i32 = arith.constant 2 : i32
    %28 = tpu.dynamic_rotate %5 by %c2_i32 dim 1 : vector<32x128xf32>, i32 -> vector<32x128xf32>
    %c2_i32_10 = arith.constant 2 : i32
    %29 = vector.broadcast %c2_i32_10 : i32 to vector<32x128xi32>
    %30 = arith.cmpi sge, %22, %29 : vector<32x128xi32>
    %cst_11 = arith.constant 0.000000e+00 : f32
    %31 = vector.broadcast %cst_11 : f32 to vector<32x128xf32>
    %32 = arith.select %30, %28, %31 : vector<32x128xi1>, vector<32x128xf32>
    %33 = tpu.concatenate %27, %32, %5 in 0 : vector<32x128xf32>, vector<32x128xf32>, vector<32x128xf32> -> vector<96x128xf32>
    %c0_12 = arith.constant 0 : index
    %c0_13 = arith.constant 0 : index
    %34 = vector.load %arg4[%c0_12, %c0_13] : memref<64x96xf32, #tpu.memory_space<vmem>>, vector<64x96xf32>
    %cst_14 = arith.constant dense<0.000000e+00> : vector<64x128xf32>
    %35 = tpu.matmul %34, %33, %cst_14 {dimension_numbers = #tpu.dot_dimension_numbers<[1], [0], [0], [1], [0, 0, 1, 1], [], []>} : vector<64x96xf32>, vector<96x128xf32>, vector<64x128xf32> -> vector<64x128xf32>
    %c0_15 = arith.constant 0 : index
    %c0_16 = arith.constant 0 : index
    %36 = vector.load %arg5[%c0_15, %c0_16] : memref<64x1xf32, #tpu.memory_space<vmem>>, vector<64x1xf32>
    %37 = vector.broadcast %36 : vector<64x1xf32> to vector<64x128xf32>
    %38 = arith.addf %35, %37 : vector<64x128xf32>
    %39 = vector.extract_strided_slice %38 {offsets = [0, 0], sizes = [32, 128], strides = [1, 1]} : vector<64x128xf32> to vector<32x128xf32>
    %40 = math.tanh %39 : vector<32x128xf32>
    %41 = vector.extract_strided_slice %38 {offsets = [32, 0], sizes = [32, 128], strides = [1, 1]} : vector<64x128xf32> to vector<32x128xf32>
    %42 = arith.negf %41 : vector<32x128xf32>
    %43 = math.exp %42 : vector<32x128xf32>
    %cst_17 = arith.constant 1.000000e+00 : f32
    %44 = vector.broadcast %cst_17 : f32 to vector<32x128xf32>
    %45 = arith.addf %44, %43 : vector<32x128xf32>
    %46 = arith.divf %44, %45 : vector<32x128xf32>
    %47 = arith.mulf %40, %46 : vector<32x128xf32>
    %c0_18 = arith.constant 0 : index
    %c0_19 = arith.constant 0 : index
    %48 = vector.load %arg6[%c0_18, %c0_19] : memref<65x32xf32, #tpu.memory_space<vmem>>, vector<65x32xf32>
    %cst_20 = arith.constant dense<0.000000e+00> : vector<65x128xf32>
    %49 = tpu.matmul %48, %47, %cst_20 {dimension_numbers = #tpu.dot_dimension_numbers<[1], [0], [0], [1], [0, 0, 1, 1], [], []>} : vector<65x32xf32>, vector<32x128xf32>, vector<65x128xf32> -> vector<65x128xf32>
    %c0_21 = arith.constant 0 : index
    %c0_22 = arith.constant 0 : index
    %50 = vector.load %arg7[%c0_21, %c0_22] : memref<65x1xf32, #tpu.memory_space<vmem>>, vector<65x1xf32>
    %51 = vector.broadcast %50 : vector<65x1xf32> to vector<65x128xf32>
    %52 = arith.addf %49, %51 : vector<65x128xf32>
    %c0_23 = arith.constant 0 : index
    %c0_24 = arith.constant 0 : index
    %53 = vector.load %arg1[%c0_23, %c0_24] : memref<64x128xf32, #tpu.memory_space<vmem>>, vector<64x128xf32>
    %54 = vector.extract_strided_slice %52 {offsets = [0, 0], sizes = [64, 128], strides = [1, 1]} : vector<65x128xf32> to vector<64x128xf32>
    %55 = arith.addf %53, %54 : vector<64x128xf32>
    %c0_25 = arith.constant 0 : index
    %c0_26 = arith.constant 0 : index
    %56 = vector.load %arg9[%c0_25, %c0_26] : memref<64x128xf32, #tpu.memory_space<vmem>>, vector<64x128xf32>
    tpu.vector_store %arg9[%c0_25, %c0_26], %55 {strides = array<i32>} : memref<64x128xf32, #tpu.memory_space<vmem>>, vector<64x128xf32>,
    %57 = vector.extract_strided_slice %52 {offsets = [64, 0], sizes = [1, 128], strides = [1, 1]} : vector<65x128xf32> to vector<1x128xf32>
    %58 = arith.addf %57, %0 : vector<1x128xf32>
    %c0_27 = arith.constant 0 : index
    %c0_28 = arith.constant 0 : index
    %59 = vector.load %arg8[%c0_27, %c0_28] : memref<1x128xf32, #tpu.memory_space<vmem>>, vector<1x128xf32>
    tpu.vector_store %arg8[%c0_27, %c0_28], %58 {strides = array<i32>} : memref<1x128xf32, #tpu.memory_space<vmem>>, vector<1x128xf32>,
    return
  }
}

module attributes {stable_mosaic.version = 11 : i64} {
  func.func @kernel(%arg0: memref<64x128xf32, #tpu.memory_space<vmem>>, %arg1: memref<64x64xf32, #tpu.memory_space<vmem>>, %arg2: memref<64x1xf32, #tpu.memory_space<vmem>>, %arg3: memref<2x64xf32, #tpu.memory_space<vmem>>, %arg4: memref<2x1xf32, #tpu.memory_space<vmem>>, %arg5: memref<2x128xf32, #tpu.memory_space<vmem>>) attributes {dimension_semantics = [], scalar_prefetch = 0 : i64, scratch_operands = 0 : i64, tpu.core_type = #tpu.core_type<tc>} {
    %c0 = arith.constant 0 : index
    %c0_0 = arith.constant 0 : index
    %0 = vector.load %arg0[%c0, %c0_0] : memref<64x128xf32, #tpu.memory_space<vmem>>, vector<64x128xf32>
    %c0_1 = arith.constant 0 : index
    %c0_2 = arith.constant 0 : index
    %1 = vector.load %arg1[%c0_1, %c0_2] : memref<64x64xf32, #tpu.memory_space<vmem>>, vector<64x64xf32>
    %cst = arith.constant dense<0.000000e+00> : vector<64x128xf32>
    %2 = tpu.matmul %1, %0, %cst {dimension_numbers = #tpu.dot_dimension_numbers<[1], [0], [0], [1], [0, 0, 1, 1], [], []>} : vector<64x64xf32>, vector<64x128xf32>, vector<64x128xf32> -> vector<64x128xf32>
    %c0_3 = arith.constant 0 : index
    %c0_4 = arith.constant 0 : index
    %3 = vector.load %arg2[%c0_3, %c0_4] : memref<64x1xf32, #tpu.memory_space<vmem>>, vector<64x1xf32>
    %4 = vector.broadcast %3 : vector<64x1xf32> to vector<64x128xf32>
    %5 = arith.addf %2, %4 : vector<64x128xf32>
    %cst_5 = arith.constant 0.000000e+00 : f32
    %6 = vector.broadcast %cst_5 : f32 to vector<64x128xf32>
    %7 = arith.maximumf %5, %6 : vector<64x128xf32>
    %c0_6 = arith.constant 0 : index
    %c0_7 = arith.constant 0 : index
    %8 = vector.load %arg3[%c0_6, %c0_7] : memref<2x64xf32, #tpu.memory_space<vmem>>, vector<2x64xf32>
    %cst_8 = arith.constant dense<0.000000e+00> : vector<2x128xf32>
    %9 = tpu.matmul %8, %7, %cst_8 {dimension_numbers = #tpu.dot_dimension_numbers<[1], [0], [0], [1], [0, 0, 1, 1], [], []>} : vector<2x64xf32>, vector<64x128xf32>, vector<2x128xf32> -> vector<2x128xf32>
    %c0_9 = arith.constant 0 : index
    %c0_10 = arith.constant 0 : index
    %10 = vector.load %arg4[%c0_9, %c0_10] : memref<2x1xf32, #tpu.memory_space<vmem>>, vector<2x1xf32>
    %11 = vector.broadcast %10 : vector<2x1xf32> to vector<2x128xf32>
    %12 = arith.addf %9, %11 : vector<2x128xf32>
    %13 = tpu.iota {dimensions = array<i32: 0>} : vector<2x128xi32>
    %c0_i32 = arith.constant 0 : i32
    %14 = vector.broadcast %c0_i32 : i32 to vector<2x128xi32>
    %15 = arith.cmpi eq, %13, %14 : vector<2x128xi32>
    %cst_11 = arith.constant 5.000000e-01 : f32
    %16 = vector.broadcast %cst_11 : f32 to vector<2x128xf32>
    %17 = arith.mulf %16, %12 : vector<2x128xf32>
    %18 = math.exp %17 : vector<2x128xf32>
    %19 = arith.select %15, %12, %18 : vector<2x128xi1>, vector<2x128xf32>
    %c0_12 = arith.constant 0 : index
    %c0_13 = arith.constant 0 : index
    %20 = vector.load %arg5[%c0_12, %c0_13] : memref<2x128xf32, #tpu.memory_space<vmem>>, vector<2x128xf32>
    tpu.vector_store %arg5[%c0_12, %c0_13], %19 {strides = array<i32>} : memref<2x128xf32, #tpu.memory_space<vmem>>, vector<2x128xf32>,
    return
  }
}

</mosaic_0001>

<llo_original>
// kernel: _lambda_.5
$region0: #{_lambda_.5}
  #allocation0 [shape = 'u32[]', space=smem, size = 0x4, offset = 0x4, fixed_abs, tag = 'smem constant byte address 0x4 - core index']
  #allocation1 [shape = 'u32[72,128]{1,0:T(1,128)}', space=vmem, size = 0x9000, scoped, tag = 'internal scratch']
  %s0 = inlined_call_operand.vmem [shape: f32[1,128], index: 0, kind: input, shape index: {}]
  %s1 = inlined_call_operand.vmem [shape: f32[64,128], index: 1, kind: input, shape index: {}]
  %s2 = inlined_call_operand.hbm [shape: f32[32,1], index: 2, kind: input, shape index: {}]
  %s3 = inlined_call_operand.hbm [shape: f32[32,1], index: 3, kind: input, shape index: {}]
  %s4 = inlined_call_operand.hbm [shape: f32[64,96], index: 4, kind: input, shape index: {}]
  %s5 = inlined_call_operand.hbm [shape: f32[64,1], index: 5, kind: input, shape index: {}]
  %s6 = inlined_call_operand.hbm [shape: f32[65,32], index: 6, kind: input, shape index: {}]
  %s7 = inlined_call_operand.hbm [shape: f32[65,1], index: 7, kind: input, shape index: {}]
  %s8 = inlined_call_operand.vmem [shape: f32[1,128], index: 8, kind: output, shape index: {0}]
  %s9 = inlined_call_operand.vmem [shape: f32[64,128], index: 9, kind: output, shape index: {1}]
  %10 = xla_tuple %s8, %s9
  %s11 = sld [smem:[#allocation0]]
  $region74: #{_lambda_.5} parent=0
    _
  %s13 = ssub.s32 1, %s11
  %s14 = scalar_select 0, %s13, %s11
  $region1: #{_lambda_.5} parent=0
    #allocation2 [shape = 'u8[16384]{0}', space=vmem, size = 0x4000, scoped, tag = 'input window, operand 2, single buffered']
    #allocation3 [shape = 's32[1]{0}', space=sflag, size = 0x4, scoped, tag = 'scoped memory for _lambda_.5']
    #allocation4 [shape = 'u8[16384]{0}', space=vmem, size = 0x4000, scoped, tag = 'input window, operand 3, single buffered']
    #allocation5 [shape = 's32[1]{0}', space=sflag, size = 0x4, scoped, tag = 'scoped memory for _lambda_.5']
    #allocation6 [shape = 'u8[32768]{0}', space=vmem, size = 0x8000, scoped, tag = 'input window, operand 4, single buffered']
    #allocation7 [shape = 'u8[32768]{0}', space=vmem, size = 0x8000, scoped, tag = 'input window, operand 5, single buffered']
    #allocation8 [shape = 's32[1]{0}', space=sflag, size = 0x4, scoped, tag = 'scoped memory for _lambda_.5']
    #allocation9 [shape = 'u8[36864]{0}', space=vmem, size = 0x9000, scoped, tag = 'input window, operand 6, single buffered']
    #allocation10 [shape = 'u8[36864]{0}', space=vmem, size = 0x9000, scoped, tag = 'input window, operand 7, single buffered']
    #allocation11 [shape = 's32[1]{0}', space=sflag, size = 0x4, scoped, tag = 'scoped memory for _lambda_.5']
    %15 = vsyncpa [#allocation3], 0
    %16 = vsyncpa [#allocation5], 0
    %17 = vsyncpa [#allocation8], 0
    %18 = vsyncpa [#allocation11], 0
    // Predicated region
    $region2: #{_lambda_.5} parent=1 // pred_check
      _
    $region3: #{_lambda_.5} parent=1 // pred_check_branch
      %20 = sbr.rel (0) target = $region5
    $region4: #{_lambda_.5} parent=1 // pred_region
      _
    $region5: #{_lambda_.5} parent=1 // pred_fallthru
      _
    // Predicated region
    $region6: #{_lambda_.5} parent=1 // pred_check
      _
    $region7: #{_lambda_.5} parent=1 // pred_check_branch
      %22 = sbr.rel (0) target = $region9
    $region8: #{_lambda_.5} parent=1 // pred_region
      _
    $region9: #{_lambda_.5} parent=1 // pred_fallthru
      _
    // Predicated region
    $region10: #{_lambda_.5} parent=1 // pred_check
      _
    $region11: #{_lambda_.5} parent=1 // pred_check_branch
      %24 = sbr.rel (0) target = $region13
    $region12: #{_lambda_.5} parent=1 // pred_region
      %26 = vsyncadd [#allocation3], 0
      %s27 = sshll.u32 %s2, 4
      %s28 = int_to_ptr.hbm [resolvable:$true] %s27
      %s29 = sshll.u32 [#allocation2], 4
      %s30 = int_to_ptr.vmem [resolvable:$true] %s29
      %35 = dma.hbm_to_vmem [thread:$0]  %s28, 512, %s30, [#allocation3], 128, 128, 8
    $region13: #{_lambda_.5} parent=1 // pred_fallthru
      _
    // Predicated region
    $region14: #{_lambda_.5} parent=1 // pred_check
      _
    $region15: #{_lambda_.5} parent=1 // pred_check_branch
      %37 = sbr.rel (0) target = $region17
    $region16: #{_lambda_.5} parent=1 // pred_region
      %39 = vsyncadd [#allocation5], 0
      %s40 = sshll.u32 %s3, 4
      %s41 = int_to_ptr.hbm [resolvable:$true] %s40
      %s42 = sshll.u32 [#allocation4], 4
      %s43 = int_to_ptr.vmem [resolvable:$true] %s42
      %48 = dma.hbm_to_vmem [thread:$0]  %s41, 512, %s43, [#allocation5], 128, 128, 8
    $region17: #{_lambda_.5} parent=1 // pred_fallthru
      _
    // Predicated region
    $region18: #{_lambda_.5} parent=1 // pred_check
      _
    $region19: #{_lambda_.5} parent=1 // pred_check_branch
      %50 = sbr.rel (0) target = $region21
    $region20: #{_lambda_.5} parent=1 // pred_region
      %52 = vsyncadd [#allocation5], 0
      %s53 = sshll.u32 %s4, 4
      %s54 = int_to_ptr.hbm [resolvable:$true] %s53
      %s55 = sshll.u32 [#allocation6], 4
      %s56 = int_to_ptr.vmem [resolvable:$true] %s55
      %61 = dma.hbm_to_vmem [thread:$0]  %s54, 1024, %s56, [#allocation5], 128, 128, 8
    $region21: #{_lambda_.5} parent=1 // pred_fallthru
      _
    // Predicated region
    $region22: #{_lambda_.5} parent=1 // pred_check
      _
    $region23: #{_lambda_.5} parent=1 // pred_check_branch
      %63 = sbr.rel (0) target = $region25
    $region24: #{_lambda_.5} parent=1 // pred_region
      %65 = vsyncadd [#allocation8], 0
      %s66 = sshll.u32 %s5, 4
      %s67 = int_to_ptr.hbm [resolvable:$true] %s66
      %s68 = sshll.u32 [#allocation7], 4
      %s69 = int_to_ptr.vmem [resolvable:$true] %s68
      %74 = dma.hbm_to_vmem [thread:$0]  %s67, 1024, %s69, [#allocation8], 128, 128, 8
    $region25: #{_lambda_.5} parent=1 // pred_fallthru
      _
    // Predicated region
    $region26: #{_lambda_.5} parent=1 // pred_check
      _
    $region27: #{_lambda_.5} parent=1 // pred_check_branch
      %76 = sbr.rel (0) target = $region29
    $region28: #{_lambda_.5} parent=1 // pred_region
      %78 = vsyncadd [#allocation8], 0
      %s79 = sshll.u32 %s6, 4
      %s80 = int_to_ptr.hbm [resolvable:$true] %s79
      %s81 = sshll.u32 [#allocation9], 4
      %s82 = int_to_ptr.vmem [resolvable:$true] %s81
      %87 = dma.hbm_to_vmem [thread:$0]  %s80, 1152, %s82, [#allocation8], 128, 128, 8
    $region29: #{_lambda_.5} parent=1 // pred_fallthru
      _
    // Predicated region
    $region30: #{_lambda_.5} parent=1 // pred_check
      _
    $region31: #{_lambda_.5} parent=1 // pred_check_branch
      %89 = sbr.rel (0) target = $region33
    $region32: #{_lambda_.5} parent=1 // pred_region
      %91 = vsyncadd [#allocation11], 0
      %s92 = sshll.u32 %s7, 4
      %s93 = int_to_ptr.hbm [resolvable:$true] %s92
      %s94 = sshll.u32 [#allocation10], 4
      %s95 = int_to_ptr.vmem [resolvable:$true] %s94
      %100 = dma.hbm_to_vmem [thread:$0]  %s93, 1152, %s95, [#allocation11], 128, 128, 8
    $region33: #{_lambda_.5} parent=1 // pred_fallthru
      _
    // Predicated region
    $region34: #{_lambda_.5} parent=1 // pred_check
      _
    $region35: #{_lambda_.5} parent=1 // pred_check_branch
      %102 = sbr.rel (0) target = $region37
    $region36: #{_lambda_.5} parent=1 // pred_region
      %104 = dma.done [#allocation3], 512
    $region37: #{_lambda_.5} parent=1 // pred_fallthru
      _
    // Predicated region
    $region38: #{_lambda_.5} parent=1 // pred_check
      _
    $region39: #{_lambda_.5} parent=1 // pred_check_branch
      %106 = sbr.rel (0) target = $region41
    $region40: #{_lambda_.5} parent=1 // pred_region
      %108 = dma.done [#allocation5], 512
    $region41: #{_lambda_.5} parent=1 // pred_fallthru
      _
    // Predicated region
    $region42: #{_lambda_.5} parent=1 // pred_check
      _
    $region43: #{_lambda_.5} parent=1 // pred_check_branch
      %110 = sbr.rel (0) target = $region45
    $region44: #{_lambda_.5} parent=1 // pred_region
      %112 = dma.done [#allocation5], 1024
    $region45: #{_lambda_.5} parent=1 // pred_fallthru
      _
    // Predicated region
    $region46: #{_lambda_.5} parent=1 // pred_check
      _
    $region47: #{_lambda_.5} parent=1 // pred_check_branch
      %114 = sbr.rel (0) target = $region49
    $region48: #{_lambda_.5} parent=1 // pred_region
      %116 = dma.done [#allocation8], 1024
    $region49: #{_lambda_.5} parent=1 // pred_fallthru
      _
    // Predicated region
    $region50: #{_lambda_.5} parent=1 // pred_check
      _
    $region51: #{_lambda_.5} parent=1 // pred_check_branch
      %118 = sbr.rel (0) target = $region53
    $region52: #{_lambda_.5} parent=1 // pred_region
      %120 = dma.done [#allocation8], 1152
    $region53: #{_lambda_.5} parent=1 // pred_fallthru
      _
    // Predicated region
    $region54: #{_lambda_.5} parent=1 // pred_check
      _
    $region55: #{_lambda_.5} parent=1 // pred_check_branch
      %122 = sbr.rel (0) target = $region57
    $region56: #{_lambda_.5} parent=1 // pred_region
      %124 = dma.done [#allocation11], 1152
    $region57: #{_lambda_.5} parent=1 // pred_fallthru
      _
    %v125 = vld [vmem:[%s0] sm:$0x1]
    %v126 = vld [vmem:[#allocation2] sm:$0xff]
    %v127 = vld [vmem:[#allocation2 + $0x8] sm:$0xff]
    %v128 = vld [vmem:[#allocation2 + $0x10] sm:$0xff]
    %v129 = vld [vmem:[#allocation2 + $0x18] sm:$0xff]
    %v130 = vld [vmem:[#allocation4] sm:$0xff]
    %v131 = vld [vmem:[#allocation4 + $0x8] sm:$0xff]
    %v132 = vld [vmem:[#allocation4 + $0x10] sm:$0xff]
    %v133 = vld [vmem:[#allocation4 + $0x18] sm:$0xff]
    %135 = vset.pattern.permute.xlu0 0
    %136 = vperm.xlu0 %135, %v130
    %v137 = vpop.permute.xlu0 %136
    %140 = vset.pattern.permute.xlu0 0
    %141 = vperm.xlu0 %140, %v131
    %v142 = vpop.permute.xlu0 %141
    %145 = vset.pattern.permute.xlu0 0
    %146 = vperm.xlu0 %145, %v132
    %v147 = vpop.permute.xlu0 %146
    %150 = vset.pattern.permute.xlu0 0
    %151 = vperm.xlu0 %150, %v133
    %v152 = vpop.permute.xlu0 %151
    %vm154 = vcmask 7168
    %v156 = vsel %vm154, %v126, 0
    %v159 = vsel %vm154, %v127, 0
    %v162 = vsel %vm154, %v128, 0
    %v165 = vsel %vm154, %v129, 0
    %vm167 = vcmask 1040384
    %v169 = vsel %vm167, %v125, 0
    %171 = vmatpush.msra.mxu0 0.0
    %172 = vmatpush.msra.mxu0 0.0
    %173 = vmatpush.msra.mxu0 0.0
    %174 = vmatpush.msra.mxu0 0.0
    %175 = vmatpush.msra.mxu0 0.0
    %176 = vmatpush.msra.mxu0 0.0
    %177 = vmatpush.msra.mxu0 0.0
    %178 = vmatpush.msra.mxu0 0.0
    %179 = vmatpush.msra.mxu0 0.0
    %180 = vmatpush.msra.mxu0 0.0
    %181 = vmatpush.msra.mxu0 0.0
    %182 = vmatpush.msra.mxu0 0.0
    %183 = vmatpush.msra.mxu0 0.0
    %184 = vmatpush.msra.mxu0 0.0
    %185 = vmatpush.msra.mxu0 0.0
    %186 = vmatpush.msra.mxu0 %v169
    %187 = vmatmul.f32.gmra.mxu0 %v156
    %v188 = vpop.f32.mrf.mxu0
    %v189 = vadd.f32 %v137, %v188
    %190 = vmatmul.f32.gmra.mxu0 %v159
    %v191 = vpop.f32.mrf.mxu0
    %v192 = vadd.f32 %v142, %v191
    %193 = vmatmul.f32.gmra.mxu0 %v162
    %v194 = vpop.f32.mrf.mxu0
    %v195 = vadd.f32 %v147, %v194
    %196 = vmatmul.f32.gmra.mxu0 %v165
    %v197 = vpop.f32.mrf.mxu0
    %v198 = vadd.f32 %v152, %v197
    %199 = vdwg.mxu0
    %v200 = vlaneseq
    %v201 = vand.u32 %v200, 127
    %vm202 = vcmp.lt.s32.totalorder %v201, 0
    %v203 = vsub.s32 0, %v201
    %v204 = vsel %vm202, %v203, %v201
    %v205 = vshrl.u32 %v204, 6
    %v206 = vand.u32 %v204, 63
    %v207 = vsub.s32 0, %v206
    %v208 = vsel %vm202, %v207, %v206
    %vm209 = vcmp.ne.s32.totalorder %v208, 0
    %vm210 = vcmp.lt.s32.totalorder %v208, 0
    %vm211 = vmand %vm210, %vm209
    %v212 = vadd.s32 %v208, 64
    %v213 = vsel %vm211, %v212, %v208
    %214 = vrot.lane.b32.xlu0 %v189, 2
    %v215 = vpop.permute.xlu0 %214
    %216 = vrot.lane.b32.xlu0 %v192, 2
    %v217 = vpop.permute.xlu0 %216
    %218 = vrot.lane.b32.xlu0 %v195, 2
    %v219 = vpop.permute.xlu0 %218
    %220 = vrot.lane.b32.xlu0 %v198, 2
    %v221 = vpop.permute.xlu0 %220
    %vm222 = vcmp.ge.s32.totalorder %v213, 2
    %v223 = vsel %vm222, %v215, 0.0
    %v224 = vsel %vm222, %v217, 0.0
    %v225 = vsel %vm222, %v219, 0.0
    %v226 = vsel %vm222, %v221, 0.0
    %227 = vrot.lane.b32.xlu0 %v189, 1
    %v228 = vpop.permute.xlu0 %227
    %229 = vrot.lane.b32.xlu0 %v192, 1
    %v230 = vpop.permute.xlu0 %229
    %231 = vrot.lane.b32.xlu0 %v195, 1
    %v232 = vpop.permute.xlu0 %231
    %233 = vrot.lane.b32.xlu0 %v198, 1
    %v234 = vpop.permute.xlu0 %233
    %vm235 = vcmp.ge.s32.totalorder %v213, 1
    %v236 = vsel %vm235, %v228, 0.0
    %v237 = vsel %vm235, %v230, 0.0
    %v238 = vsel %vm235, %v232, 0.0
    %v239 = vsel %vm235, %v234, 0.0
    %v240 = vld [vmem:[#allocation6] sm:$0xff]
    %v241 = vld [vmem:[#allocation6 + $0x8] sm:$0xff]
    %v242 = vld [vmem:[#allocation6 + $0x10] sm:$0xff]
    %v243 = vld [vmem:[#allocation6 + $0x18] sm:$0xff]
    %v244 = vld [vmem:[#allocation6 + $0x20] sm:$0xff]
    %v245 = vld [vmem:[#allocation6 + $0x28] sm:$0xff]
    %v246 = vld [vmem:[#allocation6 + $0x30] sm:$0xff]
    %v247 = vld [vmem:[#allocation6 + $0x38] sm:$0xff]
    %v248 = vld [vmem:[#allocation7] sm:$0xff]
    %v249 = vld [vmem:[#allocation7 + $0x8] sm:$0xff]
    %v250 = vld [vmem:[#allocation7 + $0x10] sm:$0xff]
    %v251 = vld [vmem:[#allocation7 + $0x18] sm:$0xff]
    %v252 = vld [vmem:[#allocation7 + $0x20] sm:$0xff]
    %v253 = vld [vmem:[#allocation7 + $0x28] sm:$0xff]
    %v254 = vld [vmem:[#allocation7 + $0x30] sm:$0xff]
    %v255 = vld [vmem:[#allocation7 + $0x38] sm:$0xff]
    %257 = vset.pattern.permute.xlu0 0
    %258 = vperm.xlu0 %257, %v248
    %v259 = vpop.permute.xlu0 %258
    %262 = vset.pattern.permute.xlu0 0
    %263 = vperm.xlu0 %262, %v249
    %v264 = vpop.permute.xlu0 %263
    %267 = vset.pattern.permute.xlu0 0
    %268 = vperm.xlu0 %267, %v250
    %v269 = vpop.permute.xlu0 %268
    %272 = vset.pattern.permute.xlu0 0
    %273 = vperm.xlu0 %272, %v251
    %v274 = vpop.permute.xlu0 %273
    %277 = vset.pattern.permute.xlu0 0
    %278 = vperm.xlu0 %277, %v252
    %v279 = vpop.permute.xlu0 %278
    %282 = vset.pattern.permute.xlu0 0
    %283 = vperm.xlu0 %282, %v253
    %v284 = vpop.permute.xlu0 %283
    %287 = vset.pattern.permute.xlu0 0
    %288 = vperm.xlu0 %287, %v254
    %v289 = vpop.permute.xlu0 %288
    %292 = vset.pattern.permute.xlu0 0
    %293 = vperm.xlu0 %292, %v255
    %v294 = vpop.permute.xlu0 %293
    %vm296 = vcmask 785408
    %v298 = vsel %vm296, %v240, 0
    %v301 = vsel %vm296, %v241, 0
    %v304 = vsel %vm296, %v242, 0
    %v307 = vsel %vm296, %v243, 0
    %v310 = vsel %vm296, %v244, 0
    %v313 = vsel %vm296, %v245, 0
    %v316 = vsel %vm296, %v246, 0
    %v319 = vsel %vm296, %v247, 0
    %321 = vmatpush.msra.mxu0 0.0
    %322 = vmatpush.msra.mxu0 0.0
    %323 = vmatpush.msra.mxu0 0.0
    %324 = vmatpush.msra.mxu0 0.0
    %325 = vmatpush.msra.mxu0 %v198
    %326 = vmatpush.msra.mxu0 %v195
    %327 = vmatpush.msra.mxu0 %v192
    %328 = vmatpush.msra.mxu0 %v189
    %329 = vmatpush.msra.mxu0 %v239
    %330 = vmatpush.msra.mxu0 %v238
    %331 = vmatpush.msra.mxu0 %v237
    %332 = vmatpush.msra.mxu0 %v236
    %333 = vmatpush.msra.mxu0 %v226
    %334 = vmatpush.msra.mxu0 %v225
    %335 = vmatpush.msra.mxu0 %v224
    %336 = vmatpush.msra.mxu0 %v223
    %337 = vmatmul.f32.gmra.mxu0 %v298
    %v338 = vpop.f32.mrf.mxu0
    %v339 = vadd.f32 %v259, %v338
    %340 = vmatmul.f32.gmra.mxu0 %v301
    %v341 = vpop.f32.mrf.mxu0
    %v342 = vadd.f32 %v264, %v341
    %343 = vmatmul.f32.gmra.mxu0 %v304
    %v344 = vpop.f32.mrf.mxu0
    %v345 = vadd.f32 %v269, %v344
    %346 = vmatmul.f32.gmra.mxu0 %v307
    %v347 = vpop.f32.mrf.mxu0
    %v348 = vadd.f32 %v274, %v347
    %349 = vmatmul.f32.gmra.mxu0 %v310
    %v350 = vpop.f32.mrf.mxu0
    %v351 = vadd.f32 %v279, %v350
    %352 = vmatmul.f32.gmra.mxu0 %v313
    %v353 = vpop.f32.mrf.mxu0
    %v354 = vadd.f32 %v284, %v353
    %355 = vmatmul.f32.gmra.mxu0 %v316
    %v356 = vpop.f32.mrf.mxu0
    %v357 = vadd.f32 %v289, %v356
    %358 = vmatmul.f32.gmra.mxu0 %v319
    %v359 = vpop.f32.mrf.mxu0
    %v360 = vadd.f32 %v294, %v359
    %361 = vdwg.mxu0
    %v362 = vtanh.pop %v339
    %v363 = vtanh.pop %v342
    %v364 = vtanh.pop %v345
    %v365 = vtanh.pop %v348
    %v366 = vxor.u32 %v351, 2147483648
    %v367 = vxor.u32 %v354, 2147483648
    %v368 = vxor.u32 %v357, 2147483648
    %v369 = vxor.u32 %v360, 2147483648
    %v370 = vmul.f32 %v366, 1.442695
    %v371 = vpow.pop %v370
    %v372 = vmul.f32 %v367, 1.442695
    %v373 = vpow.pop %v372
    %v374 = vmul.f32 %v368, 1.442695
    %v375 = vpow.pop %v374
    %v376 = vmul.f32 %v369, 1.442695
    %v377 = vpow.pop %v376
    %v378 = vadd.f32 %v371, 1.0
    %v379 = vadd.f32 %v373, 1.0
    %v380 = vadd.f32 %v375, 1.0
    %v381 = vadd.f32 %v377, 1.0
    %v382 = vrcp.pop %v378
    %v383 = vmul.f32 %v378, %v382
    %v384 = vsub.f32 1.0, %v383
    %v385 = vmul.f32 %v382, %v384
    %v386 = vadd.f32 %v382, %v385
    %vm387 = vweird.f32 %v378
    %vm388 = vweird.f32 %v382
    %vm389 = vmor %vm387, %vm388
    %v390 = vsel %vm389, %v382, %v386
    %v391 = vand.u32 2147483647, %v378
    %vm392 = vcmp.eq.f32.partialorder %v391, 8.507059e+37
    %v393 = vand.u32 %v378, 2147483648
    %v394 = vor.u32 1.1754944e-38, %v393
    %v395 = vsel %vm392, %v394, %v390
    %v396 = vmul.f32 1.0, %v395
    %v397 = vrcp.pop %v379
    %v398 = vmul.f32 %v379, %v397
    %v399 = vsub.f32 1.0, %v398
    %v400 = vmul.f32 %v397, %v399
    %v401 = vadd.f32 %v397, %v400
    %vm402 = vweird.f32 %v379
    %vm403 = vweird.f32 %v397
    %vm404 = vmor %vm402, %vm403
    %v405 = vsel %vm404, %v397, %v401
    %v406 = vand.u32 2147483647, %v379
    %vm407 = vcmp.eq.f32.partialorder %v406, 8.507059e+37
    %v408 = vand.u32 %v379, 2147483648
    %v409 = vor.u32 1.1754944e-38, %v408
    %v410 = vsel %vm407, %v409, %v405
    %v411 = vmul.f32 1.0, %v410
    %v412 = vrcp.pop %v380
    %v413 = vmul.f32 %v380, %v412
    %v414 = vsub.f32 1.0, %v413
    %v415 = vmul.f32 %v412, %v414
    %v416 = vadd.f32 %v412, %v415
    %vm417 = vweird.f32 %v380
    %vm418 = vweird.f32 %v412
    %vm419 = vmor %vm417, %vm418
    %v420 = vsel %vm419, %v412, %v416
    %v421 = vand.u32 2147483647, %v380
    %vm422 = vcmp.eq.f32.partialorder %v421, 8.507059e+37
    %v423 = vand.u32 %v380, 2147483648
    %v424 = vor.u32 1.1754944e-38, %v423
    %v425 = vsel %vm422, %v424, %v420
    %v426 = vmul.f32 1.0, %v425
    %v427 = vrcp.pop %v381
    %v428 = vmul.f32 %v381, %v427
    %v429 = vsub.f32 1.0, %v428
    %v430 = vmul.f32 %v427, %v429
    %v431 = vadd.f32 %v427, %v430
    %vm432 = vweird.f32 %v381
    %vm433 = vweird.f32 %v427
    %vm434 = vmor %vm432, %vm433
    %v435 = vsel %vm434, %v427, %v431
    %v436 = vand.u32 2147483647, %v381
    %vm437 = vcmp.eq.f32.partialorder %v436, 8.507059e+37
    %v438 = vand.u32 %v381, 2147483648
    %v439 = vor.u32 1.1754944e-38, %v438
    %v440 = vsel %vm437, %v439, %v435
    %v441 = vmul.f32 1.0, %v440
    %v442 = vmul.f32 %v362, %v396
    %v443 = vmul.f32 %v363, %v411
    %v444 = vmul.f32 %v364, %v426
    %v445 = vmul.f32 %v365, %v441
    %v446 = vld [vmem:[#allocation9] sm:$0xff]
    %v447 = vld [vmem:[#allocation9 + $0x8] sm:$0xff]
    %v448 = vld [vmem:[#allocation9 + $0x10] sm:$0xff]
    %v449 = vld [vmem:[#allocation9 + $0x18] sm:$0xff]
    %v450 = vld [vmem:[#allocation9 + $0x20] sm:$0xff]
    %v451 = vld [vmem:[#allocation9 + $0x28] sm:$0xff]
    %v452 = vld [vmem:[#allocation9 + $0x30] sm:$0xff]
    %v453 = vld [vmem:[#allocation9 + $0x38] sm:$0xff]
    %v454 = vld [vmem:[#allocation9 + $0x40] sm:$0x1]
    %v455 = vld [vmem:[#allocation10] sm:$0xff]
    %v456 = vld [vmem:[#allocation10 + $0x8] sm:$0xff]
    %v457 = vld [vmem:[#allocation10 + $0x10] sm:$0xff]
    %v458 = vld [vmem:[#allocation10 + $0x18] sm:$0xff]
    %v459 = vld [vmem:[#allocation10 + $0x20] sm:$0xff]
    %v460 = vld [vmem:[#allocation10 + $0x28] sm:$0xff]
    %v461 = vld [vmem:[#allocation10 + $0x30] sm:$0xff]
    %v462 = vld [vmem:[#allocation10 + $0x38] sm:$0xff]
    %v463 = vld [vmem:[#allocation10 + $0x40] sm:$0x1]
    %465 = vset.pattern.permute.xlu0 0
    %466 = vperm.xlu0 %465, %v455
    %v467 = vpop.permute.xlu0 %466
    %470 = vset.pattern.permute.xlu0 0
    %471 = vperm.xlu0 %470, %v456
    %v472 = vpop.permute.xlu0 %471
    %475 = vset.pattern.permute.xlu0 0
    %476 = vperm.xlu0 %475, %v457
    %v477 = vpop.permute.xlu0 %476
    %480 = vset.pattern.permute.xlu0 0
    %481 = vperm.xlu0 %480, %v458
    %v482 = vpop.permute.xlu0 %481
    %485 = vset.pattern.permute.xlu0 0
    %486 = vperm.xlu0 %485, %v459
    %v487 = vpop.permute.xlu0 %486
    %490 = vset.pattern.permute.xlu0 0
    %491 = vperm.xlu0 %490, %v460
    %v492 = vpop.permute.xlu0 %491
    %495 = vset.pattern.permute.xlu0 0
    %496 = vperm.xlu0 %495, %v461
    %v497 = vpop.permute.xlu0 %496
    %500 = vset.pattern.permute.xlu0 0
    %501 = vperm.xlu0 %500, %v462
    %v502 = vpop.permute.xlu0 %501
    %505 = vset.pattern.permute.xlu0 0
    %506 = vperm.xlu0 %505, %v463
    %v507 = vpop.permute.xlu0 %506
    %vm509 = vcmask 261120
    %v511 = vsel %vm509, %v446, 0
    %v514 = vsel %vm509, %v447, 0
    %v517 = vsel %vm509, %v448, 0
    %v520 = vsel %vm509, %v449, 0
    %v523 = vsel %vm509, %v450, 0
    %v526 = vsel %vm509, %v451, 0
    %v529 = vsel %vm509, %v452, 0
    %v532 = vsel %vm509, %v453, 0
    %v535 = vsel %vm509, %v454, 0
    %537 = vmatpush.msra.mxu0 0.0
    %538 = vmatpush.msra.mxu0 0.0
    %539 = vmatpush.msra.mxu0 0.0
    %540 = vmatpush.msra.mxu0 0.0
    %541 = vmatpush.msra.mxu0 0.0
    %542 = vmatpush.msra.mxu0 0.0
    %543 = vmatpush.msra.mxu0 0.0
    %544 = vmatpush.msra.mxu0 0.0
    %545 = vmatpush.msra.mxu0 0.0
    %546 = vmatpush.msra.mxu0 0.0
    %547 = vmatpush.msra.mxu0 0.0
    %548 = vmatpush.msra.mxu0 0.0
    %549 = vmatpush.msra.mxu0 %v445
    %550 = vmatpush.msra.mxu0 %v444
    %551 = vmatpush.msra.mxu0 %v443
    %552 = vmatpush.msra.mxu0 %v442
    %553 = vmatmul.f32.gmra.mxu0 %v511
    %v554 = vpop.f32.mrf.mxu0
    %v555 = vadd.f32 %v467, %v554
    %556 = vmatmul.f32.gmra.mxu0 %v514
    %v557 = vpop.f32.mrf.mxu0
    %v558 = vadd.f32 %v472, %v557
    %559 = vmatmul.f32.gmra.mxu0 %v517
    %v560 = vpop.f32.mrf.mxu0
    %v561 = vadd.f32 %v477, %v560
    %562 = vmatmul.f32.gmra.mxu0 %v520
    %v563 = vpop.f32.mrf.mxu0
    %v564 = vadd.f32 %v482, %v563
    %565 = vmatmul.f32.gmra.mxu0 %v523
    %v566 = vpop.f32.mrf.mxu0
    %v567 = vadd.f32 %v487, %v566
    %568 = vmatmul.f32.gmra.mxu0 %v526
    %v569 = vpop.f32.mrf.mxu0
    %v570 = vadd.f32 %v492, %v569
    %571 = vmatmul.f32.gmra.mxu0 %v529
    %v572 = vpop.f32.mrf.mxu0
    %v573 = vadd.f32 %v497, %v572
    %574 = vmatmul.f32.gmra.mxu0 %v532
    %v575 = vpop.f32.mrf.mxu0
    %v576 = vadd.f32 %v502, %v575
    %577 = vmatmul.f32.gmra.mxu0 %v535
    %v578 = vpop.f32.mrf.mxu0
    %v579 = vadd.f32 %v507, %v578
    %580 = vdwg.mxu0
    %v581 = vld [vmem:[%s1] sm:$0xff]
    %v582 = vld [vmem:[%s1 + $0x8] sm:$0xff]
    %v583 = vld [vmem:[%s1 + $0x10] sm:$0xff]
    %v584 = vld [vmem:[%s1 + $0x18] sm:$0xff]
    %v585 = vld [vmem:[%s1 + $0x20] sm:$0xff]
    %v586 = vld [vmem:[%s1 + $0x28] sm:$0xff]
    %v587 = vld [vmem:[%s1 + $0x30] sm:$0xff]
    %v588 = vld [vmem:[%s1 + $0x38] sm:$0xff]
    %v589 = vadd.f32 %v581, %v555
    %v590 = vadd.f32 %v582, %v558
    %v591 = vadd.f32 %v583, %v561
    %v592 = vadd.f32 %v584, %v564
    %v593 = vadd.f32 %v585, %v567
    %v594 = vadd.f32 %v586, %v570
    %v595 = vadd.f32 %v587, %v573
    %v596 = vadd.f32 %v588, %v576
    %597 = vst [vmem:[%s9] sm:$0xff] %v589
    %598 = vst [vmem:[%s9 + $0x8] sm:$0xff] %v590
    %599 = vst [vmem:[%s9 + $0x10] sm:$0xff] %v591
    %600 = vst [vmem:[%s9 + $0x18] sm:$0xff] %v592
    %601 = vst [vmem:[%s9 + $0x20] sm:$0xff] %v593
    %602 = vst [vmem:[%s9 + $0x28] sm:$0xff] %v594
    %603 = vst [vmem:[%s9 + $0x30] sm:$0xff] %v595
    %604 = vst [vmem:[%s9 + $0x38] sm:$0xff] %v596
    %v605 = vadd.f32 %v579, %v125
    %606 = vst [vmem:[%s8] sm:$0x1] %v605
    // Predicated region
    $region58: #{_lambda_.5} parent=1 // pred_check
      _
    $region59: #{_lambda_.5} parent=1 // pred_check_branch
      %608 = sbr.rel (0) target = $region61
    $region60: #{_lambda_.5} parent=1 // pred_region
      _
    $region61: #{_lambda_.5} parent=1 // pred_fallthru
      _
    // Predicated region
    $region62: #{_lambda_.5} parent=1 // pred_check
      _
    $region63: #{_lambda_.5} parent=1 // pred_check_branch
      %610 = sbr.rel (0) target = $region65
    $region64: #{_lambda_.5} parent=1 // pred_region
      _
    $region65: #{_lambda_.5} parent=1 // pred_fallthru
      _
    // Predicated region
    $region66: #{_lambda_.5} parent=1 // pred_check
      _
    $region67: #{_lambda_.5} parent=1 // pred_check_branch
      %612 = sbr.rel (0) target = $region69
    $region68: #{_lambda_.5} parent=1 // pred_region
      _
    $region69: #{_lambda_.5} parent=1 // pred_fallthru
      _
    // Predicated region
    $region70: #{_lambda_.5} parent=1 // pred_check
      _
    $region71: #{_lambda_.5} parent=1 // pred_check_branch
      %614 = sbr.rel (0) target = $region73
    $region72: #{_lambda_.5} parent=1 // pred_region
      _
    $region73: #{_lambda_.5} parent=1 // pred_fallthru
      _
    %615 = vsyncpa [#allocation3], 1
    %616 = vsyncpa [#allocation5], 1
    %617 = vsyncpa [#allocation8], 1
    %618 = vsyncpa [#allocation11], 1

// kernel: _lambda_.8
$region0: #{_lambda_.8}
  #allocation0 [shape = 'u32[]', space=smem, size = 0x4, offset = 0x4, fixed_abs, tag = 'smem constant byte address 0x4 - core index']
  #allocation1 [shape = 'u32[72,128]{1,0:T(1,128)}', space=vmem, size = 0x9000, scoped, tag = 'internal scratch']
  %s0 = inlined_call_operand.vmem [shape: f32[1,128], index: 0, kind: input, shape index: {}]
  %s1 = inlined_call_operand.vmem [shape: f32[64,128], index: 1, kind: input, shape index: {}]
  %s2 = inlined_call_operand.hbm [shape: f32[32,1], index: 2, kind: input, shape index: {}]
  %s3 = inlined_call_operand.hbm [shape: f32[32,1], index: 3, kind: input, shape index: {}]
  %s4 = inlined_call_operand.hbm [shape: f32[64,96], index: 4, kind: input, shape index: {}]
  %s5 = inlined_call_operand.hbm [shape: f32[64,1], index: 5, kind: input, shape index: {}]
  %s6 = inlined_call_operand.vmem [shape: f32[65,32], index: 6, kind: input, shape index: {}]
  %s7 = inlined_call_operand.hbm [shape: f32[65,1], index: 7, kind: input, shape index: {}]
  %s8 = inlined_call_operand.hbm [shape: f32[1,128], index: 8, kind: output, shape index: {0}]
  %s9 = inlined_call_operand.vmem [shape: f32[64,128], index: 9, kind: output, shape index: {1}]
  %10 = xla_tuple %s8, %s9
  %s11 = sld [smem:[#allocation0]]
  $region70: #{_lambda_.8} parent=0
    _
  %s13 = ssub.s32 1, %s11
  %s14 = scalar_select 0, %s13, %s11
  $region1: #{_lambda_.8} parent=0
    #allocation2 [shape = 'u8[16384]{0}', space=vmem, size = 0x4000, scoped, tag = 'input window, operand 2, single buffered']
    #allocation3 [shape = 's32[1]{0}', space=sflag, size = 0x4, scoped, tag = 'scoped memory for _lambda_.8']
    #allocation4 [shape = 's32[1]{0}', space=sflag, size = 0x4, scoped, tag = 'scoped memory for _lambda_.8']
    #allocation5 [shape = 'u8[16384]{0}', space=vmem, size = 0x4000, scoped, tag = 'input window, operand 3, single buffered']
    #allocation6 [shape = 's32[1]{0}', space=sflag, size = 0x4, scoped, tag = 'scoped memory for _lambda_.8']
    #allocation7 [shape = 'u8[32768]{0}', space=vmem, size = 0x8000, scoped, tag = 'input window, operand 4, single buffered']
    #allocation8 [shape = 'u8[32768]{0}', space=vmem, size = 0x8000, scoped, tag = 'input window, operand 5, single buffered']
    #allocation9 [shape = 's32[1]{0}', space=sflag, size = 0x4, scoped, tag = 'scoped memory for _lambda_.8']
    #allocation10 [shape = 'u8[36864]{0}', space=vmem, size = 0x9000, scoped, tag = 'input window, operand 7, single buffered']
    #allocation11 [shape = 'u8[512]{0}', space=vmem, size = 0x400, scoped, tag = 'output window, operand 0, single buffered']
    %15 = vsyncpa [#allocation3], 0
    %16 = vsyncpa [#allocation6], 0
    %17 = vsyncpa [#allocation9], 0
    %18 = vsyncpa [#allocation4], 0
    // Predicated region
    $region2: #{_lambda_.8} parent=1 // pred_check
      _
    $region3: #{_lambda_.8} parent=1 // pred_check_branch
      %20 = sbr.rel (0) target = $region5
    $region4: #{_lambda_.8} parent=1 // pred_region
      _
    $region5: #{_lambda_.8} parent=1 // pred_fallthru
      _
    // Predicated region
    $region6: #{_lambda_.8} parent=1 // pred_check
      _
    $region7: #{_lambda_.8} parent=1 // pred_check_branch
      %22 = sbr.rel (0) target = $region9
    $region8: #{_lambda_.8} parent=1 // pred_region
      _
    $region9: #{_lambda_.8} parent=1 // pred_fallthru
      _
    // Predicated region
    $region10: #{_lambda_.8} parent=1 // pred_check
      _
    $region11: #{_lambda_.8} parent=1 // pred_check_branch
      %24 = sbr.rel (0) target = $region13
    $region12: #{_lambda_.8} parent=1 // pred_region
      %26 = vsyncadd [#allocation3], 0
      %s27 = sshll.u32 %s2, 4
      %s28 = int_to_ptr.hbm [resolvable:$true] %s27
      %s29 = sshll.u32 [#allocation2], 4
      %s30 = int_to_ptr.vmem [resolvable:$true] %s29
      %35 = dma.hbm_to_vmem [thread:$0]  %s28, 512, %s30, [#allocation3], 128, 128, 8
    $region13: #{_lambda_.8} parent=1 // pred_fallthru
      _
    // Predicated region
    $region14: #{_lambda_.8} parent=1 // pred_check
      _
    $region15: #{_lambda_.8} parent=1 // pred_check_branch
      %37 = sbr.rel (0) target = $region17
    $region16: #{_lambda_.8} parent=1 // pred_region
      %39 = vsyncadd [#allocation6], 0
      %s40 = sshll.u32 %s3, 4
      %s41 = int_to_ptr.hbm [resolvable:$true] %s40
      %s42 = sshll.u32 [#allocation5], 4
      %s43 = int_to_ptr.vmem [resolvable:$true] %s42
      %48 = dma.hbm_to_vmem [thread:$0]  %s41, 512, %s43, [#allocation6], 128, 128, 8
    $region17: #{_lambda_.8} parent=1 // pred_fallthru
      _
    // Predicated region
    $region18: #{_lambda_.8} parent=1 // pred_check
      _
    $region19: #{_lambda_.8} parent=1 // pred_check_branch
      %50 = sbr.rel (0) target = $region21
    $region20: #{_lambda_.8} parent=1 // pred_region
      %52 = vsyncadd [#allocation6], 0
      %s53 = sshll.u32 %s4, 4
      %s54 = int_to_ptr.hbm [resolvable:$true] %s53
      %s55 = sshll.u32 [#allocation7], 4
      %s56 = int_to_ptr.vmem [resolvable:$true] %s55
      %61 = dma.hbm_to_vmem [thread:$0]  %s54, 1024, %s56, [#allocation6], 128, 128, 8
    $region21: #{_lambda_.8} parent=1 // pred_fallthru
      _
    // Predicated region
    $region22: #{_lambda_.8} parent=1 // pred_check
      _
    $region23: #{_lambda_.8} parent=1 // pred_check_branch
      %63 = sbr.rel (0) target = $region25
    $region24: #{_lambda_.8} parent=1 // pred_region
      %65 = vsyncadd [#allocation9], 0
      %s66 = sshll.u32 %s5, 4
      %s67 = int_to_ptr.hbm [resolvable:$true] %s66
      %s68 = sshll.u32 [#allocation8], 4
      %s69 = int_to_ptr.vmem [resolvable:$true] %s68
      %74 = dma.hbm_to_vmem [thread:$0]  %s67, 1024, %s69, [#allocation9], 128, 128, 8
    $region25: #{_lambda_.8} parent=1 // pred_fallthru
      _
    // Predicated region
    $region26: #{_lambda_.8} parent=1 // pred_check
      _
    $region27: #{_lambda_.8} parent=1 // pred_check_branch
      %76 = sbr.rel (0) target = $region29
    $region28: #{_lambda_.8} parent=1 // pred_region
      _
    $region29: #{_lambda_.8} parent=1 // pred_fallthru
      _
    // Predicated region
    $region30: #{_lambda_.8} parent=1 // pred_check
      _
    $region31: #{_lambda_.8} parent=1 // pred_check_branch
      %78 = sbr.rel (0) target = $region33
    $region32: #{_lambda_.8} parent=1 // pred_region
      %80 = vsyncadd [#allocation9], 0
      %s81 = sshll.u32 %s7, 4
      %s82 = int_to_ptr.hbm [resolvable:$true] %s81
      %s83 = sshll.u32 [#allocation10], 4
      %s84 = int_to_ptr.vmem [resolvable:$true] %s83
      %89 = dma.hbm_to_vmem [thread:$0]  %s82, 1152, %s84, [#allocation9], 128, 128, 8
    $region33: #{_lambda_.8} parent=1 // pred_fallthru
      _
    // Predicated region
    $region34: #{_lambda_.8} parent=1 // pred_check
      _
    $region35: #{_lambda_.8} parent=1 // pred_check_branch
      %91 = sbr.rel (0) target = $region37
    $region36: #{_lambda_.8} parent=1 // pred_region
      %93 = dma.done [#allocation3], 512
    $region37: #{_lambda_.8} parent=1 // pred_fallthru
      _
    // Predicated region
    $region38: #{_lambda_.8} parent=1 // pred_check
      _
    $region39: #{_lambda_.8} parent=1 // pred_check_branch
      %95 = sbr.rel (0) target = $region41
    $region40: #{_lambda_.8} parent=1 // pred_region
      %97 = dma.done [#allocation6], 512
    $region41: #{_lambda_.8} parent=1 // pred_fallthru
      _
    // Predicated region
    $region42: #{_lambda_.8} parent=1 // pred_check
      _
    $region43: #{_lambda_.8} parent=1 // pred_check_branch
      %99 = sbr.rel (0) target = $region45
    $region44: #{_lambda_.8} parent=1 // pred_region
      %101 = dma.done [#allocation6], 1024
    $region45: #{_lambda_.8} parent=1 // pred_fallthru
      _
    // Predicated region
    $region46: #{_lambda_.8} parent=1 // pred_check
      _
    $region47: #{_lambda_.8} parent=1 // pred_check_branch
      %103 = sbr.rel (0) target = $region49
    $region48: #{_lambda_.8} parent=1 // pred_region
      %105 = dma.done [#allocation9], 1024
    $region49: #{_lambda_.8} parent=1 // pred_fallthru
      _
    // Predicated region
    $region50: #{_lambda_.8} parent=1 // pred_check
      _
    $region51: #{_lambda_.8} parent=1 // pred_check_branch
      %107 = sbr.rel (0) target = $region53
    $region52: #{_lambda_.8} parent=1 // pred_region
      %109 = dma.done [#allocation9], 1152
    $region53: #{_lambda_.8} parent=1 // pred_fallthru
      _
    %v110 = vld [vmem:[%s0] sm:$0x1]
    %v111 = vld [vmem:[#allocation2] sm:$0xff]
    %v112 = vld [vmem:[#allocation2 + $0x8] sm:$0xff]
    %v113 = vld [vmem:[#allocation2 + $0x10] sm:$0xff]
    %v114 = vld [vmem:[#allocation2 + $0x18] sm:$0xff]
    %v115 = vld [vmem:[#allocation5] sm:$0xff]
    %v116 = vld [vmem:[#allocation5 + $0x8] sm:$0xff]
    %v117 = vld [vmem:[#allocation5 + $0x10] sm:$0xff]
    %v118 = vld [vmem:[#allocation5 + $0x18] sm:$0xff]
    %120 = vset.pattern.permute.xlu0 0
    %121 = vperm.xlu0 %120, %v115
    %v122 = vpop.permute.xlu0 %121
    %125 = vset.pattern.permute.xlu0 0
    %126 = vperm.xlu0 %125, %v116
    %v127 = vpop.permute.xlu0 %126
    %130 = vset.pattern.permute.xlu0 0
    %131 = vperm.xlu0 %130, %v117
    %v132 = vpop.permute.xlu0 %131
    %135 = vset.pattern.permute.xlu0 0
    %136 = vperm.xlu0 %135, %v118
    %v137 = vpop.permute.xlu0 %136
    %vm139 = vcmask 7168
    %v141 = vsel %vm139, %v111, 0
    %v144 = vsel %vm139, %v112, 0
    %v147 = vsel %vm139, %v113, 0
    %v150 = vsel %vm139, %v114, 0
    %vm152 = vcmask 1040384
    %v154 = vsel %vm152, %v110, 0
    %156 = vmatpush.msra.mxu0 0.0
    %157 = vmatpush.msra.mxu0 0.0
    %158 = vmatpush.msra.mxu0 0.0
    %159 = vmatpush.msra.mxu0 0.0
    %160 = vmatpush.msra.mxu0 0.0
    %161 = vmatpush.msra.mxu0 0.0
    %162 = vmatpush.msra.mxu0 0.0
    %163 = vmatpush.msra.mxu0 0.0
    %164 = vmatpush.msra.mxu0 0.0
    %165 = vmatpush.msra.mxu0 0.0
    %166 = vmatpush.msra.mxu0 0.0
    %167 = vmatpush.msra.mxu0 0.0
    %168 = vmatpush.msra.mxu0 0.0
    %169 = vmatpush.msra.mxu0 0.0
    %170 = vmatpush.msra.mxu0 0.0
    %171 = vmatpush.msra.mxu0 %v154
    %172 = vmatmul.f32.gmra.mxu0 %v141
    %v173 = vpop.f32.mrf.mxu0
    %v174 = vadd.f32 %v122, %v173
    %175 = vmatmul.f32.gmra.mxu0 %v144
    %v176 = vpop.f32.mrf.mxu0
    %v177 = vadd.f32 %v127, %v176
    %178 = vmatmul.f32.gmra.mxu0 %v147
    %v179 = vpop.f32.mrf.mxu0
    %v180 = vadd.f32 %v132, %v179
    %181 = vmatmul.f32.gmra.mxu0 %v150
    %v182 = vpop.f32.mrf.mxu0
    %v183 = vadd.f32 %v137, %v182
    %184 = vdwg.mxu0
    %v185 = vlaneseq
    %v186 = vand.u32 %v185, 127
    %vm187 = vcmp.lt.s32.totalorder %v186, 0
    %v188 = vsub.s32 0, %v186
    %v189 = vsel %vm187, %v188, %v186
    %v190 = vshrl.u32 %v189, 6
    %v191 = vand.u32 %v189, 63
    %v192 = vsub.s32 0, %v191
    %v193 = vsel %vm187, %v192, %v191
    %vm194 = vcmp.ne.s32.totalorder %v193, 0
    %vm195 = vcmp.lt.s32.totalorder %v193, 0
    %vm196 = vmand %vm195, %vm194
    %v197 = vadd.s32 %v193, 64
    %v198 = vsel %vm196, %v197, %v193
    %199 = vrot.lane.b32.xlu0 %v174, 16
    %v200 = vpop.permute.xlu0 %199
    %201 = vrot.lane.b32.xlu0 %v177, 16
    %v202 = vpop.permute.xlu0 %201
    %203 = vrot.lane.b32.xlu0 %v180, 16
    %v204 = vpop.permute.xlu0 %203
    %205 = vrot.lane.b32.xlu0 %v183, 16
    %v206 = vpop.permute.xlu0 %205
    %vm207 = vcmp.ge.s32.totalorder %v198, 16
    %v208 = vsel %vm207, %v200, 0.0
    %v209 = vsel %vm207, %v202, 0.0
    %v210 = vsel %vm207, %v204, 0.0
    %v211 = vsel %vm207, %v206, 0.0
    %212 = vrot.lane.b32.xlu0 %v174, 8
    %v213 = vpop.permute.xlu0 %212
    %214 = vrot.lane.b32.xlu0 %v177, 8
    %v215 = vpop.permute.xlu0 %214
    %216 = vrot.lane.b32.xlu0 %v180, 8
    %v217 = vpop.permute.xlu0 %216
    %218 = vrot.lane.b32.xlu0 %v183, 8
    %v219 = vpop.permute.xlu0 %218
    %vm220 = vcmp.ge.s32.totalorder %v198, 8
    %v221 = vsel %vm220, %v213, 0.0
    %v222 = vsel %vm220, %v215, 0.0
    %v223 = vsel %vm220, %v217, 0.0
    %v224 = vsel %vm220, %v219, 0.0
    %v225 = vld [vmem:[#allocation7] sm:$0xff]
    %v226 = vld [vmem:[#allocation7 + $0x8] sm:$0xff]
    %v227 = vld [vmem:[#allocation7 + $0x10] sm:$0xff]
    %v228 = vld [vmem:[#allocation7 + $0x18] sm:$0xff]
    %v229 = vld [vmem:[#allocation7 + $0x20] sm:$0xff]
    %v230 = vld [vmem:[#allocation7 + $0x28] sm:$0xff]
    %v231 = vld [vmem:[#allocation7 + $0x30] sm:$0xff]
    %v232 = vld [vmem:[#allocation7 + $0x38] sm:$0xff]
    %v233 = vld [vmem:[#allocation8] sm:$0xff]
    %v234 = vld [vmem:[#allocation8 + $0x8] sm:$0xff]
    %v235 = vld [vmem:[#allocation8 + $0x10] sm:$0xff]
    %v236 = vld [vmem:[#allocation8 + $0x18] sm:$0xff]
    %v237 = vld [vmem:[#allocation8 + $0x20] sm:$0xff]
    %v238 = vld [vmem:[#allocation8 + $0x28] sm:$0xff]
    %v239 = vld [vmem:[#allocation8 + $0x30] sm:$0xff]
    %v240 = vld [vmem:[#allocation8 + $0x38] sm:$0xff]
    %242 = vset.pattern.permute.xlu0 0
    %243 = vperm.xlu0 %242, %v233
    %v244 = vpop.permute.xlu0 %243
    %247 = vset.pattern.permute.xlu0 0
    %248 = vperm.xlu0 %247, %v234
    %v249 = vpop.permute.xlu0 %248
    %252 = vset.pattern.permute.xlu0 0
    %253 = vperm.xlu0 %252, %v235
    %v254 = vpop.permute.xlu0 %253
    %257 = vset.pattern.permute.xlu0 0
    %258 = vperm.xlu0 %257, %v236
    %v259 = vpop.permute.xlu0 %258
    %262 = vset.pattern.permute.xlu0 0
    %263 = vperm.xlu0 %262, %v237
    %v264 = vpop.permute.xlu0 %263
    %267 = vset.pattern.permute.xlu0 0
    %268 = vperm.xlu0 %267, %v238
    %v269 = vpop.permute.xlu0 %268
    %272 = vset.pattern.permute.xlu0 0
    %273 = vperm.xlu0 %272, %v239
    %v274 = vpop.permute.xlu0 %273
    %277 = vset.pattern.permute.xlu0 0
    %278 = vperm.xlu0 %277, %v240
    %v279 = vpop.permute.xlu0 %278
    %vm281 = vcmask 785408
    %v283 = vsel %vm281, %v225, 0
    %v286 = vsel %vm281, %v226, 0
    %v289 = vsel %vm281, %v227, 0
    %v292 = vsel %vm281, %v228, 0
    %v295 = vsel %vm281, %v229, 0
    %v298 = vsel %vm281, %v230, 0
    %v301 = vsel %vm281, %v231, 0
    %v304 = vsel %vm281, %v232, 0
    %306 = vmatpush.msra.mxu0 0.0
    %307 = vmatpush.msra.mxu0 0.0
    %308 = vmatpush.msra.mxu0 0.0
    %309 = vmatpush.msra.mxu0 0.0
    %310 = vmatpush.msra.mxu0 %v183
    %311 = vmatpush.msra.mxu0 %v180
    %312 = vmatpush.msra.mxu0 %v177
    %313 = vmatpush.msra.mxu0 %v174
    %314 = vmatpush.msra.mxu0 %v224
    %315 = vmatpush.msra.mxu0 %v223
    %316 = vmatpush.msra.mxu0 %v222
    %317 = vmatpush.msra.mxu0 %v221
    %318 = vmatpush.msra.mxu0 %v211
    %319 = vmatpush.msra.mxu0 %v210
    %320 = vmatpush.msra.mxu0 %v209
    %321 = vmatpush.msra.mxu0 %v208
    %322 = vmatmul.f32.gmra.mxu0 %v283
    %v323 = vpop.f32.mrf.mxu0
    %v324 = vadd.f32 %v244, %v323
    %325 = vmatmul.f32.gmra.mxu0 %v286
    %v326 = vpop.f32.mrf.mxu0
    %v327 = vadd.f32 %v249, %v326
    %328 = vmatmul.f32.gmra.mxu0 %v289
    %v329 = vpop.f32.mrf.mxu0
    %v330 = vadd.f32 %v254, %v329
    %331 = vmatmul.f32.gmra.mxu0 %v292
    %v332 = vpop.f32.mrf.mxu0
    %v333 = vadd.f32 %v259, %v332
    %334 = vmatmul.f32.gmra.mxu0 %v295
    %v335 = vpop.f32.mrf.mxu0
    %v336 = vadd.f32 %v264, %v335
    %337 = vmatmul.f32.gmra.mxu0 %v298
    %v338 = vpop.f32.mrf.mxu0
    %v339 = vadd.f32 %v269, %v338
    %340 = vmatmul.f32.gmra.mxu0 %v301
    %v341 = vpop.f32.mrf.mxu0
    %v342 = vadd.f32 %v274, %v341
    %343 = vmatmul.f32.gmra.mxu0 %v304
    %v344 = vpop.f32.mrf.mxu0
    %v345 = vadd.f32 %v279, %v344
    %346 = vdwg.mxu0
    %v347 = vtanh.pop %v324
    %v348 = vtanh.pop %v327
    %v349 = vtanh.pop %v330
    %v350 = vtanh.pop %v333
    %v351 = vxor.u32 %v336, 2147483648
    %v352 = vxor.u32 %v339, 2147483648
    %v353 = vxor.u32 %v342, 2147483648
    %v354 = vxor.u32 %v345, 2147483648
    %v355 = vmul.f32 %v351, 1.442695
    %v356 = vpow.pop %v355
    %v357 = vmul.f32 %v352, 1.442695
    %v358 = vpow.pop %v357
    %v359 = vmul.f32 %v353, 1.442695
    %v360 = vpow.pop %v359
    %v361 = vmul.f32 %v354, 1.442695
    %v362 = vpow.pop %v361
    %v363 = vadd.f32 %v356, 1.0
    %v364 = vadd.f32 %v358, 1.0
    %v365 = vadd.f32 %v360, 1.0
    %v366 = vadd.f32 %v362, 1.0
    %v367 = vrcp.pop %v363
    %v368 = vmul.f32 %v363, %v367
    %v369 = vsub.f32 1.0, %v368
    %v370 = vmul.f32 %v367, %v369
    %v371 = vadd.f32 %v367, %v370
    %vm372 = vweird.f32 %v363
    %vm373 = vweird.f32 %v367
    %vm374 = vmor %vm372, %vm373
    %v375 = vsel %vm374, %v367, %v371
    %v376 = vand.u32 2147483647, %v363
    %vm377 = vcmp.eq.f32.partialorder %v376, 8.507059e+37
    %v378 = vand.u32 %v363, 2147483648
    %v379 = vor.u32 1.1754944e-38, %v378
    %v380 = vsel %vm377, %v379, %v375
    %v381 = vmul.f32 1.0, %v380
    %v382 = vrcp.pop %v364
    %v383 = vmul.f32 %v364, %v382
    %v384 = vsub.f32 1.0, %v383
    %v385 = vmul.f32 %v382, %v384
    %v386 = vadd.f32 %v382, %v385
    %vm387 = vweird.f32 %v364
    %vm388 = vweird.f32 %v382
    %vm389 = vmor %vm387, %vm388
    %v390 = vsel %vm389, %v382, %v386
    %v391 = vand.u32 2147483647, %v364
    %vm392 = vcmp.eq.f32.partialorder %v391, 8.507059e+37
    %v393 = vand.u32 %v364, 2147483648
    %v394 = vor.u32 1.1754944e-38, %v393
    %v395 = vsel %vm392, %v394, %v390
    %v396 = vmul.f32 1.0, %v395
    %v397 = vrcp.pop %v365
    %v398 = vmul.f32 %v365, %v397
    %v399 = vsub.f32 1.0, %v398
    %v400 = vmul.f32 %v397, %v399
    %v401 = vadd.f32 %v397, %v400
    %vm402 = vweird.f32 %v365
    %vm403 = vweird.f32 %v397
    %vm404 = vmor %vm402, %vm403
    %v405 = vsel %vm404, %v397, %v401
    %v406 = vand.u32 2147483647, %v365
    %vm407 = vcmp.eq.f32.partialorder %v406, 8.507059e+37
    %v408 = vand.u32 %v365, 2147483648
    %v409 = vor.u32 1.1754944e-38, %v408
    %v410 = vsel %vm407, %v409, %v405
    %v411 = vmul.f32 1.0, %v410
    %v412 = vrcp.pop %v366
    %v413 = vmul.f32 %v366, %v412
    %v414 = vsub.f32 1.0, %v413
    %v415 = vmul.f32 %v412, %v414
    %v416 = vadd.f32 %v412, %v415
    %vm417 = vweird.f32 %v366
    %vm418 = vweird.f32 %v412
    %vm419 = vmor %vm417, %vm418
    %v420 = vsel %vm419, %v412, %v416
    %v421 = vand.u32 2147483647, %v366
    %vm422 = vcmp.eq.f32.partialorder %v421, 8.507059e+37
    %v423 = vand.u32 %v366, 2147483648
    %v424 = vor.u32 1.1754944e-38, %v423
    %v425 = vsel %vm422, %v424, %v420
    %v426 = vmul.f32 1.0, %v425
    %v427 = vmul.f32 %v347, %v381
    %v428 = vmul.f32 %v348, %v396
    %v429 = vmul.f32 %v349, %v411
    %v430 = vmul.f32 %v350, %v426
    %v431 = vld [vmem:[%s6] sm:$0xff]
    %v432 = vld [vmem:[%s6 + $0x8] sm:$0xff]
    %v433 = vld [vmem:[%s6 + $0x10] sm:$0xff]
    %v434 = vld [vmem:[%s6 + $0x18] sm:$0xff]
    %v435 = vld [vmem:[%s6 + $0x20] sm:$0xff]
    %v436 = vld [vmem:[%s6 + $0x28] sm:$0xff]
    %v437 = vld [vmem:[%s6 + $0x30] sm:$0xff]
    %v438 = vld [vmem:[%s6 + $0x38] sm:$0xff]
    %v439 = vld [vmem:[%s6 + $0x40] sm:$0x1]
    %v440 = vld [vmem:[#allocation10] sm:$0xff]
    %v441 = vld [vmem:[#allocation10 + $0x8] sm:$0xff]
    %v442 = vld [vmem:[#allocation10 + $0x10] sm:$0xff]
    %v443 = vld [vmem:[#allocation10 + $0x18] sm:$0xff]
    %v444 = vld [vmem:[#allocation10 + $0x20] sm:$0xff]
    %v445 = vld [vmem:[#allocation10 + $0x28] sm:$0xff]
    %v446 = vld [vmem:[#allocation10 + $0x30] sm:$0xff]
    %v447 = vld [vmem:[#allocation10 + $0x38] sm:$0xff]
    %v448 = vld [vmem:[#allocation10 + $0x40] sm:$0x1]
    %450 = vset.pattern.permute.xlu0 0
    %451 = vperm.xlu0 %450, %v440
    %v452 = vpop.permute.xlu0 %451
    %455 = vset.pattern.permute.xlu0 0
    %456 = vperm.xlu0 %455, %v441
    %v457 = vpop.permute.xlu0 %456
    %460 = vset.pattern.permute.xlu0 0
    %461 = vperm.xlu0 %460, %v442
    %v462 = vpop.permute.xlu0 %461
    %465 = vset.pattern.permute.xlu0 0
    %466 = vperm.xlu0 %465, %v443
    %v467 = vpop.permute.xlu0 %466
    %470 = vset.pattern.permute.xlu0 0
    %471 = vperm.xlu0 %470, %v444
    %v472 = vpop.permute.xlu0 %471
    %475 = vset.pattern.permute.xlu0 0
    %476 = vperm.xlu0 %475, %v445
    %v477 = vpop.permute.xlu0 %476
    %480 = vset.pattern.permute.xlu0 0
    %481 = vperm.xlu0 %480, %v446
    %v482 = vpop.permute.xlu0 %481
    %485 = vset.pattern.permute.xlu0 0
    %486 = vperm.xlu0 %485, %v447
    %v487 = vpop.permute.xlu0 %486
    %490 = vset.pattern.permute.xlu0 0
    %491 = vperm.xlu0 %490, %v448
    %v492 = vpop.permute.xlu0 %491
    %vm494 = vcmask 261120
    %v496 = vsel %vm494, %v431, 0
    %v499 = vsel %vm494, %v432, 0
    %v502 = vsel %vm494, %v433, 0
    %v505 = vsel %vm494, %v434, 0
    %v508 = vsel %vm494, %v435, 0
    %v511 = vsel %vm494, %v436, 0
    %v514 = vsel %vm494, %v437, 0
    %v517 = vsel %vm494, %v438, 0
    %v520 = vsel %vm494, %v439, 0
    %522 = vmatpush.msra.mxu0 0.0
    %523 = vmatpush.msra.mxu0 0.0
    %524 = vmatpush.msra.mxu0 0.0
    %525 = vmatpush.msra.mxu0 0.0
    %526 = vmatpush.msra.mxu0 0.0
    %527 = vmatpush.msra.mxu0 0.0
    %528 = vmatpush.msra.mxu0 0.0
    %529 = vmatpush.msra.mxu0 0.0
    %530 = vmatpush.msra.mxu0 0.0
    %531 = vmatpush.msra.mxu0 0.0
    %532 = vmatpush.msra.mxu0 0.0
    %533 = vmatpush.msra.mxu0 0.0
    %534 = vmatpush.msra.mxu0 %v430
    %535 = vmatpush.msra.mxu0 %v429
    %536 = vmatpush.msra.mxu0 %v428
    %537 = vmatpush.msra.mxu0 %v427
    %538 = vmatmul.f32.gmra.mxu0 %v496
    %v539 = vpop.f32.mrf.mxu0
    %v540 = vadd.f32 %v452, %v539
    %541 = vmatmul.f32.gmra.mxu0 %v499
    %v542 = vpop.f32.mrf.mxu0
    %v543 = vadd.f32 %v457, %v542
    %544 = vmatmul.f32.gmra.mxu0 %v502
    %v545 = vpop.f32.mrf.mxu0
    %v546 = vadd.f32 %v462, %v545
    %547 = vmatmul.f32.gmra.mxu0 %v505
    %v548 = vpop.f32.mrf.mxu0
    %v549 = vadd.f32 %v467, %v548
    %550 = vmatmul.f32.gmra.mxu0 %v508
    %v551 = vpop.f32.mrf.mxu0
    %v552 = vadd.f32 %v472, %v551
    %553 = vmatmul.f32.gmra.mxu0 %v511
    %v554 = vpop.f32.mrf.mxu0
    %v555 = vadd.f32 %v477, %v554
    %556 = vmatmul.f32.gmra.mxu0 %v514
    %v557 = vpop.f32.mrf.mxu0
    %v558 = vadd.f32 %v482, %v557
    %559 = vmatmul.f32.gmra.mxu0 %v517
    %v560 = vpop.f32.mrf.mxu0
    %v561 = vadd.f32 %v487, %v560
    %562 = vmatmul.f32.gmra.mxu0 %v520
    %v563 = vpop.f32.mrf.mxu0
    %v564 = vadd.f32 %v492, %v563
    %565 = vdwg.mxu0
    %v566 = vld [vmem:[%s1] sm:$0xff]
    %v567 = vld [vmem:[%s1 + $0x8] sm:$0xff]
    %v568 = vld [vmem:[%s1 + $0x10] sm:$0xff]
    %v569 = vld [vmem:[%s1 + $0x18] sm:$0xff]
    %v570 = vld [vmem:[%s1 + $0x20] sm:$0xff]
    %v571 = vld [vmem:[%s1 + $0x28] sm:$0xff]
    %v572 = vld [vmem:[%s1 + $0x30] sm:$0xff]
    %v573 = vld [vmem:[%s1 + $0x38] sm:$0xff]
    %v574 = vadd.f32 %v566, %v540
    %v575 = vadd.f32 %v567, %v543
    %v576 = vadd.f32 %v568, %v546
    %v577 = vadd.f32 %v569, %v549
    %v578 = vadd.f32 %v570, %v552
    %v579 = vadd.f32 %v571, %v555
    %v580 = vadd.f32 %v572, %v558
    %v581 = vadd.f32 %v573, %v561
    %582 = vst [vmem:[%s9] sm:$0xff] %v574
    %583 = vst [vmem:[%s9 + $0x8] sm:$0xff] %v575
    %584 = vst [vmem:[%s9 + $0x10] sm:$0xff] %v576
    %585 = vst [vmem:[%s9 + $0x18] sm:$0xff] %v577
    %586 = vst [vmem:[%s9 + $0x20] sm:$0xff] %v578
    %587 = vst [vmem:[%s9 + $0x28] sm:$0xff] %v579
    %588 = vst [vmem:[%s9 + $0x30] sm:$0xff] %v580
    %589 = vst [vmem:[%s9 + $0x38] sm:$0xff] %v581
    %v590 = vadd.f32 %v564, %v110
    %591 = vst [vmem:[#allocation11] sm:$0x1] %v590
    // Predicated region
    $region54: #{_lambda_.8} parent=1 // pred_check
      _
    $region55: #{_lambda_.8} parent=1 // pred_check_branch
      %593 = sbr.rel (0) target = $region57
    $region56: #{_lambda_.8} parent=1 // pred_region
      %595 = vsyncadd [#allocation4], 0
      %s597 = sshll.u32 [#allocation11], 4
      %s598 = int_to_ptr.vmem [resolvable:$true] %s597
      %s599 = sshll.u32 %s8, 4
      %s600 = int_to_ptr.hbm [resolvable:$true] %s599
      %602 = dma.vmem_to_hbm [thread:$0]  %s598, 16, %s600, [#allocation4]
    $region57: #{_lambda_.8} parent=1 // pred_fallthru
      _
    // Predicated region
    $region58: #{_lambda_.8} parent=1 // pred_check
      _
    $region59: #{_lambda_.8} parent=1 // pred_check_branch
      %604 = sbr.rel (0) target = $region61
    $region60: #{_lambda_.8} parent=1 // pred_region
      _
    $region61: #{_lambda_.8} parent=1 // pred_fallthru
      _
    // Predicated region
    $region62: #{_lambda_.8} parent=1 // pred_check
      _
    $region63: #{_lambda_.8} parent=1 // pred_check_branch
      %606 = sbr.rel (0) target = $region65
    $region64: #{_lambda_.8} parent=1 // pred_region
      %608 = dma.done [#allocation4], 16
    $region65: #{_lambda_.8} parent=1 // pred_fallthru
      _
    // Predicated region
    $region66: #{_lambda_.8} parent=1 // pred_check
      _
    $region67: #{_lambda_.8} parent=1 // pred_check_branch
      %610 = sbr.rel (0) target = $region69
    $region68: #{_lambda_.8} parent=1 // pred_region
      _
    $region69: #{_lambda_.8} parent=1 // pred_fallthru
      _
    %611 = vsyncpa [#allocation3], 1
    %612 = vsyncpa [#allocation6], 1
    %613 = vsyncpa [#allocation9], 1
    %614 = vsyncpa [#allocation4], 1

// kernel: _lambda_.7
$region0: #{_lambda_.7}
  #allocation0 [shape = 'u32[]', space=smem, size = 0x4, offset = 0x4, fixed_abs, tag = 'smem constant byte address 0x4 - core index']
  #allocation1 [shape = 'u32[72,128]{1,0:T(1,128)}', space=vmem, size = 0x9000, scoped, tag = 'internal scratch']
  %s0 = inlined_call_operand.vmem [shape: f32[1,128], index: 0, kind: input, shape index: {}]
  %s1 = inlined_call_operand.vmem [shape: f32[64,128], index: 1, kind: input, shape index: {}]
  %s2 = inlined_call_operand.hbm [shape: f32[32,1], index: 2, kind: input, shape index: {}]
  %s3 = inlined_call_operand.hbm [shape: f32[32,1], index: 3, kind: input, shape index: {}]
  %s4 = inlined_call_operand.hbm [shape: f32[64,96], index: 4, kind: input, shape index: {}]
  %s5 = inlined_call_operand.hbm [shape: f32[64,1], index: 5, kind: input, shape index: {}]
  %s6 = inlined_call_operand.hbm [shape: f32[65,32], index: 6, kind: input, shape index: {}]
  %s7 = inlined_call_operand.hbm [shape: f32[65,1], index: 7, kind: input, shape index: {}]
  %s8 = inlined_call_operand.vmem [shape: f32[1,128], index: 8, kind: output, shape index: {0}]
  %s9 = inlined_call_operand.vmem [shape: f32[64,128], index: 9, kind: output, shape index: {1}]
  %10 = xla_tuple %s8, %s9
  %s11 = sld [smem:[#allocation0]]
  $region74: #{_lambda_.7} parent=0
    _
  %s13 = ssub.s32 1, %s11
  %s14 = scalar_select 0, %s13, %s11
  $region1: #{_lambda_.7} parent=0
    #allocation2 [shape = 'u8[16384]{0}', space=vmem, size = 0x4000, scoped, tag = 'input window, operand 2, single buffered']
    #allocation3 [shape = 's32[1]{0}', space=sflag, size = 0x4, scoped, tag = 'scoped memory for _lambda_.7']
    #allocation4 [shape = 'u8[16384]{0}', space=vmem, size = 0x4000, scoped, tag = 'input window, operand 3, single buffered']
    #allocation5 [shape = 's32[1]{0}', space=sflag, size = 0x4, scoped, tag = 'scoped memory for _lambda_.7']
    #allocation6 [shape = 'u8[32768]{0}', space=vmem, size = 0x8000, scoped, tag = 'input window, operand 4, single buffered']
    #allocation7 [shape = 'u8[32768]{0}', space=vmem, size = 0x8000, scoped, tag = 'input window, operand 5, single buffered']
    #allocation8 [shape = 's32[1]{0}', space=sflag, size = 0x4, scoped, tag = 'scoped memory for _lambda_.7']
    #allocation9 [shape = 'u8[36864]{0}', space=vmem, size = 0x9000, scoped, tag = 'input window, operand 6, single buffered']
    #allocation10 [shape = 'u8[36864]{0}', space=vmem, size = 0x9000, scoped, tag = 'input window, operand 7, single buffered']
    #allocation11 [shape = 's32[1]{0}', space=sflag, size = 0x4, scoped, tag = 'scoped memory for _lambda_.7']
    %15 = vsyncpa [#allocation3], 0
    %16 = vsyncpa [#allocation5], 0
    %17 = vsyncpa [#allocation8], 0
    %18 = vsyncpa [#allocation11], 0
    // Predicated region
    $region2: #{_lambda_.7} parent=1 // pred_check
      _
    $region3: #{_lambda_.7} parent=1 // pred_check_branch
      %20 = sbr.rel (0) target = $region5
    $region4: #{_lambda_.7} parent=1 // pred_region
      _
    $region5: #{_lambda_.7} parent=1 // pred_fallthru
      _
    // Predicated region
    $region6: #{_lambda_.7} parent=1 // pred_check
      _
    $region7: #{_lambda_.7} parent=1 // pred_check_branch
      %22 = sbr.rel (0) target = $region9
    $region8: #{_lambda_.7} parent=1 // pred_region
      _
    $region9: #{_lambda_.7} parent=1 // pred_fallthru
      _
    // Predicated region
    $region10: #{_lambda_.7} parent=1 // pred_check
      _
    $region11: #{_lambda_.7} parent=1 // pred_check_branch
      %24 = sbr.rel (0) target = $region13
    $region12: #{_lambda_.7} parent=1 // pred_region
      %26 = vsyncadd [#allocation3], 0
      %s27 = sshll.u32 %s2, 4
      %s28 = int_to_ptr.hbm [resolvable:$true] %s27
      %s29 = sshll.u32 [#allocation2], 4
      %s30 = int_to_ptr.vmem [resolvable:$true] %s29
      %35 = dma.hbm_to_vmem [thread:$0]  %s28, 512, %s30, [#allocation3], 128, 128, 8
    $region13: #{_lambda_.7} parent=1 // pred_fallthru
      _
    // Predicated region
    $region14: #{_lambda_.7} parent=1 // pred_check
      _
    $region15: #{_lambda_.7} parent=1 // pred_check_branch
      %37 = sbr.rel (0) target = $region17
    $region16: #{_lambda_.7} parent=1 // pred_region
      %39 = vsyncadd [#allocation5], 0
      %s40 = sshll.u32 %s3, 4
      %s41 = int_to_ptr.hbm [resolvable:$true] %s40
      %s42 = sshll.u32 [#allocation4], 4
      %s43 = int_to_ptr.vmem [resolvable:$true] %s42
      %48 = dma.hbm_to_vmem [thread:$0]  %s41, 512, %s43, [#allocation5], 128, 128, 8
    $region17: #{_lambda_.7} parent=1 // pred_fallthru
      _
    // Predicated region
    $region18: #{_lambda_.7} parent=1 // pred_check
      _
    $region19: #{_lambda_.7} parent=1 // pred_check_branch
      %50 = sbr.rel (0) target = $region21
    $region20: #{_lambda_.7} parent=1 // pred_region
      %52 = vsyncadd [#allocation5], 0
      %s53 = sshll.u32 %s4, 4
      %s54 = int_to_ptr.hbm [resolvable:$true] %s53
      %s55 = sshll.u32 [#allocation6], 4
      %s56 = int_to_ptr.vmem [resolvable:$true] %s55
      %61 = dma.hbm_to_vmem [thread:$0]  %s54, 1024, %s56, [#allocation5], 128, 128, 8
    $region21: #{_lambda_.7} parent=1 // pred_fallthru
      _
    // Predicated region
    $region22: #{_lambda_.7} parent=1 // pred_check
      _
    $region23: #{_lambda_.7} parent=1 // pred_check_branch
      %63 = sbr.rel (0) target = $region25
    $region24: #{_lambda_.7} parent=1 // pred_region
      %65 = vsyncadd [#allocation8], 0
      %s66 = sshll.u32 %s5, 4
      %s67 = int_to_ptr.hbm [resolvable:$true] %s66
      %s68 = sshll.u32 [#allocation7], 4
      %s69 = int_to_ptr.vmem [resolvable:$true] %s68
      %74 = dma.hbm_to_vmem [thread:$0]  %s67, 1024, %s69, [#allocation8], 128, 128, 8
    $region25: #{_lambda_.7} parent=1 // pred_fallthru
      _
    // Predicated region
    $region26: #{_lambda_.7} parent=1 // pred_check
      _
    $region27: #{_lambda_.7} parent=1 // pred_check_branch
      %76 = sbr.rel (0) target = $region29
    $region28: #{_lambda_.7} parent=1 // pred_region
      %78 = vsyncadd [#allocation8], 0
      %s79 = sshll.u32 %s6, 4
      %s80 = int_to_ptr.hbm [resolvable:$true] %s79
      %s81 = sshll.u32 [#allocation9], 4
      %s82 = int_to_ptr.vmem [resolvable:$true] %s81
      %87 = dma.hbm_to_vmem [thread:$0]  %s80, 1152, %s82, [#allocation8], 128, 128, 8
    $region29: #{_lambda_.7} parent=1 // pred_fallthru
      _
    // Predicated region
    $region30: #{_lambda_.7} parent=1 // pred_check
      _
    $region31: #{_lambda_.7} parent=1 // pred_check_branch
      %89 = sbr.rel (0) target = $region33
    $region32: #{_lambda_.7} parent=1 // pred_region
      %91 = vsyncadd [#allocation11], 0
      %s92 = sshll.u32 %s7, 4
      %s93 = int_to_ptr.hbm [resolvable:$true] %s92
      %s94 = sshll.u32 [#allocation10], 4
      %s95 = int_to_ptr.vmem [resolvable:$true] %s94
      %100 = dma.hbm_to_vmem [thread:$0]  %s93, 1152, %s95, [#allocation11], 128, 128, 8
    $region33: #{_lambda_.7} parent=1 // pred_fallthru
      _
    // Predicated region
    $region34: #{_lambda_.7} parent=1 // pred_check
      _
    $region35: #{_lambda_.7} parent=1 // pred_check_branch
      %102 = sbr.rel (0) target = $region37
    $region36: #{_lambda_.7} parent=1 // pred_region
      %104 = dma.done [#allocation3], 512
    $region37: #{_lambda_.7} parent=1 // pred_fallthru
      _
    // Predicated region
    $region38: #{_lambda_.7} parent=1 // pred_check
      _
    $region39: #{_lambda_.7} parent=1 // pred_check_branch
      %106 = sbr.rel (0) target = $region41
    $region40: #{_lambda_.7} parent=1 // pred_region
      %108 = dma.done [#allocation5], 512
    $region41: #{_lambda_.7} parent=1 // pred_fallthru
      _
    // Predicated region
    $region42: #{_lambda_.7} parent=1 // pred_check
      _
    $region43: #{_lambda_.7} parent=1 // pred_check_branch
      %110 = sbr.rel (0) target = $region45
    $region44: #{_lambda_.7} parent=1 // pred_region
      %112 = dma.done [#allocation5], 1024
    $region45: #{_lambda_.7} parent=1 // pred_fallthru
      _
    // Predicated region
    $region46: #{_lambda_.7} parent=1 // pred_check
      _
    $region47: #{_lambda_.7} parent=1 // pred_check_branch
      %114 = sbr.rel (0) target = $region49
    $region48: #{_lambda_.7} parent=1 // pred_region
      %116 = dma.done [#allocation8], 1024
    $region49: #{_lambda_.7} parent=1 // pred_fallthru
      _
    // Predicated region
    $region50: #{_lambda_.7} parent=1 // pred_check
      _
    $region51: #{_lambda_.7} parent=1 // pred_check_branch
      %118 = sbr.rel (0) target = $region53
    $region52: #{_lambda_.7} parent=1 // pred_region
      %120 = dma.done [#allocation8], 1152
    $region53: #{_lambda_.7} parent=1 // pred_fallthru
      _
    // Predicated region
    $region54: #{_lambda_.7} parent=1 // pred_check
      _
    $region55: #{_lambda_.7} parent=1 // pred_check_branch
      %122 = sbr.rel (0) target = $region57
    $region56: #{_lambda_.7} parent=1 // pred_region
      %124 = dma.done [#allocation11], 1152
    $region57: #{_lambda_.7} parent=1 // pred_fallthru
      _
    %v125 = vld [vmem:[%s0] sm:$0x1]
    %v126 = vld [vmem:[#allocation2] sm:$0xff]
    %v127 = vld [vmem:[#allocation2 + $0x8] sm:$0xff]
    %v128 = vld [vmem:[#allocation2 + $0x10] sm:$0xff]
    %v129 = vld [vmem:[#allocation2 + $0x18] sm:$0xff]
    %v130 = vld [vmem:[#allocation4] sm:$0xff]
    %v131 = vld [vmem:[#allocation4 + $0x8] sm:$0xff]
    %v132 = vld [vmem:[#allocation4 + $0x10] sm:$0xff]
    %v133 = vld [vmem:[#allocation4 + $0x18] sm:$0xff]
    %135 = vset.pattern.permute.xlu0 0
    %136 = vperm.xlu0 %135, %v130
    %v137 = vpop.permute.xlu0 %136
    %140 = vset.pattern.permute.xlu0 0
    %141 = vperm.xlu0 %140, %v131
    %v142 = vpop.permute.xlu0 %141
    %145 = vset.pattern.permute.xlu0 0
    %146 = vperm.xlu0 %145, %v132
    %v147 = vpop.permute.xlu0 %146
    %150 = vset.pattern.permute.xlu0 0
    %151 = vperm.xlu0 %150, %v133
    %v152 = vpop.permute.xlu0 %151
    %vm154 = vcmask 7168
    %v156 = vsel %vm154, %v126, 0
    %v159 = vsel %vm154, %v127, 0
    %v162 = vsel %vm154, %v128, 0
    %v165 = vsel %vm154, %v129, 0
    %vm167 = vcmask 1040384
    %v169 = vsel %vm167, %v125, 0
    %171 = vmatpush.msra.mxu0 0.0
    %172 = vmatpush.msra.mxu0 0.0
    %173 = vmatpush.msra.mxu0 0.0
    %174 = vmatpush.msra.mxu0 0.0
    %175 = vmatpush.msra.mxu0 0.0
    %176 = vmatpush.msra.mxu0 0.0
    %177 = vmatpush.msra.mxu0 0.0
    %178 = vmatpush.msra.mxu0 0.0
    %179 = vmatpush.msra.mxu0 0.0
    %180 = vmatpush.msra.mxu0 0.0
    %181 = vmatpush.msra.mxu0 0.0
    %182 = vmatpush.msra.mxu0 0.0
    %183 = vmatpush.msra.mxu0 0.0
    %184 = vmatpush.msra.mxu0 0.0
    %185 = vmatpush.msra.mxu0 0.0
    %186 = vmatpush.msra.mxu0 %v169
    %187 = vmatmul.f32.gmra.mxu0 %v156
    %v188 = vpop.f32.mrf.mxu0
    %v189 = vadd.f32 %v137, %v188
    %190 = vmatmul.f32.gmra.mxu0 %v159
    %v191 = vpop.f32.mrf.mxu0
    %v192 = vadd.f32 %v142, %v191
    %193 = vmatmul.f32.gmra.mxu0 %v162
    %v194 = vpop.f32.mrf.mxu0
    %v195 = vadd.f32 %v147, %v194
    %196 = vmatmul.f32.gmra.mxu0 %v165
    %v197 = vpop.f32.mrf.mxu0
    %v198 = vadd.f32 %v152, %v197
    %199 = vdwg.mxu0
    %v200 = vlaneseq
    %v201 = vand.u32 %v200, 127
    %vm202 = vcmp.lt.s32.totalorder %v201, 0
    %v203 = vsub.s32 0, %v201
    %v204 = vsel %vm202, %v203, %v201
    %v205 = vshrl.u32 %v204, 6
    %v206 = vand.u32 %v204, 63
    %v207 = vsub.s32 0, %v206
    %v208 = vsel %vm202, %v207, %v206
    %vm209 = vcmp.ne.s32.totalorder %v208, 0
    %vm210 = vcmp.lt.s32.totalorder %v208, 0
    %vm211 = vmand %vm210, %vm209
    %v212 = vadd.s32 %v208, 64
    %v213 = vsel %vm211, %v212, %v208
    %214 = vrot.lane.b32.xlu0 %v189, 8
    %v215 = vpop.permute.xlu0 %214
    %216 = vrot.lane.b32.xlu0 %v192, 8
    %v217 = vpop.permute.xlu0 %216
    %218 = vrot.lane.b32.xlu0 %v195, 8
    %v219 = vpop.permute.xlu0 %218
    %220 = vrot.lane.b32.xlu0 %v198, 8
    %v221 = vpop.permute.xlu0 %220
    %vm222 = vcmp.ge.s32.totalorder %v213, 8
    %v223 = vsel %vm222, %v215, 0.0
    %v224 = vsel %vm222, %v217, 0.0
    %v225 = vsel %vm222, %v219, 0.0
    %v226 = vsel %vm222, %v221, 0.0
    %227 = vrot.lane.b32.xlu0 %v189, 4
    %v228 = vpop.permute.xlu0 %227
    %229 = vrot.lane.b32.xlu0 %v192, 4
    %v230 = vpop.permute.xlu0 %229
    %231 = vrot.lane.b32.xlu0 %v195, 4
    %v232 = vpop.permute.xlu0 %231
    %233 = vrot.lane.b32.xlu0 %v198, 4
    %v234 = vpop.permute.xlu0 %233
    %vm235 = vcmp.ge.s32.totalorder %v213, 4
    %v236 = vsel %vm235, %v228, 0.0
    %v237 = vsel %vm235, %v230, 0.0
    %v238 = vsel %vm235, %v232, 0.0
    %v239 = vsel %vm235, %v234, 0.0
    %v240 = vld [vmem:[#allocation6] sm:$0xff]
    %v241 = vld [vmem:[#allocation6 + $0x8] sm:$0xff]
    %v242 = vld [vmem:[#allocation6 + $0x10] sm:$0xff]
    %v243 = vld [vmem:[#allocation6 + $0x18] sm:$0xff]
    %v244 = vld [vmem:[#allocation6 + $0x20] sm:$0xff]
    %v245 = vld [vmem:[#allocation6 + $0x28] sm:$0xff]
    %v246 = vld [vmem:[#allocation6 + $0x30] sm:$0xff]
    %v247 = vld [vmem:[#allocation6 + $0x38] sm:$0xff]
    %v248 = vld [vmem:[#allocation7] sm:$0xff]
    %v249 = vld [vmem:[#allocation7 + $0x8] sm:$0xff]
    %v250 = vld [vmem:[#allocation7 + $0x10] sm:$0xff]
    %v251 = vld [vmem:[#allocation7 + $0x18] sm:$0xff]
    %v252 = vld [vmem:[#allocation7 + $0x20] sm:$0xff]
    %v253 = vld [vmem:[#allocation7 + $0x28] sm:$0xff]
    %v254 = vld [vmem:[#allocation7 + $0x30] sm:$0xff]
    %v255 = vld [vmem:[#allocation7 + $0x38] sm:$0xff]
    %257 = vset.pattern.permute.xlu0 0
    %258 = vperm.xlu0 %257, %v248
    %v259 = vpop.permute.xlu0 %258
    %262 = vset.pattern.permute.xlu0 0
    %263 = vperm.xlu0 %262, %v249
    %v264 = vpop.permute.xlu0 %263
    %267 = vset.pattern.permute.xlu0 0
    %268 = vperm.xlu0 %267, %v250
    %v269 = vpop.permute.xlu0 %268
    %272 = vset.pattern.permute.xlu0 0
    %273 = vperm.xlu0 %272, %v251
    %v274 = vpop.permute.xlu0 %273
    %277 = vset.pattern.permute.xlu0 0
    %278 = vperm.xlu0 %277, %v252
    %v279 = vpop.permute.xlu0 %278
    %282 = vset.pattern.permute.xlu0 0
    %283 = vperm.xlu0 %282, %v253
    %v284 = vpop.permute.xlu0 %283
    %287 = vset.pattern.permute.xlu0 0
    %288 = vperm.xlu0 %287, %v254
    %v289 = vpop.permute.xlu0 %288
    %292 = vset.pattern.permute.xlu0 0
    %293 = vperm.xlu0 %292, %v255
    %v294 = vpop.permute.xlu0 %293
    %vm296 = vcmask 785408
    %v298 = vsel %vm296, %v240, 0
    %v301 = vsel %vm296, %v241, 0
    %v304 = vsel %vm296, %v242, 0
    %v307 = vsel %vm296, %v243, 0
    %v310 = vsel %vm296, %v244, 0
    %v313 = vsel %vm296, %v245, 0
    %v316 = vsel %vm296, %v246, 0
    %v319 = vsel %vm296, %v247, 0
    %321 = vmatpush.msra.mxu0 0.0
    %322 = vmatpush.msra.mxu0 0.0
    %323 = vmatpush.msra.mxu0 0.0
    %324 = vmatpush.msra.mxu0 0.0
    %325 = vmatpush.msra.mxu0 %v198
    %326 = vmatpush.msra.mxu0 %v195
    %327 = vmatpush.msra.mxu0 %v192
    %328 = vmatpush.msra.mxu0 %v189
    %329 = vmatpush.msra.mxu0 %v239
    %330 = vmatpush.msra.mxu0 %v238
    %331 = vmatpush.msra.mxu0 %v237
    %332 = vmatpush.msra.mxu0 %v236
    %333 = vmatpush.msra.mxu0 %v226
    %334 = vmatpush.msra.mxu0 %v225
    %335 = vmatpush.msra.mxu0 %v224
    %336 = vmatpush.msra.mxu0 %v223
    %337 = vmatmul.f32.gmra.mxu0 %v298
    %v338 = vpop.f32.mrf.mxu0
    %v339 = vadd.f32 %v259, %v338
    %340 = vmatmul.f32.gmra.mxu0 %v301
    %v341 = vpop.f32.mrf.mxu0
    %v342 = vadd.f32 %v264, %v341
    %343 = vmatmul.f32.gmra.mxu0 %v304
    %v344 = vpop.f32.mrf.mxu0
    %v345 = vadd.f32 %v269, %v344
    %346 = vmatmul.f32.gmra.mxu0 %v307
    %v347 = vpop.f32.mrf.mxu0
    %v348 = vadd.f32 %v274, %v347
    %349 = vmatmul.f32.gmra.mxu0 %v310
    %v350 = vpop.f32.mrf.mxu0
    %v351 = vadd.f32 %v279, %v350
    %352 = vmatmul.f32.gmra.mxu0 %v313
    %v353 = vpop.f32.mrf.mxu0
    %v354 = vadd.f32 %v284, %v353
    %355 = vmatmul.f32.gmra.mxu0 %v316
    %v356 = vpop.f32.mrf.mxu0
    %v357 = vadd.f32 %v289, %v356
    %358 = vmatmul.f32.gmra.mxu0 %v319
    %v359 = vpop.f32.mrf.mxu0
    %v360 = vadd.f32 %v294, %v359
    %361 = vdwg.mxu0
    %v362 = vtanh.pop %v339
    %v363 = vtanh.pop %v342
    %v364 = vtanh.pop %v345
    %v365 = vtanh.pop %v348
    %v366 = vxor.u32 %v351, 2147483648
    %v367 = vxor.u32 %v354, 2147483648
    %v368 = vxor.u32 %v357, 2147483648
    %v369 = vxor.u32 %v360, 2147483648
    %v370 = vmul.f32 %v366, 1.442695
    %v371 = vpow.pop %v370
    %v372 = vmul.f32 %v367, 1.442695
    %v373 = vpow.pop %v372
    %v374 = vmul.f32 %v368, 1.442695
    %v375 = vpow.pop %v374
    %v376 = vmul.f32 %v369, 1.442695
    %v377 = vpow.pop %v376
    %v378 = vadd.f32 %v371, 1.0
    %v379 = vadd.f32 %v373, 1.0
    %v380 = vadd.f32 %v375, 1.0
    %v381 = vadd.f32 %v377, 1.0
    %v382 = vrcp.pop %v378
    %v383 = vmul.f32 %v378, %v382
    %v384 = vsub.f32 1.0, %v383
    %v385 = vmul.f32 %v382, %v384
    %v386 = vadd.f32 %v382, %v385
    %vm387 = vweird.f32 %v378
    %vm388 = vweird.f32 %v382
    %vm389 = vmor %vm387, %vm388
    %v390 = vsel %vm389, %v382, %v386
    %v391 = vand.u32 2147483647, %v378
    %vm392 = vcmp.eq.f32.partialorder %v391, 8.507059e+37
    %v393 = vand.u32 %v378, 2147483648
    %v394 = vor.u32 1.1754944e-38, %v393
    %v395 = vsel %vm392, %v394, %v390
    %v396 = vmul.f32 1.0, %v395
    %v397 = vrcp.pop %v379
    %v398 = vmul.f32 %v379, %v397
    %v399 = vsub.f32 1.0, %v398
    %v400 = vmul.f32 %v397, %v399
    %v401 = vadd.f32 %v397, %v400
    %vm402 = vweird.f32 %v379
    %vm403 = vweird.f32 %v397
    %vm404 = vmor %vm402, %vm403
    %v405 = vsel %vm404, %v397, %v401
    %v406 = vand.u32 2147483647, %v379
    %vm407 = vcmp.eq.f32.partialorder %v406, 8.507059e+37
    %v408 = vand.u32 %v379, 2147483648
    %v409 = vor.u32 1.1754944e-38, %v408
    %v410 = vsel %vm407, %v409, %v405
    %v411 = vmul.f32 1.0, %v410
    %v412 = vrcp.pop %v380
    %v413 = vmul.f32 %v380, %v412
    %v414 = vsub.f32 1.0, %v413
    %v415 = vmul.f32 %v412, %v414
    %v416 = vadd.f32 %v412, %v415
    %vm417 = vweird.f32 %v380
    %vm418 = vweird.f32 %v412
    %vm419 = vmor %vm417, %vm418
    %v420 = vsel %vm419, %v412, %v416
    %v421 = vand.u32 2147483647, %v380
    %vm422 = vcmp.eq.f32.partialorder %v421, 8.507059e+37
    %v423 = vand.u32 %v380, 2147483648
    %v424 = vor.u32 1.1754944e-38, %v423
    %v425 = vsel %vm422, %v424, %v420
    %v426 = vmul.f32 1.0, %v425
    %v427 = vrcp.pop %v381
    %v428 = vmul.f32 %v381, %v427
    %v429 = vsub.f32 1.0, %v428
    %v430 = vmul.f32 %v427, %v429
    %v431 = vadd.f32 %v427, %v430
    %vm432 = vweird.f32 %v381
    %vm433 = vweird.f32 %v427
    %vm434 = vmor %vm432, %vm433
    %v435 = vsel %vm434, %v427, %v431
    %v436 = vand.u32 2147483647, %v381
    %vm437 = vcmp.eq.f32.partialorder %v436, 8.507059e+37
    %v438 = vand.u32 %v381, 2147483648
    %v439 = vor.u32 1.1754944e-38, %v438
    %v440 = vsel %vm437, %v439, %v435
    %v441 = vmul.f32 1.0, %v440
    %v442 = vmul.f32 %v362, %v396
    %v443 = vmul.f32 %v363, %v411
    %v444 = vmul.f32 %v364, %v426
    %v445 = vmul.f32 %v365, %v441
    %v446 = vld [vmem:[#allocation9] sm:$0xff]
    %v447 = vld [vmem:[#allocation9 + $0x8] sm:$0xff]
    %v448 = vld [vmem:[#allocation9 + $0x10] sm:$0xff]
    %v449 = vld [vmem:[#allocation9 + $0x18] sm:$0xff]
    %v450 = vld [vmem:[#allocation9 + $0x20] sm:$0xff]
    %v451 = vld [vmem:[#allocation9 + $0x28] sm:$0xff]
    %v452 = vld [vmem:[#allocation9 + $0x30] sm:$0xff]
    %v453 = vld [vmem:[#allocation9 + $0x38] sm:$0xff]
    %v454 = vld [vmem:[#allocation9 + $0x40] sm:$0x1]
    %v455 = vld [vmem:[#allocation10] sm:$0xff]
    %v456 = vld [vmem:[#allocation10 + $0x8] sm:$0xff]
    %v457 = vld [vmem:[#allocation10 + $0x10] sm:$0xff]
    %v458 = vld [vmem:[#allocation10 + $0x18] sm:$0xff]
    %v459 = vld [vmem:[#allocation10 + $0x20] sm:$0xff]
    %v460 = vld [vmem:[#allocation10 + $0x28] sm:$0xff]
    %v461 = vld [vmem:[#allocation10 + $0x30] sm:$0xff]
    %v462 = vld [vmem:[#allocation10 + $0x38] sm:$0xff]
    %v463 = vld [vmem:[#allocation10 + $0x40] sm:$0x1]
    %465 = vset.pattern.permute.xlu0 0
    %466 = vperm.xlu0 %465, %v455
    %v467 = vpop.permute.xlu0 %466
    %470 = vset.pattern.permute.xlu0 0
    %471 = vperm.xlu0 %470, %v456
    %v472 = vpop.permute.xlu0 %471
    %475 = vset.pattern.permute.xlu0 0
    %476 = vperm.xlu0 %475, %v457
    %v477 = vpop.permute.xlu0 %476
    %480 = vset.pattern.permute.xlu0 0
    %481 = vperm.xlu0 %480, %v458
    %v482 = vpop.permute.xlu0 %481
    %485 = vset.pattern.permute.xlu0 0
    %486 = vperm.xlu0 %485, %v459
    %v487 = vpop.permute.xlu0 %486
    %490 = vset.pattern.permute.xlu0 0
    %491 = vperm.xlu0 %490, %v460
    %v492 = vpop.permute.xlu0 %491
    %495 = vset.pattern.permute.xlu0 0
    %496 = vperm.xlu0 %495, %v461
    %v497 = vpop.permute.xlu0 %496
    %500 = vset.pattern.permute.xlu0 0
    %501 = vperm.xlu0 %500, %v462
    %v502 = vpop.permute.xlu0 %501
    %505 = vset.pattern.permute.xlu0 0
    %506 = vperm.xlu0 %505, %v463
    %v507 = vpop.permute.xlu0 %506
    %vm509 = vcmask 261120
    %v511 = vsel %vm509, %v446, 0
    %v514 = vsel %vm509, %v447, 0
    %v517 = vsel %vm509, %v448, 0
    %v520 = vsel %vm509, %v449, 0
    %v523 = vsel %vm509, %v450, 0
    %v526 = vsel %vm509, %v451, 0
    %v529 = vsel %vm509, %v452, 0
    %v532 = vsel %vm509, %v453, 0
    %v535 = vsel %vm509, %v454, 0
    %537 = vmatpush.msra.mxu0 0.0
    %538 = vmatpush.msra.mxu0 0.0
    %539 = vmatpush.msra.mxu0 0.0
    %540 = vmatpush.msra.mxu0 0.0
    %541 = vmatpush.msra.mxu0 0.0
    %542 = vmatpush.msra.mxu0 0.0
    %543 = vmatpush.msra.mxu0 0.0
    %544 = vmatpush.msra.mxu0 0.0
    %545 = vmatpush.msra.mxu0 0.0
    %546 = vmatpush.msra.mxu0 0.0
    %547 = vmatpush.msra.mxu0 0.0
    %548 = vmatpush.msra.mxu0 0.0
    %549 = vmatpush.msra.mxu0 %v445
    %550 = vmatpush.msra.mxu0 %v444
    %551 = vmatpush.msra.mxu0 %v443
    %552 = vmatpush.msra.mxu0 %v442
    %553 = vmatmul.f32.gmra.mxu0 %v511
    %v554 = vpop.f32.mrf.mxu0
    %v555 = vadd.f32 %v467, %v554
    %556 = vmatmul.f32.gmra.mxu0 %v514
    %v557 = vpop.f32.mrf.mxu0
    %v558 = vadd.f32 %v472, %v557
    %559 = vmatmul.f32.gmra.mxu0 %v517
    %v560 = vpop.f32.mrf.mxu0
    %v561 = vadd.f32 %v477, %v560
    %562 = vmatmul.f32.gmra.mxu0 %v520
    %v563 = vpop.f32.mrf.mxu0
    %v564 = vadd.f32 %v482, %v563
    %565 = vmatmul.f32.gmra.mxu0 %v523
    %v566 = vpop.f32.mrf.mxu0
    %v567 = vadd.f32 %v487, %v566
    %568 = vmatmul.f32.gmra.mxu0 %v526
    %v569 = vpop.f32.mrf.mxu0
    %v570 = vadd.f32 %v492, %v569
    %571 = vmatmul.f32.gmra.mxu0 %v529
    %v572 = vpop.f32.mrf.mxu0
    %v573 = vadd.f32 %v497, %v572
    %574 = vmatmul.f32.gmra.mxu0 %v532
    %v575 = vpop.f32.mrf.mxu0
    %v576 = vadd.f32 %v502, %v575
    %577 = vmatmul.f32.gmra.mxu0 %v535
    %v578 = vpop.f32.mrf.mxu0
    %v579 = vadd.f32 %v507, %v578
    %580 = vdwg.mxu0
    %v581 = vld [vmem:[%s1] sm:$0xff]
    %v582 = vld [vmem:[%s1 + $0x8] sm:$0xff]
    %v583 = vld [vmem:[%s1 + $0x10] sm:$0xff]
    %v584 = vld [vmem:[%s1 + $0x18] sm:$0xff]
    %v585 = vld [vmem:[%s1 + $0x20] sm:$0xff]
    %v586 = vld [vmem:[%s1 + $0x28] sm:$0xff]
    %v587 = vld [vmem:[%s1 + $0x30] sm:$0xff]
    %v588 = vld [vmem:[%s1 + $0x38] sm:$0xff]
    %v589 = vadd.f32 %v581, %v555
    %v590 = vadd.f32 %v582, %v558
    %v591 = vadd.f32 %v583, %v561
    %v592 = vadd.f32 %v584, %v564
    %v593 = vadd.f32 %v585, %v567
    %v594 = vadd.f32 %v586, %v570
    %v595 = vadd.f32 %v587, %v573
    %v596 = vadd.f32 %v588, %v576
    %597 = vst [vmem:[%s9] sm:$0xff] %v589
    %598 = vst [vmem:[%s9 + $0x8] sm:$0xff] %v590
    %599 = vst [vmem:[%s9 + $0x10] sm:$0xff] %v591
    %600 = vst [vmem:[%s9 + $0x18] sm:$0xff] %v592
    %601 = vst [vmem:[%s9 + $0x20] sm:$0xff] %v593
    %602 = vst [vmem:[%s9 + $0x28] sm:$0xff] %v594
    %603 = vst [vmem:[%s9 + $0x30] sm:$0xff] %v595
    %604 = vst [vmem:[%s9 + $0x38] sm:$0xff] %v596
    %v605 = vadd.f32 %v579, %v125
    %606 = vst [vmem:[%s8] sm:$0x1] %v605
    // Predicated region
    $region58: #{_lambda_.7} parent=1 // pred_check
      _
    $region59: #{_lambda_.7} parent=1 // pred_check_branch
      %608 = sbr.rel (0) target = $region61
    $region60: #{_lambda_.7} parent=1 // pred_region
      _
    $region61: #{_lambda_.7} parent=1 // pred_fallthru
      _
    // Predicated region
    $region62: #{_lambda_.7} parent=1 // pred_check
      _
    $region63: #{_lambda_.7} parent=1 // pred_check_branch
      %610 = sbr.rel (0) target = $region65
    $region64: #{_lambda_.7} parent=1 // pred_region
      _
    $region65: #{_lambda_.7} parent=1 // pred_fallthru
      _
    // Predicated region
    $region66: #{_lambda_.7} parent=1 // pred_check
      _
    $region67: #{_lambda_.7} parent=1 // pred_check_branch
      %612 = sbr.rel (0) target = $region69
    $region68: #{_lambda_.7} parent=1 // pred_region
      _
    $region69: #{_lambda_.7} parent=1 // pred_fallthru
      _
    // Predicated region
    $region70: #{_lambda_.7} parent=1 // pred_check
      _
    $region71: #{_lambda_.7} parent=1 // pred_check_branch
      %614 = sbr.rel (0) target = $region73
    $region72: #{_lambda_.7} parent=1 // pred_region
      _
    $region73: #{_lambda_.7} parent=1 // pred_fallthru
      _
    %615 = vsyncpa [#allocation3], 1
    %616 = vsyncpa [#allocation5], 1
    %617 = vsyncpa [#allocation8], 1
    %618 = vsyncpa [#allocation11], 1

// kernel: _lambda_.6
$region0: #{_lambda_.6}
  #allocation0 [shape = 'u32[]', space=smem, size = 0x4, offset = 0x4, fixed_abs, tag = 'smem constant byte address 0x4 - core index']
  #allocation1 [shape = 'u32[72,128]{1,0:T(1,128)}', space=vmem, size = 0x9000, scoped, tag = 'internal scratch']
  %s0 = inlined_call_operand.vmem [shape: f32[1,128], index: 0, kind: input, shape index: {}]
  %s1 = inlined_call_operand.vmem [shape: f32[64,128], index: 1, kind: input, shape index: {}]
  %s2 = inlined_call_operand.hbm [shape: f32[32,1], index: 2, kind: input, shape index: {}]
  %s3 = inlined_call_operand.hbm [shape: f32[32,1], index: 3, kind: input, shape index: {}]
  %s4 = inlined_call_operand.hbm [shape: f32[64,96], index: 4, kind: input, shape index: {}]
  %s5 = inlined_call_operand.hbm [shape: f32[64,1], index: 5, kind: input, shape index: {}]
  %s6 = inlined_call_operand.hbm [shape: f32[65,32], index: 6, kind: input, shape index: {}]
  %s7 = inlined_call_operand.hbm [shape: f32[65,1], index: 7, kind: input, shape index: {}]
  %s8 = inlined_call_operand.vmem [shape: f32[1,128], index: 8, kind: output, shape index: {0}]
  %s9 = inlined_call_operand.vmem [shape: f32[64,128], index: 9, kind: output, shape index: {1}]
  %10 = xla_tuple %s8, %s9
  %s11 = sld [smem:[#allocation0]]
  $region74: #{_lambda_.6} parent=0
    _
  %s13 = ssub.s32 1, %s11
  %s14 = scalar_select 0, %s13, %s11
  $region1: #{_lambda_.6} parent=0
    #allocation2 [shape = 'u8[16384]{0}', space=vmem, size = 0x4000, scoped, tag = 'input window, operand 2, single buffered']
    #allocation3 [shape = 's32[1]{0}', space=sflag, size = 0x4, scoped, tag = 'scoped memory for _lambda_.6']
    #allocation4 [shape = 'u8[16384]{0}', space=vmem, size = 0x4000, scoped, tag = 'input window, operand 3, single buffered']
    #allocation5 [shape = 's32[1]{0}', space=sflag, size = 0x4, scoped, tag = 'scoped memory for _lambda_.6']
    #allocation6 [shape = 'u8[32768]{0}', space=vmem, size = 0x8000, scoped, tag = 'input window, operand 4, single buffered']
    #allocation7 [shape = 'u8[32768]{0}', space=vmem, size = 0x8000, scoped, tag = 'input window, operand 5, single buffered']
    #allocation8 [shape = 's32[1]{0}', space=sflag, size = 0x4, scoped, tag = 'scoped memory for _lambda_.6']
    #allocation9 [shape = 'u8[36864]{0}', space=vmem, size = 0x9000, scoped, tag = 'input window, operand 6, single buffered']
    #allocation10 [shape = 'u8[36864]{0}', space=vmem, size = 0x9000, scoped, tag = 'input window, operand 7, single buffered']
    #allocation11 [shape = 's32[1]{0}', space=sflag, size = 0x4, scoped, tag = 'scoped memory for _lambda_.6']
    %15 = vsyncpa [#allocation3], 0
    %16 = vsyncpa [#allocation5], 0
    %17 = vsyncpa [#allocation8], 0
    %18 = vsyncpa [#allocation11], 0
    // Predicated region
    $region2: #{_lambda_.6} parent=1 // pred_check
      _
    $region3: #{_lambda_.6} parent=1 // pred_check_branch
      %20 = sbr.rel (0) target = $region5
    $region4: #{_lambda_.6} parent=1 // pred_region
      _
    $region5: #{_lambda_.6} parent=1 // pred_fallthru
      _
    // Predicated region
    $region6: #{_lambda_.6} parent=1 // pred_check
      _
    $region7: #{_lambda_.6} parent=1 // pred_check_branch
      %22 = sbr.rel (0) target = $region9
    $region8: #{_lambda_.6} parent=1 // pred_region
      _
    $region9: #{_lambda_.6} parent=1 // pred_fallthru
      _
    // Predicated region
    $region10: #{_lambda_.6} parent=1 // pred_check
      _
    $region11: #{_lambda_.6} parent=1 // pred_check_branch
      %24 = sbr.rel (0) target = $region13
    $region12: #{_lambda_.6} parent=1 // pred_region
      %26 = vsyncadd [#allocation3], 0
      %s27 = sshll.u32 %s2, 4
      %s28 = int_to_ptr.hbm [resolvable:$true] %s27
      %s29 = sshll.u32 [#allocation2], 4
      %s30 = int_to_ptr.vmem [resolvable:$true] %s29
      %35 = dma.hbm_to_vmem [thread:$0]  %s28, 512, %s30, [#allocation3], 128, 128, 8
    $region13: #{_lambda_.6} parent=1 // pred_fallthru
      _
    // Predicated region
    $region14: #{_lambda_.6} parent=1 // pred_check
      _
    $region15: #{_lambda_.6} parent=1 // pred_check_branch
      %37 = sbr.rel (0) target = $region17
    $region16: #{_lambda_.6} parent=1 // pred_region
      %39 = vsyncadd [#allocation5], 0
      %s40 = sshll.u32 %s3, 4
      %s41 = int_to_ptr.hbm [resolvable:$true] %s40
      %s42 = sshll.u32 [#allocation4], 4
      %s43 = int_to_ptr.vmem [resolvable:$true] %s42
      %48 = dma.hbm_to_vmem [thread:$0]  %s41, 512, %s43, [#allocation5], 128, 128, 8
    $region17: #{_lambda_.6} parent=1 // pred_fallthru
      _
    // Predicated region
    $region18: #{_lambda_.6} parent=1 // pred_check
      _
    $region19: #{_lambda_.6} parent=1 // pred_check_branch
      %50 = sbr.rel (0) target = $region21
    $region20: #{_lambda_.6} parent=1 // pred_region
      %52 = vsyncadd [#allocation5], 0
      %s53 = sshll.u32 %s4, 4
      %s54 = int_to_ptr.hbm [resolvable:$true] %s53
      %s55 = sshll.u32 [#allocation6], 4
      %s56 = int_to_ptr.vmem [resolvable:$true] %s55
      %61 = dma.hbm_to_vmem [thread:$0]  %s54, 1024, %s56, [#allocation5], 128, 128, 8
    $region21: #{_lambda_.6} parent=1 // pred_fallthru
      _
    // Predicated region
    $region22: #{_lambda_.6} parent=1 // pred_check
      _
    $region23: #{_lambda_.6} parent=1 // pred_check_branch
      %63 = sbr.rel (0) target = $region25
    $region24: #{_lambda_.6} parent=1 // pred_region
      %65 = vsyncadd [#allocation8], 0
      %s66 = sshll.u32 %s5, 4
      %s67 = int_to_ptr.hbm [resolvable:$true] %s66
      %s68 = sshll.u32 [#allocation7], 4
      %s69 = int_to_ptr.vmem [resolvable:$true] %s68
      %74 = dma.hbm_to_vmem [thread:$0]  %s67, 1024, %s69, [#allocation8], 128, 128, 8
    $region25: #{_lambda_.6} parent=1 // pred_fallthru
      _
    // Predicated region
    $region26: #{_lambda_.6} parent=1 // pred_check
      _
    $region27: #{_lambda_.6} parent=1 // pred_check_branch
      %76 = sbr.rel (0) target = $region29
    $region28: #{_lambda_.6} parent=1 // pred_region
      %78 = vsyncadd [#allocation8], 0
      %s79 = sshll.u32 %s6, 4
      %s80 = int_to_ptr.hbm [resolvable:$true] %s79
      %s81 = sshll.u32 [#allocation9], 4
      %s82 = int_to_ptr.vmem [resolvable:$true] %s81
      %87 = dma.hbm_to_vmem [thread:$0]  %s80, 1152, %s82, [#allocation8], 128, 128, 8
    $region29: #{_lambda_.6} parent=1 // pred_fallthru
      _
    // Predicated region
    $region30: #{_lambda_.6} parent=1 // pred_check
      _
    $region31: #{_lambda_.6} parent=1 // pred_check_branch
      %89 = sbr.rel (0) target = $region33
    $region32: #{_lambda_.6} parent=1 // pred_region
      %91 = vsyncadd [#allocation11], 0
      %s92 = sshll.u32 %s7, 4
      %s93 = int_to_ptr.hbm [resolvable:$true] %s92
      %s94 = sshll.u32 [#allocation10], 4
      %s95 = int_to_ptr.vmem [resolvable:$true] %s94
      %100 = dma.hbm_to_vmem [thread:$0]  %s93, 1152, %s95, [#allocation11], 128, 128, 8
    $region33: #{_lambda_.6} parent=1 // pred_fallthru
      _
    // Predicated region
    $region34: #{_lambda_.6} parent=1 // pred_check
      _
    $region35: #{_lambda_.6} parent=1 // pred_check_branch
      %102 = sbr.rel (0) target = $region37
    $region36: #{_lambda_.6} parent=1 // pred_region
      %104 = dma.done [#allocation3], 512
    $region37: #{_lambda_.6} parent=1 // pred_fallthru
      _
    // Predicated region
    $region38: #{_lambda_.6} parent=1 // pred_check
      _
    $region39: #{_lambda_.6} parent=1 // pred_check_branch
      %106 = sbr.rel (0) target = $region41
    $region40: #{_lambda_.6} parent=1 // pred_region
      %108 = dma.done [#allocation5], 512
    $region41: #{_lambda_.6} parent=1 // pred_fallthru
      _
    // Predicated region
    $region42: #{_lambda_.6} parent=1 // pred_check
      _
    $region43: #{_lambda_.6} parent=1 // pred_check_branch
      %110 = sbr.rel (0) target = $region45
    $region44: #{_lambda_.6} parent=1 // pred_region
      %112 = dma.done [#allocation5], 1024
    $region45: #{_lambda_.6} parent=1 // pred_fallthru
      _
    // Predicated region
    $region46: #{_lambda_.6} parent=1 // pred_check
      _
    $region47: #{_lambda_.6} parent=1 // pred_check_branch
      %114 = sbr.rel (0) target = $region49
    $region48: #{_lambda_.6} parent=1 // pred_region
      %116 = dma.done [#allocation8], 1024
    $region49: #{_lambda_.6} parent=1 // pred_fallthru
      _
    // Predicated region
    $region50: #{_lambda_.6} parent=1 // pred_check
      _
    $region51: #{_lambda_.6} parent=1 // pred_check_branch
      %118 = sbr.rel (0) target = $region53
    $region52: #{_lambda_.6} parent=1 // pred_region
      %120 = dma.done [#allocation8], 1152
    $region53: #{_lambda_.6} parent=1 // pred_fallthru
      _
    // Predicated region
    $region54: #{_lambda_.6} parent=1 // pred_check
      _
    $region55: #{_lambda_.6} parent=1 // pred_check_branch
      %122 = sbr.rel (0) target = $region57
    $region56: #{_lambda_.6} parent=1 // pred_region
      %124 = dma.done [#allocation11], 1152
    $region57: #{_lambda_.6} parent=1 // pred_fallthru
      _
    %v125 = vld [vmem:[%s0] sm:$0x1]
    %v126 = vld [vmem:[#allocation2] sm:$0xff]
    %v127 = vld [vmem:[#allocation2 + $0x8] sm:$0xff]
    %v128 = vld [vmem:[#allocation2 + $0x10] sm:$0xff]
    %v129 = vld [vmem:[#allocation2 + $0x18] sm:$0xff]
    %v130 = vld [vmem:[#allocation4] sm:$0xff]
    %v131 = vld [vmem:[#allocation4 + $0x8] sm:$0xff]
    %v132 = vld [vmem:[#allocation4 + $0x10] sm:$0xff]
    %v133 = vld [vmem:[#allocation4 + $0x18] sm:$0xff]
    %135 = vset.pattern.permute.xlu0 0
    %136 = vperm.xlu0 %135, %v130
    %v137 = vpop.permute.xlu0 %136
    %140 = vset.pattern.permute.xlu0 0
    %141 = vperm.xlu0 %140, %v131
    %v142 = vpop.permute.xlu0 %141
    %145 = vset.pattern.permute.xlu0 0
    %146 = vperm.xlu0 %145, %v132
    %v147 = vpop.permute.xlu0 %146
    %150 = vset.pattern.permute.xlu0 0
    %151 = vperm.xlu0 %150, %v133
    %v152 = vpop.permute.xlu0 %151
    %vm154 = vcmask 7168
    %v156 = vsel %vm154, %v126, 0
    %v159 = vsel %vm154, %v127, 0
    %v162 = vsel %vm154, %v128, 0
    %v165 = vsel %vm154, %v129, 0
    %vm167 = vcmask 1040384
    %v169 = vsel %vm167, %v125, 0
    %171 = vmatpush.msra.mxu0 0.0
    %172 = vmatpush.msra.mxu0 0.0
    %173 = vmatpush.msra.mxu0 0.0
    %174 = vmatpush.msra.mxu0 0.0
    %175 = vmatpush.msra.mxu0 0.0
    %176 = vmatpush.msra.mxu0 0.0
    %177 = vmatpush.msra.mxu0 0.0
    %178 = vmatpush.msra.mxu0 0.0
    %179 = vmatpush.msra.mxu0 0.0
    %180 = vmatpush.msra.mxu0 0.0
    %181 = vmatpush.msra.mxu0 0.0
    %182 = vmatpush.msra.mxu0 0.0
    %183 = vmatpush.msra.mxu0 0.0
    %184 = vmatpush.msra.mxu0 0.0
    %185 = vmatpush.msra.mxu0 0.0
    %186 = vmatpush.msra.mxu0 %v169
    %187 = vmatmul.f32.gmra.mxu0 %v156
    %v188 = vpop.f32.mrf.mxu0
    %v189 = vadd.f32 %v137, %v188
    %190 = vmatmul.f32.gmra.mxu0 %v159
    %v191 = vpop.f32.mrf.mxu0
    %v192 = vadd.f32 %v142, %v191
    %193 = vmatmul.f32.gmra.mxu0 %v162
    %v194 = vpop.f32.mrf.mxu0
    %v195 = vadd.f32 %v147, %v194
    %196 = vmatmul.f32.gmra.mxu0 %v165
    %v197 = vpop.f32.mrf.mxu0
    %v198 = vadd.f32 %v152, %v197
    %199 = vdwg.mxu0
    %v200 = vlaneseq
    %v201 = vand.u32 %v200, 127
    %vm202 = vcmp.lt.s32.totalorder %v201, 0
    %v203 = vsub.s32 0, %v201
    %v204 = vsel %vm202, %v203, %v201
    %v205 = vshrl.u32 %v204, 6
    %v206 = vand.u32 %v204, 63
    %v207 = vsub.s32 0, %v206
    %v208 = vsel %vm202, %v207, %v206
    %vm209 = vcmp.ne.s32.totalorder %v208, 0
    %vm210 = vcmp.lt.s32.totalorder %v208, 0
    %vm211 = vmand %vm210, %vm209
    %v212 = vadd.s32 %v208, 64
    %v213 = vsel %vm211, %v212, %v208
    %214 = vrot.lane.b32.xlu0 %v189, 4
    %v215 = vpop.permute.xlu0 %214
    %216 = vrot.lane.b32.xlu0 %v192, 4
    %v217 = vpop.permute.xlu0 %216
    %218 = vrot.lane.b32.xlu0 %v195, 4
    %v219 = vpop.permute.xlu0 %218
    %220 = vrot.lane.b32.xlu0 %v198, 4
    %v221 = vpop.permute.xlu0 %220
    %vm222 = vcmp.ge.s32.totalorder %v213, 4
    %v223 = vsel %vm222, %v215, 0.0
    %v224 = vsel %vm222, %v217, 0.0
    %v225 = vsel %vm222, %v219, 0.0
    %v226 = vsel %vm222, %v221, 0.0
    %227 = vrot.lane.b32.xlu0 %v189, 2
    %v228 = vpop.permute.xlu0 %227
    %229 = vrot.lane.b32.xlu0 %v192, 2
    %v230 = vpop.permute.xlu0 %229
    %231 = vrot.lane.b32.xlu0 %v195, 2
    %v232 = vpop.permute.xlu0 %231
    %233 = vrot.lane.b32.xlu0 %v198, 2
    %v234 = vpop.permute.xlu0 %233
    %vm235 = vcmp.ge.s32.totalorder %v213, 2
    %v236 = vsel %vm235, %v228, 0.0
    %v237 = vsel %vm235, %v230, 0.0
    %v238 = vsel %vm235, %v232, 0.0
    %v239 = vsel %vm235, %v234, 0.0
    %v240 = vld [vmem:[#allocation6] sm:$0xff]
    %v241 = vld [vmem:[#allocation6 + $0x8] sm:$0xff]
    %v242 = vld [vmem:[#allocation6 + $0x10] sm:$0xff]
    %v243 = vld [vmem:[#allocation6 + $0x18] sm:$0xff]
    %v244 = vld [vmem:[#allocation6 + $0x20] sm:$0xff]
    %v245 = vld [vmem:[#allocation6 + $0x28] sm:$0xff]
    %v246 = vld [vmem:[#allocation6 + $0x30] sm:$0xff]
    %v247 = vld [vmem:[#allocation6 + $0x38] sm:$0xff]
    %v248 = vld [vmem:[#allocation7] sm:$0xff]
    %v249 = vld [vmem:[#allocation7 + $0x8] sm:$0xff]
    %v250 = vld [vmem:[#allocation7 + $0x10] sm:$0xff]
    %v251 = vld [vmem:[#allocation7 + $0x18] sm:$0xff]
    %v252 = vld [vmem:[#allocation7 + $0x20] sm:$0xff]
    %v253 = vld [vmem:[#allocation7 + $0x28] sm:$0xff]
    %v254 = vld [vmem:[#allocation7 + $0x30] sm:$0xff]
    %v255 = vld [vmem:[#allocation7 + $0x38] sm:$0xff]
    %257 = vset.pattern.permute.xlu0 0
    %258 = vperm.xlu0 %257, %v248
    %v259 = vpop.permute.xlu0 %258
    %262 = vset.pattern.permute.xlu0 0
    %263 = vperm.xlu0 %262, %v249
    %v264 = vpop.permute.xlu0 %263
    %267 = vset.pattern.permute.xlu0 0
    %268 = vperm.xlu0 %267, %v250
    %v269 = vpop.permute.xlu0 %268
    %272 = vset.pattern.permute.xlu0 0
    %273 = vperm.xlu0 %272, %v251
    %v274 = vpop.permute.xlu0 %273
    %277 = vset.pattern.permute.xlu0 0
    %278 = vperm.xlu0 %277, %v252
    %v279 = vpop.permute.xlu0 %278
    %282 = vset.pattern.permute.xlu0 0
    %283 = vperm.xlu0 %282, %v253
    %v284 = vpop.permute.xlu0 %283
    %287 = vset.pattern.permute.xlu0 0
    %288 = vperm.xlu0 %287, %v254
    %v289 = vpop.permute.xlu0 %288
    %292 = vset.pattern.permute.xlu0 0
    %293 = vperm.xlu0 %292, %v255
    %v294 = vpop.permute.xlu0 %293
    %vm296 = vcmask 785408
    %v298 = vsel %vm296, %v240, 0
    %v301 = vsel %vm296, %v241, 0
    %v304 = vsel %vm296, %v242, 0
    %v307 = vsel %vm296, %v243, 0
    %v310 = vsel %vm296, %v244, 0
    %v313 = vsel %vm296, %v245, 0
    %v316 = vsel %vm296, %v246, 0
    %v319 = vsel %vm296, %v247, 0
    %321 = vmatpush.msra.mxu0 0.0
    %322 = vmatpush.msra.mxu0 0.0
    %323 = vmatpush.msra.mxu0 0.0
    %324 = vmatpush.msra.mxu0 0.0
    %325 = vmatpush.msra.mxu0 %v198
    %326 = vmatpush.msra.mxu0 %v195
    %327 = vmatpush.msra.mxu0 %v192
    %328 = vmatpush.msra.mxu0 %v189
    %329 = vmatpush.msra.mxu0 %v239
    %330 = vmatpush.msra.mxu0 %v238
    %331 = vmatpush.msra.mxu0 %v237
    %332 = vmatpush.msra.mxu0 %v236
    %333 = vmatpush.msra.mxu0 %v226
    %334 = vmatpush.msra.mxu0 %v225
    %335 = vmatpush.msra.mxu0 %v224
    %336 = vmatpush.msra.mxu0 %v223
    %337 = vmatmul.f32.gmra.mxu0 %v298
    %v338 = vpop.f32.mrf.mxu0
    %v339 = vadd.f32 %v259, %v338
    %340 = vmatmul.f32.gmra.mxu0 %v301
    %v341 = vpop.f32.mrf.mxu0
    %v342 = vadd.f32 %v264, %v341
    %343 = vmatmul.f32.gmra.mxu0 %v304
    %v344 = vpop.f32.mrf.mxu0
    %v345 = vadd.f32 %v269, %v344
    %346 = vmatmul.f32.gmra.mxu0 %v307
    %v347 = vpop.f32.mrf.mxu0
    %v348 = vadd.f32 %v274, %v347
    %349 = vmatmul.f32.gmra.mxu0 %v310
    %v350 = vpop.f32.mrf.mxu0
    %v351 = vadd.f32 %v279, %v350
    %352 = vmatmul.f32.gmra.mxu0 %v313
    %v353 = vpop.f32.mrf.mxu0
    %v354 = vadd.f32 %v284, %v353
    %355 = vmatmul.f32.gmra.mxu0 %v316
    %v356 = vpop.f32.mrf.mxu0
    %v357 = vadd.f32 %v289, %v356
    %358 = vmatmul.f32.gmra.mxu0 %v319
    %v359 = vpop.f32.mrf.mxu0
    %v360 = vadd.f32 %v294, %v359
    %361 = vdwg.mxu0
    %v362 = vtanh.pop %v339
    %v363 = vtanh.pop %v342
    %v364 = vtanh.pop %v345
    %v365 = vtanh.pop %v348
    %v366 = vxor.u32 %v351, 2147483648
    %v367 = vxor.u32 %v354, 2147483648
    %v368 = vxor.u32 %v357, 2147483648
    %v369 = vxor.u32 %v360, 2147483648
    %v370 = vmul.f32 %v366, 1.442695
    %v371 = vpow.pop %v370
    %v372 = vmul.f32 %v367, 1.442695
    %v373 = vpow.pop %v372
    %v374 = vmul.f32 %v368, 1.442695
    %v375 = vpow.pop %v374
    %v376 = vmul.f32 %v369, 1.442695
    %v377 = vpow.pop %v376
    %v378 = vadd.f32 %v371, 1.0
    %v379 = vadd.f32 %v373, 1.0
    %v380 = vadd.f32 %v375, 1.0
    %v381 = vadd.f32 %v377, 1.0
    %v382 = vrcp.pop %v378
    %v383 = vmul.f32 %v378, %v382
    %v384 = vsub.f32 1.0, %v383
    %v385 = vmul.f32 %v382, %v384
    %v386 = vadd.f32 %v382, %v385
    %vm387 = vweird.f32 %v378
    %vm388 = vweird.f32 %v382
    %vm389 = vmor %vm387, %vm388
    %v390 = vsel %vm389, %v382, %v386
    %v391 = vand.u32 2147483647, %v378
    %vm392 = vcmp.eq.f32.partialorder %v391, 8.507059e+37
    %v393 = vand.u32 %v378, 2147483648
    %v394 = vor.u32 1.1754944e-38, %v393
    %v395 = vsel %vm392, %v394, %v390
    %v396 = vmul.f32 1.0, %v395
    %v397 = vrcp.pop %v379
    %v398 = vmul.f32 %v379, %v397
    %v399 = vsub.f32 1.0, %v398
    %v400 = vmul.f32 %v397, %v399
    %v401 = vadd.f32 %v397, %v400
    %vm402 = vweird.f32 %v379
    %vm403 = vweird.f32 %v397
    %vm404 = vmor %vm402, %vm403
    %v405 = vsel %vm404, %v397, %v401
    %v406 = vand.u32 2147483647, %v379
    %vm407 = vcmp.eq.f32.partialorder %v406, 8.507059e+37
    %v408 = vand.u32 %v379, 2147483648
    %v409 = vor.u32 1.1754944e-38, %v408
    %v410 = vsel %vm407, %v409, %v405
    %v411 = vmul.f32 1.0, %v410
    %v412 = vrcp.pop %v380
    %v413 = vmul.f32 %v380, %v412
    %v414 = vsub.f32 1.0, %v413
    %v415 = vmul.f32 %v412, %v414
    %v416 = vadd.f32 %v412, %v415
    %vm417 = vweird.f32 %v380
    %vm418 = vweird.f32 %v412
    %vm419 = vmor %vm417, %vm418
    %v420 = vsel %vm419, %v412, %v416
    %v421 = vand.u32 2147483647, %v380
    %vm422 = vcmp.eq.f32.partialorder %v421, 8.507059e+37
    %v423 = vand.u32 %v380, 2147483648
    %v424 = vor.u32 1.1754944e-38, %v423
    %v425 = vsel %vm422, %v424, %v420
    %v426 = vmul.f32 1.0, %v425
    %v427 = vrcp.pop %v381
    %v428 = vmul.f32 %v381, %v427
    %v429 = vsub.f32 1.0, %v428
    %v430 = vmul.f32 %v427, %v429
    %v431 = vadd.f32 %v427, %v430
    %vm432 = vweird.f32 %v381
    %vm433 = vweird.f32 %v427
    %vm434 = vmor %vm432, %vm433
    %v435 = vsel %vm434, %v427, %v431
    %v436 = vand.u32 2147483647, %v381
    %vm437 = vcmp.eq.f32.partialorder %v436, 8.507059e+37
    %v438 = vand.u32 %v381, 2147483648
    %v439 = vor.u32 1.1754944e-38, %v438
    %v440 = vsel %vm437, %v439, %v435
    %v441 = vmul.f32 1.0, %v440
    %v442 = vmul.f32 %v362, %v396
    %v443 = vmul.f32 %v363, %v411
    %v444 = vmul.f32 %v364, %v426
    %v445 = vmul.f32 %v365, %v441
    %v446 = vld [vmem:[#allocation9] sm:$0xff]
    %v447 = vld [vmem:[#allocation9 + $0x8] sm:$0xff]
    %v448 = vld [vmem:[#allocation9 + $0x10] sm:$0xff]
    %v449 = vld [vmem:[#allocation9 + $0x18] sm:$0xff]
    %v450 = vld [vmem:[#allocation9 + $0x20] sm:$0xff]
    %v451 = vld [vmem:[#allocation9 + $0x28] sm:$0xff]
    %v452 = vld [vmem:[#allocation9 + $0x30] sm:$0xff]
    %v453 = vld [vmem:[#allocation9 + $0x38] sm:$0xff]
    %v454 = vld [vmem:[#allocation9 + $0x40] sm:$0x1]
    %v455 = vld [vmem:[#allocation10] sm:$0xff]
    %v456 = vld [vmem:[#allocation10 + $0x8] sm:$0xff]
    %v457 = vld [vmem:[#allocation10 + $0x10] sm:$0xff]
    %v458 = vld [vmem:[#allocation10 + $0x18] sm:$0xff]
    %v459 = vld [vmem:[#allocation10 + $0x20] sm:$0xff]
    %v460 = vld [vmem:[#allocation10 + $0x28] sm:$0xff]
    %v461 = vld [vmem:[#allocation10 + $0x30] sm:$0xff]
    %v462 = vld [vmem:[#allocation10 + $0x38] sm:$0xff]
    %v463 = vld [vmem:[#allocation10 + $0x40] sm:$0x1]
    %465 = vset.pattern.permute.xlu0 0
    %466 = vperm.xlu0 %465, %v455
    %v467 = vpop.permute.xlu0 %466
    %470 = vset.pattern.permute.xlu0 0
    %471 = vperm.xlu0 %470, %v456
    %v472 = vpop.permute.xlu0 %471
    %475 = vset.pattern.permute.xlu0 0
    %476 = vperm.xlu0 %475, %v457
    %v477 = vpop.permute.xlu0 %476
    %480 = vset.pattern.permute.xlu0 0
    %481 = vperm.xlu0 %480, %v458
    %v482 = vpop.permute.xlu0 %481
    %485 = vset.pattern.permute.xlu0 0
    %486 = vperm.xlu0 %485, %v459
    %v487 = vpop.permute.xlu0 %486
    %490 = vset.pattern.permute.xlu0 0
    %491 = vperm.xlu0 %490, %v460
    %v492 = vpop.permute.xlu0 %491
    %495 = vset.pattern.permute.xlu0 0
    %496 = vperm.xlu0 %495, %v461
    %v497 = vpop.permute.xlu0 %496
    %500 = vset.pattern.permute.xlu0 0
    %501 = vperm.xlu0 %500, %v462
    %v502 = vpop.permute.xlu0 %501
    %505 = vset.pattern.permute.xlu0 0
    %506 = vperm.xlu0 %505, %v463
    %v507 = vpop.permute.xlu0 %506
    %vm509 = vcmask 261120
    %v511 = vsel %vm509, %v446, 0
    %v514 = vsel %vm509, %v447, 0
    %v517 = vsel %vm509, %v448, 0
    %v520 = vsel %vm509, %v449, 0
    %v523 = vsel %vm509, %v450, 0
    %v526 = vsel %vm509, %v451, 0
    %v529 = vsel %vm509, %v452, 0
    %v532 = vsel %vm509, %v453, 0
    %v535 = vsel %vm509, %v454, 0
    %537 = vmatpush.msra.mxu0 0.0
    %538 = vmatpush.msra.mxu0 0.0
    %539 = vmatpush.msra.mxu0 0.0
    %540 = vmatpush.msra.mxu0 0.0
    %541 = vmatpush.msra.mxu0 0.0
    %542 = vmatpush.msra.mxu0 0.0
    %543 = vmatpush.msra.mxu0 0.0
    %544 = vmatpush.msra.mxu0 0.0
    %545 = vmatpush.msra.mxu0 0.0
    %546 = vmatpush.msra.mxu0 0.0
    %547 = vmatpush.msra.mxu0 0.0
    %548 = vmatpush.msra.mxu0 0.0
    %549 = vmatpush.msra.mxu0 %v445
    %550 = vmatpush.msra.mxu0 %v444
    %551 = vmatpush.msra.mxu0 %v443
    %552 = vmatpush.msra.mxu0 %v442
    %553 = vmatmul.f32.gmra.mxu0 %v511
    %v554 = vpop.f32.mrf.mxu0
    %v555 = vadd.f32 %v467, %v554
    %556 = vmatmul.f32.gmra.mxu0 %v514
    %v557 = vpop.f32.mrf.mxu0
    %v558 = vadd.f32 %v472, %v557
    %559 = vmatmul.f32.gmra.mxu0 %v517
    %v560 = vpop.f32.mrf.mxu0
    %v561 = vadd.f32 %v477, %v560
    %562 = vmatmul.f32.gmra.mxu0 %v520
    %v563 = vpop.f32.mrf.mxu0
    %v564 = vadd.f32 %v482, %v563
    %565 = vmatmul.f32.gmra.mxu0 %v523
    %v566 = vpop.f32.mrf.mxu0
    %v567 = vadd.f32 %v487, %v566
    %568 = vmatmul.f32.gmra.mxu0 %v526
    %v569 = vpop.f32.mrf.mxu0
    %v570 = vadd.f32 %v492, %v569
    %571 = vmatmul.f32.gmra.mxu0 %v529
    %v572 = vpop.f32.mrf.mxu0
    %v573 = vadd.f32 %v497, %v572
    %574 = vmatmul.f32.gmra.mxu0 %v532
    %v575 = vpop.f32.mrf.mxu0
    %v576 = vadd.f32 %v502, %v575
    %577 = vmatmul.f32.gmra.mxu0 %v535
    %v578 = vpop.f32.mrf.mxu0
    %v579 = vadd.f32 %v507, %v578
    %580 = vdwg.mxu0
    %v581 = vld [vmem:[%s1] sm:$0xff]
    %v582 = vld [vmem:[%s1 + $0x8] sm:$0xff]
    %v583 = vld [vmem:[%s1 + $0x10] sm:$0xff]
    %v584 = vld [vmem:[%s1 + $0x18] sm:$0xff]
    %v585 = vld [vmem:[%s1 + $0x20] sm:$0xff]
    %v586 = vld [vmem:[%s1 + $0x28] sm:$0xff]
    %v587 = vld [vmem:[%s1 + $0x30] sm:$0xff]
    %v588 = vld [vmem:[%s1 + $0x38] sm:$0xff]
    %v589 = vadd.f32 %v581, %v555
    %v590 = vadd.f32 %v582, %v558
    %v591 = vadd.f32 %v583, %v561
    %v592 = vadd.f32 %v584, %v564
    %v593 = vadd.f32 %v585, %v567
    %v594 = vadd.f32 %v586, %v570
    %v595 = vadd.f32 %v587, %v573
    %v596 = vadd.f32 %v588, %v576
    %597 = vst [vmem:[%s9] sm:$0xff] %v589
    %598 = vst [vmem:[%s9 + $0x8] sm:$0xff] %v590
    %599 = vst [vmem:[%s9 + $0x10] sm:$0xff] %v591
    %600 = vst [vmem:[%s9 + $0x18] sm:$0xff] %v592
    %601 = vst [vmem:[%s9 + $0x20] sm:$0xff] %v593
    %602 = vst [vmem:[%s9 + $0x28] sm:$0xff] %v594
    %603 = vst [vmem:[%s9 + $0x30] sm:$0xff] %v595
    %604 = vst [vmem:[%s9 + $0x38] sm:$0xff] %v596
    %v605 = vadd.f32 %v579, %v125
    %606 = vst [vmem:[%s8] sm:$0x1] %v605
    // Predicated region
    $region58: #{_lambda_.6} parent=1 // pred_check
      _
    $region59: #{_lambda_.6} parent=1 // pred_check_branch
      %608 = sbr.rel (0) target = $region61
    $region60: #{_lambda_.6} parent=1 // pred_region
      _
    $region61: #{_lambda_.6} parent=1 // pred_fallthru
      _
    // Predicated region
    $region62: #{_lambda_.6} parent=1 // pred_check
      _
    $region63: #{_lambda_.6} parent=1 // pred_check_branch
      %610 = sbr.rel (0) target = $region65
    $region64: #{_lambda_.6} parent=1 // pred_region
      _
    $region65: #{_lambda_.6} parent=1 // pred_fallthru
      _
    // Predicated region
    $region66: #{_lambda_.6} parent=1 // pred_check
      _
    $region67: #{_lambda_.6} parent=1 // pred_check_branch
      %612 = sbr.rel (0) target = $region69
    $region68: #{_lambda_.6} parent=1 // pred_region
      _
    $region69: #{_lambda_.6} parent=1 // pred_fallthru
      _
    // Predicated region
    $region70: #{_lambda_.6} parent=1 // pred_check
      _
    $region71: #{_lambda_.6} parent=1 // pred_check_branch
      %614 = sbr.rel (0) target = $region73
    $region72: #{_lambda_.6} parent=1 // pred_region
      _
    $region73: #{_lambda_.6} parent=1 // pred_fallthru
      _
    %615 = vsyncpa [#allocation3], 1
    %616 = vsyncpa [#allocation5], 1
    %617 = vsyncpa [#allocation8], 1
    %618 = vsyncpa [#allocation11], 1

// kernel: squeeze.2
$region0: #{squeeze.2}
  %s0 = inlined_call_operand.vmem [shape: f32[128], index: 0, kind: input, shape index: {}]
  %s1 = inlined_call_operand.hbm [shape: f32[2,64], index: 1, kind: output, shape index: {}]
  $region1: #{squeeze.2} parent=0
    #allocation0 [shape = 'u8[1024]{0}', space=vmem, size = 0x400, scoped, tag = 'operand span for operand 1']
    #allocation1 [shape = 's32[1]{0}', space=sflag, size = 0x4, scoped, tag = 'scoped memory for squeeze.2']
    #allocation2 [shape = 'u8[4096]{0}', space=vmem, size = 0x1000, scoped, tag = 'scoped mem for output reshape']
    #allocation3 [shape = 'u8[4096]{0}', space=vmem, size = 0x1000, scoped, tag = 'scoped mem for input reshape']
    %2 = vsyncpa [#allocation1], 0
    %s4 = ssub.s32 2, 1
    %v5 = vld [vmem:[%s0] sm:%s4]
    %6 = vst [vmem:[#allocation3] sm:%s4] %v5
    %v7 = vld [vmem:[#allocation3] sm:$0x1]
    %vm8 = vcmask 523264
    %9 = vst.msk [vmem:[#allocation2] sm:$0x1] %vm8, %v7
    %v10 = vld [vmem:[#allocation3] sm:$0x1]
    %11 = vrot.lane.b32.xlu0 %v10, 64
    %v12 = vpop.permute.xlu0 %11
    %vm13 = vcmask 523264
    %s14 = scalar_lea.vmem [#allocation2], 1
    %15 = vst.msk [vmem:[%s14] sm:$0x1] %vm13, %v12
    %s17 = ssub.s32 4, 1
    %v18 = vld [vmem:[#allocation2] sm:%s17]
    %s20 = ssub.s32 4, 1
    %21 = vst [vmem:[#allocation0] sm:%s20] %v18
    %23 = vsyncadd [#allocation1], 0
    %s25 = sshll.u32 [#allocation0], 4
    %s26 = int_to_ptr.vmem [resolvable:$true] %s25
    %s27 = sshll.u32 %s1, 4
    %s28 = int_to_ptr.hbm [resolvable:$true] %s27
    %30 = dma.vmem_to_hbm [thread:$0]  %s26, 32, %s28, [#allocation1]
    %32 = dma.done [#allocation1], 32
    %33 = vsyncpa [#allocation1], 1

// kernel: _lambda_.9
$region0: #{_lambda_.9}
  #allocation0 [shape = 'u32[]', space=smem, size = 0x4, offset = 0x4, fixed_abs, tag = 'smem constant byte address 0x4 - core index']
  #allocation1 [shape = 'u32[72,128]{1,0:T(1,128)}', space=vmem, size = 0x9000, scoped, tag = 'internal scratch']
  %s0 = inlined_call_operand.vmem [shape: f32[64,128], index: 0, kind: input, shape index: {}]
  %s1 = inlined_call_operand.hbm [shape: f32[64,64], index: 1, kind: input, shape index: {}]
  %s2 = inlined_call_operand.hbm [shape: f32[64,1], index: 2, kind: input, shape index: {}]
  %s3 = inlined_call_operand.vmem [shape: f32[2,64], index: 3, kind: input, shape index: {}]
  %s4 = inlined_call_operand.vmem [shape: f32[2,1], index: 4, kind: input, shape index: {}]
  %s5 = inlined_call_operand.vmem [shape: f32[2,128], index: 5, kind: output, shape index: {}]
  %s6 = sld [smem:[#allocation0]]
  $region38: #{_lambda_.9} parent=0
    _
  %s8 = ssub.s32 1, %s6
  %s9 = scalar_select 0, %s8, %s6
  $region1: #{_lambda_.9} parent=0
    #allocation2 [shape = 'u8[32768]{0}', space=vmem, size = 0x8000, scoped, tag = 'input window, operand 1, single buffered']
    #allocation3 [shape = 's32[1]{0}', space=sflag, size = 0x4, scoped, tag = 'scoped memory for _lambda_.9']
    #allocation4 [shape = 'u8[32768]{0}', space=vmem, size = 0x8000, scoped, tag = 'input window, operand 2, single buffered']
    #allocation5 [shape = 's32[1]{0}', space=sflag, size = 0x4, scoped, tag = 'scoped memory for _lambda_.9']
    %10 = vsyncpa [#allocation3], 0
    %11 = vsyncpa [#allocation5], 0
    // Predicated region
    $region2: #{_lambda_.9} parent=1 // pred_check
      _
    $region3: #{_lambda_.9} parent=1 // pred_check_branch
      %13 = sbr.rel (0) target = $region5
    $region4: #{_lambda_.9} parent=1 // pred_region
      _
    $region5: #{_lambda_.9} parent=1 // pred_fallthru
      _
    // Predicated region
    $region6: #{_lambda_.9} parent=1 // pred_check
      _
    $region7: #{_lambda_.9} parent=1 // pred_check_branch
      %15 = sbr.rel (0) target = $region9
    $region8: #{_lambda_.9} parent=1 // pred_region
      %17 = vsyncadd [#allocation3], 0
      %s18 = sshll.u32 %s1, 4
      %s19 = int_to_ptr.hbm [resolvable:$true] %s18
      %s20 = sshll.u32 [#allocation2], 4
      %s21 = int_to_ptr.vmem [resolvable:$true] %s20
      %26 = dma.hbm_to_vmem [thread:$0]  %s19, 1024, %s21, [#allocation3], 128, 128, 8
    $region9: #{_lambda_.9} parent=1 // pred_fallthru
      _
    // Predicated region
    $region10: #{_lambda_.9} parent=1 // pred_check
      _
    $region11: #{_lambda_.9} parent=1 // pred_check_branch
      %28 = sbr.rel (0) target = $region13
    $region12: #{_lambda_.9} parent=1 // pred_region
      %30 = vsyncadd [#allocation5], 0
      %s31 = sshll.u32 %s2, 4
      %s32 = int_to_ptr.hbm [resolvable:$true] %s31
      %s33 = sshll.u32 [#allocation4], 4
      %s34 = int_to_ptr.vmem [resolvable:$true] %s33
      %39 = dma.hbm_to_vmem [thread:$0]  %s32, 1024, %s34, [#allocation5], 128, 128, 8
    $region13: #{_lambda_.9} parent=1 // pred_fallthru
      _
    // Predicated region
    $region14: #{_lambda_.9} parent=1 // pred_check
      _
    $region15: #{_lambda_.9} parent=1 // pred_check_branch
      %41 = sbr.rel (0) target = $region17
    $region16: #{_lambda_.9} parent=1 // pred_region
      _
    $region17: #{_lambda_.9} parent=1 // pred_fallthru
      _
    // Predicated region
    $region18: #{_lambda_.9} parent=1 // pred_check
      _
    $region19: #{_lambda_.9} parent=1 // pred_check_branch
      %43 = sbr.rel (0) target = $region21
    $region20: #{_lambda_.9} parent=1 // pred_region
      _
    $region21: #{_lambda_.9} parent=1 // pred_fallthru
      _
    // Predicated region
    $region22: #{_lambda_.9} parent=1 // pred_check
      _
    $region23: #{_lambda_.9} parent=1 // pred_check_branch
      %45 = sbr.rel (0) target = $region25
    $region24: #{_lambda_.9} parent=1 // pred_region
      %47 = dma.done [#allocation3], 1024
    $region25: #{_lambda_.9} parent=1 // pred_fallthru
      _
    // Predicated region
    $region26: #{_lambda_.9} parent=1 // pred_check
      _
    $region27: #{_lambda_.9} parent=1 // pred_check_branch
      %49 = sbr.rel (0) target = $region29
    $region28: #{_lambda_.9} parent=1 // pred_region
      %51 = dma.done [#allocation5], 1024
    $region29: #{_lambda_.9} parent=1 // pred_fallthru
      _
    %v52 = vld [vmem:[%s0] sm:$0xff]
    %v53 = vld [vmem:[%s0 + $0x8] sm:$0xff]
    %v54 = vld [vmem:[%s0 + $0x10] sm:$0xff]
    %v55 = vld [vmem:[%s0 + $0x18] sm:$0xff]
    %v56 = vld [vmem:[%s0 + $0x20] sm:$0xff]
    %v57 = vld [vmem:[%s0 + $0x28] sm:$0xff]
    %v58 = vld [vmem:[%s0 + $0x30] sm:$0xff]
    %v59 = vld [vmem:[%s0 + $0x38] sm:$0xff]
    %v60 = vld [vmem:[#allocation2] sm:$0xff]
    %v61 = vld [vmem:[#allocation2 + $0x8] sm:$0xff]
    %v62 = vld [vmem:[#allocation2 + $0x10] sm:$0xff]
    %v63 = vld [vmem:[#allocation2 + $0x18] sm:$0xff]
    %v64 = vld [vmem:[#allocation2 + $0x20] sm:$0xff]
    %v65 = vld [vmem:[#allocation2 + $0x28] sm:$0xff]
    %v66 = vld [vmem:[#allocation2 + $0x30] sm:$0xff]
    %v67 = vld [vmem:[#allocation2 + $0x38] sm:$0xff]
    %v68 = vld [vmem:[#allocation4] sm:$0xff]
    %v69 = vld [vmem:[#allocation4 + $0x8] sm:$0xff]
    %v70 = vld [vmem:[#allocation4 + $0x10] sm:$0xff]
    %v71 = vld [vmem:[#allocation4 + $0x18] sm:$0xff]
    %v72 = vld [vmem:[#allocation4 + $0x20] sm:$0xff]
    %v73 = vld [vmem:[#allocation4 + $0x28] sm:$0xff]
    %v74 = vld [vmem:[#allocation4 + $0x30] sm:$0xff]
    %v75 = vld [vmem:[#allocation4 + $0x38] sm:$0xff]
    %77 = vset.pattern.permute.xlu0 0
    %78 = vperm.xlu0 %77, %v68
    %v79 = vpop.permute.xlu0 %78
    %82 = vset.pattern.permute.xlu0 0
    %83 = vperm.xlu0 %82, %v69
    %v84 = vpop.permute.xlu0 %83
    %87 = vset.pattern.permute.xlu0 0
    %88 = vperm.xlu0 %87, %v70
    %v89 = vpop.permute.xlu0 %88
    %92 = vset.pattern.permute.xlu0 0
    %93 = vperm.xlu0 %92, %v71
    %v94 = vpop.permute.xlu0 %93
    %97 = vset.pattern.permute.xlu0 0
    %98 = vperm.xlu0 %97, %v72
    %v99 = vpop.permute.xlu0 %98
    %102 = vset.pattern.permute.xlu0 0
    %103 = vperm.xlu0 %102, %v73
    %v104 = vpop.permute.xlu0 %103
    %107 = vset.pattern.permute.xlu0 0
    %108 = vperm.xlu0 %107, %v74
    %v109 = vpop.permute.xlu0 %108
    %112 = vset.pattern.permute.xlu0 0
    %113 = vperm.xlu0 %112, %v75
    %v114 = vpop.permute.xlu0 %113
    %vm116 = vcmask 523264
    %v118 = vsel %vm116, %v60, 0
    %v121 = vsel %vm116, %v61, 0
    %v124 = vsel %vm116, %v62, 0
    %v127 = vsel %vm116, %v63, 0
    %v130 = vsel %vm116, %v64, 0
    %v133 = vsel %vm116, %v65, 0
    %v136 = vsel %vm116, %v66, 0
    %v139 = vsel %vm116, %v67, 0
    %141 = vmatpush.msra.mxu0 0.0
    %142 = vmatpush.msra.mxu0 0.0
    %143 = vmatpush.msra.mxu0 0.0
    %144 = vmatpush.msra.mxu0 0.0
    %145 = vmatpush.msra.mxu0 0.0
    %146 = vmatpush.msra.mxu0 0.0
    %147 = vmatpush.msra.mxu0 0.0
    %148 = vmatpush.msra.mxu0 0.0
    %149 = vmatpush.msra.mxu0 %v59
    %150 = vmatpush.msra.mxu0 %v58
    %151 = vmatpush.msra.mxu0 %v57
    %152 = vmatpush.msra.mxu0 %v56
    %153 = vmatpush.msra.mxu0 %v55
    %154 = vmatpush.msra.mxu0 %v54
    %155 = vmatpush.msra.mxu0 %v53
    %156 = vmatpush.msra.mxu0 %v52
    %157 = vmatmul.f32.gmra.mxu0 %v118
    %v158 = vpop.f32.mrf.mxu0
    %v159 = vadd.f32 %v79, %v158
    %160 = vmatmul.f32.gmra.mxu0 %v121
    %v161 = vpop.f32.mrf.mxu0
    %v162 = vadd.f32 %v84, %v161
    %163 = vmatmul.f32.gmra.mxu0 %v124
    %v164 = vpop.f32.mrf.mxu0
    %v165 = vadd.f32 %v89, %v164
    %166 = vmatmul.f32.gmra.mxu0 %v127
    %v167 = vpop.f32.mrf.mxu0
    %v168 = vadd.f32 %v94, %v167
    %169 = vmatmul.f32.gmra.mxu0 %v130
    %v170 = vpop.f32.mrf.mxu0
    %v171 = vadd.f32 %v99, %v170
    %172 = vmatmul.f32.gmra.mxu0 %v133
    %v173 = vpop.f32.mrf.mxu0
    %v174 = vadd.f32 %v104, %v173
    %175 = vmatmul.f32.gmra.mxu0 %v136
    %v176 = vpop.f32.mrf.mxu0
    %v177 = vadd.f32 %v109, %v176
    %178 = vmatmul.f32.gmra.mxu0 %v139
    %v179 = vpop.f32.mrf.mxu0
    %v180 = vadd.f32 %v114, %v179
    %181 = vdwg.mxu0
    %v182 = vmax.f32 %v159, 0.0
    %v183 = vmax.f32 %v162, 0.0
    %v184 = vmax.f32 %v165, 0.0
    %v185 = vmax.f32 %v168, 0.0
    %v186 = vmax.f32 %v171, 0.0
    %v187 = vmax.f32 %v174, 0.0
    %v188 = vmax.f32 %v177, 0.0
    %v189 = vmax.f32 %v180, 0.0
    %v190 = vld [vmem:[%s3] sm:$0x3]
    %v191 = vld [vmem:[%s4] sm:$0x3]
    %193 = vset.pattern.permute.xlu0 0
    %194 = vperm.xlu0 %193, %v191
    %v195 = vpop.permute.xlu0 %194
    %v198 = vsel %vm116, %v190, 0
    %200 = vmatpush.msra.mxu0 0.0
    %201 = vmatpush.msra.mxu0 0.0
    %202 = vmatpush.msra.mxu0 0.0
    %203 = vmatpush.msra.mxu0 0.0
    %204 = vmatpush.msra.mxu0 0.0
    %205 = vmatpush.msra.mxu0 0.0
    %206 = vmatpush.msra.mxu0 0.0
    %207 = vmatpush.msra.mxu0 0.0
    %208 = vmatpush.msra.mxu0 %v189
    %209 = vmatpush.msra.mxu0 %v188
    %210 = vmatpush.msra.mxu0 %v187
    %211 = vmatpush.msra.mxu0 %v186
    %212 = vmatpush.msra.mxu0 %v185
    %213 = vmatpush.msra.mxu0 %v184
    %214 = vmatpush.msra.mxu0 %v183
    %215 = vmatpush.msra.mxu0 %v182
    %216 = vmatmul.f32.gmra.mxu0 %v198
    %v217 = vpop.f32.mrf.mxu0
    %v218 = vadd.f32 %v195, %v217
    %219 = vdwg.mxu0
    %v220 = vlaneseq
    %v221 = vshrl.u32 %v220, 7
    %vm222 = vcmp.eq.s32.totalorder %v221, 0
    %v223 = vmul.f32 %v218, 0.5
    %v224 = vmul.f32 %v223, 1.442695
    %v225 = vpow.pop %v224
    %v226 = vsel %vm222, %v218, %v225
    %227 = vst [vmem:[%s5] sm:$0x3] %v226
    // Predicated region
    $region30: #{_lambda_.9} parent=1 // pred_check
      _
    $region31: #{_lambda_.9} parent=1 // pred_check_branch
      %229 = sbr.rel (0) target = $region33
    $region32: #{_lambda_.9} parent=1 // pred_region
      _
    $region33: #{_lambda_.9} parent=1 // pred_fallthru
      _
    // Predicated region
    $region34: #{_lambda_.9} parent=1 // pred_check
      _
    $region35: #{_lambda_.9} parent=1 // pred_check_branch
      %231 = sbr.rel (0) target = $region37
    $region36: #{_lambda_.9} parent=1 // pred_region
      _
    $region37: #{_lambda_.9} parent=1 // pred_fallthru
      _
    %232 = vsyncpa [#allocation3], 1
    %233 = vsyncpa [#allocation5], 1

</llo_original>
